<compile_context>
chip_gen: v5e
topology: v5e:2x2
jax: 0.10.0
libtpu: 0.0.40
codegen_flags: <defaults>
</compile_context>

<pallas_src>
import math
import numpy as np
import jax
import jax.numpy as jnp
from jax import lax
from jax.experimental import pallas as pl
from jax.experimental.pallas import tpu as pltpu

HID = 256          # hidden width fixed by the PyTorch module
LN_EPS = 1e-5      # nn.LayerNorm default
PACK = 128         # lane-dense packed output width


# --------------------------------------------------------------------------
# Pallas kernel
# --------------------------------------------------------------------------
def build_qnet_kernel(N, A, TB):
    Nm1 = N - 1
    TBN = TB * N                # (batch, agent) rows per grid step
    ROWS = N * TBN              # stacked rows: [self | slot0 | ... | slot_{N-2}]
    inv_sqrt_dk = 1.0 / math.sqrt(float(HID))     # d_k = obs_output_dim = 256
    assert A + 2 * Nm1 <= PACK, "too many agents/actions for the 128-lane slab"

    def kernel(x_ref,
               se_w1, se_b1, se_w2, se_b2,
               k_w1, k_b1, k_w2, k_b2,
               q_w1, q_b1, q_w2, q_b2,
               sa_w1, sa_b1, sa_w2, sa_b2,
               av_w1, av_b1, av_w2, av_b2,
               ca_w1, ca_b1, ca_w2, ca_b2,
               f_w1a, f_w1b, f_b1, f_w2, f_b2, f_w3p, f_b3p,
               ln1_g, ln1_b, ln2_g, ln2_b,
               out_ref):

        def mxdot(x, w_ref):
            # bf16 operands on the MXU, f32 accumulation.
            if x.dtype != jnp.bfloat16:
                x = x.astype(jnp.bfloat16)
            return jnp.dot(x, w_ref[...], preferred_element_type=jnp.float32)

        def mlp(x, w1, b1, w2, b2):
            h = jnp.tanh(mxdot(x, w1) + b1[...])
            return jnp.tanh(mxdot(h, w2) + b2[...])

        def layer_norm(x, g_ref, b_ref):
            mu = jnp.mean(x, axis=-1, keepdims=True)
            xc = x - mu
            var = jnp.mean(xc * xc, axis=-1, keepdims=True)
            return xc * lax.rsqrt(var + LN_EPS) * g_ref[...] + b_ref[...]

        # Stacked input block: rows [0:TBN)        = [state, 0]      (self rows)
        #                      rows [(1+k)TBN ...) = [state_k, act_k] (slot k)
        xall = x_ref[...].astype(jnp.bfloat16)        # (ROWS, Din), matmul-only
        xs = xall[:TBN]
        xn = xall[TBN:]                               # (Nm1*TBN, Din)

        # state_embed on ALL rows in one shot (se_w1 has zero rows for the
        # action lanes, so the padded action columns are inert): M = ROWS.
        se_all = mlp(xall, se_w1, se_b1, se_w2, se_b2)     # (ROWS, H) f32
        sqe = se_all[:TBN]                                 # states_query_embed
        ske_all = se_all[TBN:]                             # neighbor state embeds

        query_obs = mlp(sqe, q_w1, q_b1, q_w2, q_b2)       # (TBN, H)
        curr = mlp(xs, ca_w1, ca_b1, ca_w2, ca_b2)         # (TBN, H)

        key_all = mlp(ske_all, k_w1, k_b1, k_w2, k_b2)     # (Nm1*TBN, H)
        oae_all = mlp(xn, sa_w1, sa_b1, sa_w2, sa_b2)      # (Nm1*TBN, H)
        av_all = mlp(oae_all, av_w1, av_b1, av_w2, av_b2)  # (Nm1*TBN, H)

        # Attention: per-row dot product against the query, softmax over the
        # Nm1 slots.  |score| <= sqrt(HID) = 16, so f32 exp needs no max-shift.
        s_cols, e_cols = [], []
        denom = jnp.zeros((TBN, 1), jnp.float32)
        node_acc = jnp.zeros((TBN, HID), jnp.float32)
        oae_sum = jnp.zeros((TBN, HID), jnp.float32)
        ske_sum = jnp.zeros((TBN, HID), jnp.float32)
        for k in range(Nm1):                               # Nm1 is small & static
            lo, hi = k * TBN, (k + 1) * TBN
            s_k = jnp.sum(query_obs * key_all[lo:hi], axis=-1,
                          keepdims=True) * inv_sqrt_dk     # (TBN, 1)
            e_k = jnp.exp(s_k)
            denom = denom + e_k
            node_acc = node_acc + e_k * av_all[lo:hi]
            oae_sum = oae_sum + oae_all[lo:hi]
            ske_sum = ske_sum + ske_all[lo:hi]
            s_cols.append(s_k)
            e_cols.append(e_k)

        inv_denom = pl.reciprocal(denom, approx=True)      # EUP slot, ~free
        node = node_acc * inv_denom                        # softmax-weighted sum
        moae = oae_sum * (1.0 / Nm1)
        mske = ske_sum * (1.0 / Nm1)

        node_ln = layer_norm(moae + node, ln1_g, ln1_b)    # (TBN, H)
        curr_ln = layer_norm(curr + mske + sqe, ln2_g, ln2_b)

        # final_value_layers on concat([curr_ln, node_ln]) in split-weight form
        # (avoids an in-kernel lane concat of two 256-wide activations).
        h1 = jnp.tanh(mxdot(curr_ln, f_w1a) + mxdot(node_ln, f_w1b) + f_b1[...])
        h2 = jnp.tanh(mxdot(h1, f_w2) + f_b2[...])

        # f_w3p / f_b3p are zero-padded to PACK lanes, so this matmul emits the
        # Q_value lanes [0:A) straight into the packed slab; other lanes are 0.
        slab = mxdot(h2, f_w3p) + f_b3p[...]               # (TBN, PACK)

        # Slab layout: [0:A) Q_value | [A:A+Nm1) scores | [A+Nm1:A+2*Nm1) softmax
        lane = lax.broadcasted_iota(jnp.int32, (TBN, PACK), 1)
        for k in range(Nm1):
            slab = slab + jnp.where(lane == A + k, s_cols[k], 0.0)
            slab = slab + jnp.where(lane == A + Nm1 + k, e_cols[k] * inv_denom, 0.0)
        out_ref[...] = slab

    return kernel


# --------------------------------------------------------------------------
# Block-size heuristic: fill the MXU first, then worry about step count.
# --------------------------------------------------------------------------
def _pick_tb(B, N, target_rows=256, max_stack_rows=2048):
    divs = [tb for tb in range(1, B + 1) if B % tb == 0]
    # multi-step blocks need TB*N % 8 == 0 (sublane tiling); TB == B always legal
    aligned = [tb for tb in divs if (tb * N) % 8 == 0 or tb == B]
    capped = [tb for tb in aligned if N * tb * N <= max_stack_rows] or [min(aligned)]
    # 1) Fill the MXU (TB*N >= 256) before anything else.
    full = [tb for tb in capped if tb * N >= target_rows]
    if full:
        # Keep >= 2 grid steps (v7x dual TC) only if both halves still fill it.
        multi = [tb for tb in full if B // tb >= 2]
        return max(multi) if multi else min(full)
    # 2) Otherwise one step as big as the VMEM cap allows.
    return max(capped)


# --------------------------------------------------------------------------
# Parameter prep: transpose/pad/split into the kernel layout (bf16 weights)
# --------------------------------------------------------------------------
def _prep_params(params, D, A):
    (se_w1, se_b1, se_w2, se_b2,
     k_w1, k_b1, k_w2, k_b2,
     q_w1, q_b1, q_w2, q_b2,
     sa_w1, sa_b1, sa_w2, sa_b2,
     av_w1, av_b1, av_w2, av_b2,
     ca_w1, ca_b1, ca_w2, ca_b2,
     f_w1, f_b1, f_w2, f_b2, f_w3, f_b3,
     ln1_g, ln1_b, ln2_g, ln2_b) = params
    bf = lambda w: w.astype(jnp.bfloat16)
    zrows = jnp.zeros((A, HID), jnp.float32)
    # Zero rows over the action lanes: state_embed / curr_agent_state_embed can
    # then be applied directly to stacked [state, action] / [state, 0] rows.
    se_w1p = bf(jnp.concatenate([se_w1, zrows], axis=0))     # (D+A, H)
    ca_w1p = bf(jnp.concatenate([ca_w1, zrows], axis=0))     # (D+A, H)
    # Last layer padded to the packed slab width (Q_value lands in lanes [0:A)).
    f_w3p = bf(jnp.pad(f_w3, ((0, 0), (0, PACK - A))))       # (H, PACK)
    f_b3p = jnp.pad(f_b3, ((0, 0), (0, PACK - A)))           # (1, PACK)
    return [
        se_w1p, se_b1, bf(se_w2), se_b2,
        bf(k_w1), k_b1, bf(k_w2), k_b2,
        bf(q_w1), q_b1, bf(q_w2), q_b2,
        bf(sa_w1), sa_b1, bf(sa_w2), sa_b2,
        bf(av_w1), av_b1, bf(av_w2), av_b2,
        ca_w1p, ca_b1, bf(ca_w2), ca_b2,
        bf(f_w1[:HID]), bf(f_w1[HID:]), f_b1, bf(f_w2), f_b2, f_w3p, f_b3p,
        ln1_g, ln1_b, ln2_g, ln2_b,
    ]


# --------------------------------------------------------------------------
# Wrapper (glue: self-loop removal, batch-block stacking, unpack, epilogue)
# --------------------------------------------------------------------------
def q_network_forward(params, states, policies, actions, tb=None):
    B, N, D = states.shape
    A = actions.shape[-1]
    Nm1 = N - 1
    Din = D + A
    TB = _pick_tb(B, N) if tb is None else tb
    assert B % TB == 0
    TBN = TB * N
    G = B // TB
    ROWS = N * TBN
    assert (G == 1) or (TBN % 8 == 0), "TB*N must be a multiple of 8 when G > 1"
    assert A + 2 * Nm1 <= PACK

    # ---- plain-JAX glue: remove_self_loops + batch-block stacking + padding ----
    idx = np.array([[j for j in range(N) if j != i] for i in range(N)], np.int32)
    sk = states[:, idx, :]                                   # (B, N, Nm1, D)
    ak = actions[:, idx, :]                                  # (B, N, Nm1, A)
    oa = jnp.concatenate([sk, ak], axis=-1)                  # (B, N, Nm1, Din)
    xs = jnp.concatenate([states, jnp.zeros((B, N, A), states.dtype)],
                         axis=-1)                            # (B, N, Din)

    # Stacked, batch-block-major layout: per grid block g,
    #   rows [0:TBN)                 self rows     (order: batch-in-block, agent)
    #   rows [(1+k)*TBN:(2+k)*TBN)   neighbor slot k rows, same ordering
    xs_blk = xs.reshape(G, 1, TBN, Din)
    oa_blk = jnp.transpose(oa, (2, 0, 1, 3)).reshape(Nm1, G, TBN, Din)
    oa_blk = jnp.transpose(oa_blk, (1, 0, 2, 3))             # (G, Nm1, TBN, Din)
    x_stacked = jnp.concatenate([xs_blk, oa_blk], axis=1).reshape(G * ROWS, Din)

    kparams = _prep_params(params, D, A)

    in_specs = [pl.BlockSpec((ROWS, Din), lambda g: (g, 0))] + \
               [pl.BlockSpec(p.shape, lambda g: (0, 0)) for p in kparams]
    out_shape = jax.ShapeDtypeStruct((B * N, PACK), jnp.float32)
    out_spec = pl.BlockSpec((TBN, PACK), lambda g: (g, 0))

    # VMEM budget scales with the stacked block; capped for v7x's 64 MiB VMEM.
    vmem_bytes = int(min(48 * 2 ** 20, 8 * 2 ** 20 + 20 * ROWS * 1024))

    kernel = build_qnet_kernel(N, A, TB)
    slab = pl.pallas_call(
        kernel,
        out_shape=out_shape,
        grid_spec=pltpu.PrefetchScalarGridSpec(
            num_scalar_prefetch=0,
            grid=(G,),
            in_specs=in_specs,
            out_specs=out_spec,
        ),
        compiler_params=pltpu.CompilerParams(
            dimension_semantics=("parallel",),
            vmem_limit_bytes=vmem_bytes),
    )(x_stacked, *kparams)

    # ---- unpack the lane-dense slab + cheap plain-JAX epilogue ----
    slab = slab.reshape(B, N, PACK)
    q_value = slab[..., 0:A]                                 # (B, N, A)
    scores = slab[..., A:A + Nm1]                            # (B, N, Nm1)
    w_sm = slab[..., A + Nm1:A + 2 * Nm1]                    # (B, N, Nm1)

    value = jnp.einsum('bna,bma->bnm', q_value, policies,
                       precision=lax.Precision.HIGHEST)      # (B, N, N)
    q_scalar = jnp.sum(actions * q_value, axis=-1, keepdims=True)

    # weight_assignment (insert 1.0 for the self edge)
    one = jnp.ones((B, 1), jnp.float32)
    rows = []
    for i in range(N):
        w = w_sm[:, i, :]
        rows.append(jnp.concatenate([w[:, :i], one, w[:, i:]],
                                    axis=-1)[:, None, :])
    weights_full = jnp.concatenate(rows, axis=1)             # (B, N, N)

    # PyTorch returns scores with shape (B, N, 1, N-1)
    return value, q_scalar, weights_full, scores[:, :, None, :]


# --------------------------------------------------------------------------
# Deterministic parameter init (shapes from Q_network.__init__, f32 "module")
# --------------------------------------------------------------------------
def init_params(key, D, A):
    keys = iter(jax.random.split(key, 64))

    def linear(fin, fout):
        w = jax.random.normal(next(keys), (fin, fout), jnp.float32) / math.sqrt(fin)
        b = jax.random.normal(next(keys), (1, fout), jnp.float32) * 0.05
        return [w, b]

    p = []
    p += linear(D, HID) + linear(HID, HID)               # state_embed
    p += linear(HID, HID) + linear(HID, HID)             # key
    p += linear(HID, HID) + linear(HID, HID)             # query
    p += linear(D + A, HID) + linear(HID, HID)           # state_act_embed
    p += linear(HID, HID) + linear(HID, HID)             # attention_value
    p += linear(D, HID) + linear(HID, HID)               # curr_agent_state_embed
    p += linear(2 * HID, HID) + linear(HID, HID) + linear(HID, A)  # final_value_layers
    p += [jnp.ones((1, HID), jnp.float32), jnp.zeros((1, HID), jnp.float32)]  # LN(state_act)
    p += [jnp.ones((1, HID), jnp.float32), jnp.zeros((1, HID), jnp.float32)]  # LN(state)
    return p


# --------------------------------------------------------------------------
# Pure-JAX reference (correctness check, f32 HIGHEST precision)
# --------------------------------------------------------------------------
def reference_forward(params, states, policies, actions):
    (se_w1, se_b1, se_w2, se_b2,
     k_w1, k_b1, k_w2, k_b2,
     q_w1, q_b1, q_w2, q_b2,
     sa_w1, sa_b1, sa_w2, sa_b2,
     av_w1, av_b1, av_w2, av_b2,
     ca_w1, ca_b1, ca_w2, ca_b2,
     f_w1, f_b1, f_w2, f_b2, f_w3, f_b3,
     ln1_g, ln1_b, ln2_g, ln2_b) = params
    B, N, D = states.shape
    A = actions.shape[-1]
    hp = lax.Precision.HIGHEST
    dot = lambda x, w: jnp.matmul(x, w, precision=hp)

    def mlp(x, w1, b1, w2, b2):
        return jnp.tanh(dot(jnp.tanh(dot(x, w1) + b1), w2) + b2)

    def ln(x, g, b):
        mu = jnp.mean(x, axis=-1, keepdims=True)
        xc = x - mu
        var = jnp.mean(xc * xc, axis=-1, keepdims=True)
        return xc / jnp.sqrt(var + LN_EPS) * g + b

    idx = np.array([[j for j in range(N) if j != i] for i in range(N)])
    sk = states[:, idx, :]
    ak = actions[:, idx, :]
    oa = jnp.concatenate([sk, ak], axis=-1)
    sqe = mlp(states, se_w1, se_b1, se_w2, se_b2)
    ske = mlp(sk, se_w1, se_b1, se_w2, se_b2)
    key_obs = mlp(ske, k_w1, k_b1, k_w2, k_b2)
    query_obs = mlp(sqe, q_w1, q_b1, q_w2, q_b2)
    scores = jnp.einsum('bnd,bnkd->bnk', query_obs, key_obs,
                        precision=hp) / math.sqrt(HID)
    weight = jax.nn.softmax(scores, axis=-1)
    oae = mlp(oa, sa_w1, sa_b1, sa_w2, sa_b2)
    av = mlp(oae, av_w1, av_b1, av_w2, av_b2)
    node = jnp.einsum('bnk,bnkd->bnd', weight, av, precision=hp)
    node_ln = ln(jnp.mean(oae, axis=2) + node, ln1_g, ln1_b)
    curr = mlp(states, ca_w1, ca_b1, ca_w2, ca_b2)
    curr_ln = ln(curr + jnp.mean(ske, axis=2) + sqe, ln2_g, ln2_b)
    feat = jnp.concatenate([curr_ln, node_ln], axis=-1)
    q = dot(jnp.tanh(dot(jnp.tanh(dot(feat, f_w1) + f_b1), f_w2) + f_b2),
            f_w3) + f_b3
    value = jnp.einsum('bna,bma->bnm', q, policies, precision=hp)
    q_scalar = jnp.sum(actions * q, axis=-1, keepdims=True)
    one = jnp.ones((B, 1), jnp.float32)
    rows = []
    for i in range(N):
        w = weight[:, i, :]
        rows.append(jnp.concatenate([w[:, :i], one, w[:, i:]],
                                    axis=-1)[:, None, :])
    weights_full = jnp.concatenate(rows, axis=1)
    return value, q_scalar, weights_full, scores[:, :, None, :]


# --------------------------------------------------------------------------
if __name__ == "__main__":
    # batch, num_agents, num_actions, obs_input_dim
    B, N, A, D = 8, 4, 5, 16
    key = jax.random.PRNGKey(0)
    k1, k2, k3, kp = jax.random.split(key, 4)

    states = jax.random.normal(k1, (B, N, D), jnp.float32)
    policies = jax.nn.softmax(jax.random.normal(k2, (B, N, A), jnp.float32), axis=-1)
    actions = jax.nn.one_hot(jax.random.randint(k3, (B, N), 0, A), A,
                             dtype=jnp.float32)
    params = init_params(kp, D, A)

    refs = reference_forward(params, states, policies, actions)

    # Auto block size: for this tiny demo the heuristic picks one full-batch
    # step (TB=8 -> one stacked (128, 21) block), which is the MXU-friendliest
    # choice at this batch size.
    outs = jax.block_until_ready(q_network_forward(params, states, policies, actions))
    for o, r in zip(outs, refs):
        np.testing.assert_allclose(np.asarray(o), np.asarray(r),
                                   rtol=3e-2, atol=3e-2)

    # Also exercise the multi-step grid path (TB=2 -> 4 "parallel" steps) to
    # validate the batch-block stacking / BlockSpec indexing.
    outs2 = jax.block_until_ready(
        q_network_forward(params, states, policies, actions, tb=2))
    for o, r in zip(outs2, refs):
        np.testing.assert_allclose(np.asarray(o), np.asarray(r),
                                   rtol=3e-2, atol=3e-2)

    print("KERNEL_OK")
</pallas_src>

<mosaic_0001>
module attributes {stable_mosaic.version = 11 : i64} {
  func.func @kernel(%arg0: i32, %arg1: memref<128x21xf32, #tpu.memory_space<vmem>>, %arg2: memref<21x256xbf16, #tpu.memory_space<vmem>>, %arg3: memref<1x256xf32, #tpu.memory_space<vmem>>, %arg4: memref<256x256xbf16, #tpu.memory_space<vmem>>, %arg5: memref<1x256xf32, #tpu.memory_space<vmem>>, %arg6: memref<256x256xbf16, #tpu.memory_space<vmem>>, %arg7: memref<1x256xf32, #tpu.memory_space<vmem>>, %arg8: memref<256x256xbf16, #tpu.memory_space<vmem>>, %arg9: memref<1x256xf32, #tpu.memory_space<vmem>>, %arg10: memref<256x256xbf16, #tpu.memory_space<vmem>>, %arg11: memref<1x256xf32, #tpu.memory_space<vmem>>, %arg12: memref<256x256xbf16, #tpu.memory_space<vmem>>, %arg13: memref<1x256xf32, #tpu.memory_space<vmem>>, %arg14: memref<21x256xbf16, #tpu.memory_space<vmem>>, %arg15: memref<1x256xf32, #tpu.memory_space<vmem>>, %arg16: memref<256x256xbf16, #tpu.memory_space<vmem>>, %arg17: memref<1x256xf32, #tpu.memory_space<vmem>>, %arg18: memref<256x256xbf16, #tpu.memory_space<vmem>>, %arg19: memref<1x256xf32, #tpu.memory_space<vmem>>, %arg20: memref<256x256xbf16, #tpu.memory_space<vmem>>, %arg21: memref<1x256xf32, #tpu.memory_space<vmem>>, %arg22: memref<21x256xbf16, #tpu.memory_space<vmem>>, %arg23: memref<1x256xf32, #tpu.memory_space<vmem>>, %arg24: memref<256x256xbf16, #tpu.memory_space<vmem>>, %arg25: memref<1x256xf32, #tpu.memory_space<vmem>>, %arg26: memref<256x256xbf16, #tpu.memory_space<vmem>>, %arg27: memref<256x256xbf16, #tpu.memory_space<vmem>>, %arg28: memref<1x256xf32, #tpu.memory_space<vmem>>, %arg29: memref<256x256xbf16, #tpu.memory_space<vmem>>, %arg30: memref<1x256xf32, #tpu.memory_space<vmem>>, %arg31: memref<256x128xbf16, #tpu.memory_space<vmem>>, %arg32: memref<1x128xf32, #tpu.memory_space<vmem>>, %arg33: memref<1x256xf32, #tpu.memory_space<vmem>>, %arg34: memref<1x256xf32, #tpu.memory_space<vmem>>, %arg35: memref<1x256xf32, #tpu.memory_space<vmem>>, %arg36: memref<1x256xf32, #tpu.memory_space<vmem>>, %arg37: memref<32x128xf32, #tpu.memory_space<vmem>>) attributes {dimension_semantics = [#tpu.dimension_semantics<parallel>], iteration_bounds = array<i64: 1>, scalar_prefetch = 0 : i64, scratch_operands = 0 : i64, tpu.core_type = #tpu.core_type<tc>, window_params = [{transform_indices = @transform_0, window_bounds = array<i64: 128, 21>}, {pipeline_mode = #tpu.pipeline_mode<synchronous>, transform_indices = @transform_1, window_bounds = array<i64: 21, 256>}, {pipeline_mode = #tpu.pipeline_mode<synchronous>, transform_indices = @transform_2, window_bounds = array<i64: 1, 256>}, {pipeline_mode = #tpu.pipeline_mode<synchronous>, transform_indices = @transform_3, window_bounds = array<i64: 256, 256>}, {pipeline_mode = #tpu.pipeline_mode<synchronous>, transform_indices = @transform_4, window_bounds = array<i64: 1, 256>}, {pipeline_mode = #tpu.pipeline_mode<synchronous>, transform_indices = @transform_5, window_bounds = array<i64: 256, 256>}, {pipeline_mode = #tpu.pipeline_mode<synchronous>, transform_indices = @transform_6, window_bounds = array<i64: 1, 256>}, {pipeline_mode = #tpu.pipeline_mode<synchronous>, transform_indices = @transform_7, window_bounds = array<i64: 256, 256>}, {pipeline_mode = #tpu.pipeline_mode<synchronous>, transform_indices = @transform_8, window_bounds = array<i64: 1, 256>}, {pipeline_mode = #tpu.pipeline_mode<synchronous>, transform_indices = @transform_9, window_bounds = array<i64: 256, 256>}, {pipeline_mode = #tpu.pipeline_mode<synchronous>, transform_indices = @transform_10, window_bounds = array<i64: 1, 256>}, {pipeline_mode = #tpu.pipeline_mode<synchronous>, transform_indices = @transform_11, window_bounds = array<i64: 256, 256>}, {pipeline_mode = #tpu.pipeline_mode<synchronous>, transform_indices = @transform_12, window_bounds = array<i64: 1, 256>}, {pipeline_mode = #tpu.pipeline_mode<synchronous>, transform_indices = @transform_13, window_bounds = array<i64: 21, 256>}, {pipeline_mode = #tpu.pipeline_mode<synchronous>, transform_indices = @transform_14, window_bounds = array<i64: 1, 256>}, {pipeline_mode = #tpu.pipeline_mode<synchronous>, transform_indices = @transform_15, window_bounds = array<i64: 256, 256>}, {pipeline_mode = #tpu.pipeline_mode<synchronous>, transform_indices = @transform_16, window_bounds = array<i64: 1, 256>}, {pipeline_mode = #tpu.pipeline_mode<synchronous>, transform_indices = @transform_17, window_bounds = array<i64: 256, 256>}, {pipeline_mode = #tpu.pipeline_mode<synchronous>, transform_indices = @transform_18, window_bounds = array<i64: 1, 256>}, {pipeline_mode = #tpu.pipeline_mode<synchronous>, transform_indices = @transform_19, window_bounds = array<i64: 256, 256>}, {pipeline_mode = #tpu.pipeline_mode<synchronous>, transform_indices = @transform_20, window_bounds = array<i64: 1, 256>}, {pipeline_mode = #tpu.pipeline_mode<synchronous>, transform_indices = @transform_21, window_bounds = array<i64: 21, 256>}, {pipeline_mode = #tpu.pipeline_mode<synchronous>, transform_indices = @transform_22, window_bounds = array<i64: 1, 256>}, {pipeline_mode = #tpu.pipeline_mode<synchronous>, transform_indices = @transform_23, window_bounds = array<i64: 256, 256>}, {pipeline_mode = #tpu.pipeline_mode<synchronous>, transform_indices = @transform_24, window_bounds = array<i64: 1, 256>}, {pipeline_mode = #tpu.pipeline_mode<synchronous>, transform_indices = @transform_25, window_bounds = array<i64: 256, 256>}, {pipeline_mode = #tpu.pipeline_mode<synchronous>, transform_indices = @transform_26, window_bounds = array<i64: 256, 256>}, {pipeline_mode = #tpu.pipeline_mode<synchronous>, transform_indices = @transform_27, window_bounds = array<i64: 1, 256>}, {pipeline_mode = #tpu.pipeline_mode<synchronous>, transform_indices = @transform_28, window_bounds = array<i64: 256, 256>}, {pipeline_mode = #tpu.pipeline_mode<synchronous>, transform_indices = @transform_29, window_bounds = array<i64: 1, 256>}, {pipeline_mode = #tpu.pipeline_mode<synchronous>, transform_indices = @transform_30, window_bounds = array<i64: 256, 128>}, {pipeline_mode = #tpu.pipeline_mode<synchronous>, transform_indices = @transform_31, window_bounds = array<i64: 1, 128>}, {pipeline_mode = #tpu.pipeline_mode<synchronous>, transform_indices = @transform_32, window_bounds = array<i64: 1, 256>}, {pipeline_mode = #tpu.pipeline_mode<synchronous>, transform_indices = @transform_33, window_bounds = array<i64: 1, 256>}, {pipeline_mode = #tpu.pipeline_mode<synchronous>, transform_indices = @transform_34, window_bounds = array<i64: 1, 256>}, {pipeline_mode = #tpu.pipeline_mode<synchronous>, transform_indices = @transform_35, window_bounds = array<i64: 1, 256>}, {transform_indices = @transform_36, window_bounds = array<i64: 32, 128>}]} {
    %c0 = arith.constant 0 : index
    %c0_0 = arith.constant 0 : index
    %0 = vector.load %arg1[%c0, %c0_0] : memref<128x21xf32, #tpu.memory_space<vmem>>, vector<128x21xf32>
    %1 = arith.truncf %0 : vector<128x21xf32> to vector<128x21xbf16>
    %2 = vector.extract_strided_slice %1 {offsets = [0, 0], sizes = [32, 21], strides = [1, 1]} : vector<128x21xbf16> to vector<32x21xbf16>
    %3 = vector.extract_strided_slice %1 {offsets = [32, 0], sizes = [96, 21], strides = [1, 1]} : vector<128x21xbf16> to vector<96x21xbf16>
    %c0_1 = arith.constant 0 : index
    %c0_2 = arith.constant 0 : index
    %4 = vector.load %arg2[%c0_1, %c0_2] : memref<21x256xbf16, #tpu.memory_space<vmem>>, vector<21x256xbf16>
    %cst = arith.constant dense<0.000000e+00> : vector<128x256xf32>
    %5 = tpu.matmul %1, %4, %cst {dimension_numbers = #tpu.dot_dimension_numbers<[1], [0], [0], [1], [0, 0, 1, 1], [], []>} : vector<128x21xbf16>, vector<21x256xbf16>, vector<128x256xf32> -> vector<128x256xf32>
    %c0_3 = arith.constant 0 : index
    %c0_4 = arith.constant 0 : index
    %6 = vector.load %arg3[%c0_3, %c0_4] : memref<1x256xf32, #tpu.memory_space<vmem>>, vector<1x256xf32>
    %7 = vector.broadcast %6 : vector<1x256xf32> to vector<128x256xf32>
    %8 = arith.addf %5, %7 : vector<128x256xf32>
    %9 = math.tanh %8 : vector<128x256xf32>
    %10 = arith.truncf %9 : vector<128x256xf32> to vector<128x256xbf16>
    %c0_5 = arith.constant 0 : index
    %c0_6 = arith.constant 0 : index
    %11 = vector.load %arg4[%c0_5, %c0_6] : memref<256x256xbf16, #tpu.memory_space<vmem>>, vector<256x256xbf16>
    %cst_7 = arith.constant dense<0.000000e+00> : vector<128x256xf32>
    %12 = tpu.matmul %10, %11, %cst_7 {dimension_numbers = #tpu.dot_dimension_numbers<[1], [0], [0], [1], [0, 0, 1, 1], [], []>} : vector<128x256xbf16>, vector<256x256xbf16>, vector<128x256xf32> -> vector<128x256xf32>
    %c0_8 = arith.constant 0 : index
    %c0_9 = arith.constant 0 : index
    %13 = vector.load %arg5[%c0_8, %c0_9] : memref<1x256xf32, #tpu.memory_space<vmem>>, vector<1x256xf32>
    %14 = vector.broadcast %13 : vector<1x256xf32> to vector<128x256xf32>
    %15 = arith.addf %12, %14 : vector<128x256xf32>
    %16 = math.tanh %15 : vector<128x256xf32>
    %17 = vector.extract_strided_slice %16 {offsets = [0, 0], sizes = [32, 256], strides = [1, 1]} : vector<128x256xf32> to vector<32x256xf32>
    %18 = vector.extract_strided_slice %16 {offsets = [32, 0], sizes = [96, 256], strides = [1, 1]} : vector<128x256xf32> to vector<96x256xf32>
    %19 = arith.truncf %17 : vector<32x256xf32> to vector<32x256xbf16>
    %c0_10 = arith.constant 0 : index
    %c0_11 = arith.constant 0 : index
    %20 = vector.load %arg10[%c0_10, %c0_11] : memref<256x256xbf16, #tpu.memory_space<vmem>>, vector<256x256xbf16>
    %cst_12 = arith.constant dense<0.000000e+00> : vector<32x256xf32>
    %21 = tpu.matmul %19, %20, %cst_12 {dimension_numbers = #tpu.dot_dimension_numbers<[1], [0], [0], [1], [0, 0, 1, 1], [], []>} : vector<32x256xbf16>, vector<256x256xbf16>, vector<32x256xf32> -> vector<32x256xf32>
    %c0_13 = arith.constant 0 : index
    %c0_14 = arith.constant 0 : index
    %22 = vector.load %arg11[%c0_13, %c0_14] : memref<1x256xf32, #tpu.memory_space<vmem>>, vector<1x256xf32>
    %23 = vector.broadcast %22 : vector<1x256xf32> to vector<32x256xf32>
    %24 = arith.addf %21, %23 : vector<32x256xf32>
    %25 = math.tanh %24 : vector<32x256xf32>
    %26 = arith.truncf %25 : vector<32x256xf32> to vector<32x256xbf16>
    %c0_15 = arith.constant 0 : index
    %c0_16 = arith.constant 0 : index
    %27 = vector.load %arg12[%c0_15, %c0_16] : memref<256x256xbf16, #tpu.memory_space<vmem>>, vector<256x256xbf16>
    %cst_17 = arith.constant dense<0.000000e+00> : vector<32x256xf32>
    %28 = tpu.matmul %26, %27, %cst_17 {dimension_numbers = #tpu.dot_dimension_numbers<[1], [0], [0], [1], [0, 0, 1, 1], [], []>} : vector<32x256xbf16>, vector<256x256xbf16>, vector<32x256xf32> -> vector<32x256xf32>
    %c0_18 = arith.constant 0 : index
    %c0_19 = arith.constant 0 : index
    %29 = vector.load %arg13[%c0_18, %c0_19] : memref<1x256xf32, #tpu.memory_space<vmem>>, vector<1x256xf32>
    %30 = vector.broadcast %29 : vector<1x256xf32> to vector<32x256xf32>
    %31 = arith.addf %28, %30 : vector<32x256xf32>
    %32 = math.tanh %31 : vector<32x256xf32>
    %c0_20 = arith.constant 0 : index
    %c0_21 = arith.constant 0 : index
    %33 = vector.load %arg22[%c0_20, %c0_21] : memref<21x256xbf16, #tpu.memory_space<vmem>>, vector<21x256xbf16>
    %cst_22 = arith.constant dense<0.000000e+00> : vector<32x256xf32>
    %34 = tpu.matmul %2, %33, %cst_22 {dimension_numbers = #tpu.dot_dimension_numbers<[1], [0], [0], [1], [0, 0, 1, 1], [], []>} : vector<32x21xbf16>, vector<21x256xbf16>, vector<32x256xf32> -> vector<32x256xf32>
    %c0_23 = arith.constant 0 : index
    %c0_24 = arith.constant 0 : index
    %35 = vector.load %arg23[%c0_23, %c0_24] : memref<1x256xf32, #tpu.memory_space<vmem>>, vector<1x256xf32>
    %36 = vector.broadcast %35 : vector<1x256xf32> to vector<32x256xf32>
    %37 = arith.addf %34, %36 : vector<32x256xf32>
    %38 = math.tanh %37 : vector<32x256xf32>
    %39 = arith.truncf %38 : vector<32x256xf32> to vector<32x256xbf16>
    %c0_25 = arith.constant 0 : index
    %c0_26 = arith.constant 0 : index
    %40 = vector.load %arg24[%c0_25, %c0_26] : memref<256x256xbf16, #tpu.memory_space<vmem>>, vector<256x256xbf16>
    %cst_27 = arith.constant dense<0.000000e+00> : vector<32x256xf32>
    %41 = tpu.matmul %39, %40, %cst_27 {dimension_numbers = #tpu.dot_dimension_numbers<[1], [0], [0], [1], [0, 0, 1, 1], [], []>} : vector<32x256xbf16>, vector<256x256xbf16>, vector<32x256xf32> -> vector<32x256xf32>
    %c0_28 = arith.constant 0 : index
    %c0_29 = arith.constant 0 : index
    %42 = vector.load %arg25[%c0_28, %c0_29] : memref<1x256xf32, #tpu.memory_space<vmem>>, vector<1x256xf32>
    %43 = vector.broadcast %42 : vector<1x256xf32> to vector<32x256xf32>
    %44 = arith.addf %41, %43 : vector<32x256xf32>
    %45 = math.tanh %44 : vector<32x256xf32>
    %46 = arith.truncf %18 : vector<96x256xf32> to vector<96x256xbf16>
    %c0_30 = arith.constant 0 : index
    %c0_31 = arith.constant 0 : index
    %47 = vector.load %arg6[%c0_30, %c0_31] : memref<256x256xbf16, #tpu.memory_space<vmem>>, vector<256x256xbf16>
    %cst_32 = arith.constant dense<0.000000e+00> : vector<96x256xf32>
    %48 = tpu.matmul %46, %47, %cst_32 {dimension_numbers = #tpu.dot_dimension_numbers<[1], [0], [0], [1], [0, 0, 1, 1], [], []>} : vector<96x256xbf16>, vector<256x256xbf16>, vector<96x256xf32> -> vector<96x256xf32>
    %c0_33 = arith.constant 0 : index
    %c0_34 = arith.constant 0 : index
    %49 = vector.load %arg7[%c0_33, %c0_34] : memref<1x256xf32, #tpu.memory_space<vmem>>, vector<1x256xf32>
    %50 = vector.broadcast %49 : vector<1x256xf32> to vector<96x256xf32>
    %51 = arith.addf %48, %50 : vector<96x256xf32>
    %52 = math.tanh %51 : vector<96x256xf32>
    %53 = arith.truncf %52 : vector<96x256xf32> to vector<96x256xbf16>
    %c0_35 = arith.constant 0 : index
    %c0_36 = arith.constant 0 : index
    %54 = vector.load %arg8[%c0_35, %c0_36] : memref<256x256xbf16, #tpu.memory_space<vmem>>, vector<256x256xbf16>
    %cst_37 = arith.constant dense<0.000000e+00> : vector<96x256xf32>
    %55 = tpu.matmul %53, %54, %cst_37 {dimension_numbers = #tpu.dot_dimension_numbers<[1], [0], [0], [1], [0, 0, 1, 1], [], []>} : vector<96x256xbf16>, vector<256x256xbf16>, vector<96x256xf32> -> vector<96x256xf32>
    %c0_38 = arith.constant 0 : index
    %c0_39 = arith.constant 0 : index
    %56 = vector.load %arg9[%c0_38, %c0_39] : memref<1x256xf32, #tpu.memory_space<vmem>>, vector<1x256xf32>
    %57 = vector.broadcast %56 : vector<1x256xf32> to vector<96x256xf32>
    %58 = arith.addf %55, %57 : vector<96x256xf32>
    %59 = math.tanh %58 : vector<96x256xf32>
    %c0_40 = arith.constant 0 : index
    %c0_41 = arith.constant 0 : index
    %60 = vector.load %arg14[%c0_40, %c0_41] : memref<21x256xbf16, #tpu.memory_space<vmem>>, vector<21x256xbf16>
    %cst_42 = arith.constant dense<0.000000e+00> : vector<96x256xf32>
    %61 = tpu.matmul %3, %60, %cst_42 {dimension_numbers = #tpu.dot_dimension_numbers<[1], [0], [0], [1], [0, 0, 1, 1], [], []>} : vector<96x21xbf16>, vector<21x256xbf16>, vector<96x256xf32> -> vector<96x256xf32>
    %c0_43 = arith.constant 0 : index
    %c0_44 = arith.constant 0 : index
    %62 = vector.load %arg15[%c0_43, %c0_44] : memref<1x256xf32, #tpu.memory_space<vmem>>, vector<1x256xf32>
    %63 = vector.broadcast %62 : vector<1x256xf32> to vector<96x256xf32>
    %64 = arith.addf %61, %63 : vector<96x256xf32>
    %65 = math.tanh %64 : vector<96x256xf32>
    %66 = arith.truncf %65 : vector<96x256xf32> to vector<96x256xbf16>
    %c0_45 = arith.constant 0 : index
    %c0_46 = arith.constant 0 : index
    %67 = vector.load %arg16[%c0_45, %c0_46] : memref<256x256xbf16, #tpu.memory_space<vmem>>, vector<256x256xbf16>
    %cst_47 = arith.constant dense<0.000000e+00> : vector<96x256xf32>
    %68 = tpu.matmul %66, %67, %cst_47 {dimension_numbers = #tpu.dot_dimension_numbers<[1], [0], [0], [1], [0, 0, 1, 1], [], []>} : vector<96x256xbf16>, vector<256x256xbf16>, vector<96x256xf32> -> vector<96x256xf32>
    %c0_48 = arith.constant 0 : index
    %c0_49 = arith.constant 0 : index
    %69 = vector.load %arg17[%c0_48, %c0_49] : memref<1x256xf32, #tpu.memory_space<vmem>>, vector<1x256xf32>
    %70 = vector.broadcast %69 : vector<1x256xf32> to vector<96x256xf32>
    %71 = arith.addf %68, %70 : vector<96x256xf32>
    %72 = math.tanh %71 : vector<96x256xf32>
    %73 = arith.truncf %72 : vector<96x256xf32> to vector<96x256xbf16>
    %c0_50 = arith.constant 0 : index
    %c0_51 = arith.constant 0 : index
    %74 = vector.load %arg18[%c0_50, %c0_51] : memref<256x256xbf16, #tpu.memory_space<vmem>>, vector<256x256xbf16>
    %cst_52 = arith.constant dense<0.000000e+00> : vector<96x256xf32>
    %75 = tpu.matmul %73, %74, %cst_52 {dimension_numbers = #tpu.dot_dimension_numbers<[1], [0], [0], [1], [0, 0, 1, 1], [], []>} : vector<96x256xbf16>, vector<256x256xbf16>, vector<96x256xf32> -> vector<96x256xf32>
    %c0_53 = arith.constant 0 : index
    %c0_54 = arith.constant 0 : index
    %76 = vector.load %arg19[%c0_53, %c0_54] : memref<1x256xf32, #tpu.memory_space<vmem>>, vector<1x256xf32>
    %77 = vector.broadcast %76 : vector<1x256xf32> to vector<96x256xf32>
    %78 = arith.addf %75, %77 : vector<96x256xf32>
    %79 = math.tanh %78 : vector<96x256xf32>
    %80 = arith.truncf %79 : vector<96x256xf32> to vector<96x256xbf16>
    %c0_55 = arith.constant 0 : index
    %c0_56 = arith.constant 0 : index
    %81 = vector.load %arg20[%c0_55, %c0_56] : memref<256x256xbf16, #tpu.memory_space<vmem>>, vector<256x256xbf16>
    %cst_57 = arith.constant dense<0.000000e+00> : vector<96x256xf32>
    %82 = tpu.matmul %80, %81, %cst_57 {dimension_numbers = #tpu.dot_dimension_numbers<[1], [0], [0], [1], [0, 0, 1, 1], [], []>} : vector<96x256xbf16>, vector<256x256xbf16>, vector<96x256xf32> -> vector<96x256xf32>
    %c0_58 = arith.constant 0 : index
    %c0_59 = arith.constant 0 : index
    %83 = vector.load %arg21[%c0_58, %c0_59] : memref<1x256xf32, #tpu.memory_space<vmem>>, vector<1x256xf32>
    %84 = vector.broadcast %83 : vector<1x256xf32> to vector<96x256xf32>
    %85 = arith.addf %82, %84 : vector<96x256xf32>
    %86 = math.tanh %85 : vector<96x256xf32>
    %cst_60 = arith.constant 0.000000e+00 : f32
    %87 = vector.broadcast %cst_60 : f32 to vector<32x1xf32>
    %cst_61 = arith.constant 0.000000e+00 : f32
    %88 = vector.broadcast %cst_61 : f32 to vector<32x256xf32>
    %cst_62 = arith.constant 0.000000e+00 : f32
    %89 = vector.broadcast %cst_62 : f32 to vector<32x256xf32>
    %cst_63 = arith.constant 0.000000e+00 : f32
    %90 = vector.broadcast %cst_63 : f32 to vector<32x256xf32>
    %91 = vector.extract_strided_slice %59 {offsets = [0, 0], sizes = [32, 256], strides = [1, 1]} : vector<96x256xf32> to vector<32x256xf32>
    %92 = arith.mulf %32, %91 : vector<32x256xf32>
    %cst_64 = arith.constant dense<0.000000e+00> : vector<32xf32>
    %93 = vector.multi_reduction <add>, %92, %cst_64 [1] : vector<32x256xf32> to vector<32xf32>
    %94 = vector.shape_cast %93 : vector<32xf32> to vector<32x1xf32>
    %cst_65 = arith.constant 6.250000e-02 : f32
    %95 = vector.broadcast %cst_65 : f32 to vector<32x1xf32>
    %96 = arith.mulf %94, %95 : vector<32x1xf32>
    %97 = math.exp %96 : vector<32x1xf32>
    %98 = arith.addf %87, %97 : vector<32x1xf32>
    %99 = vector.extract_strided_slice %86 {offsets = [0, 0], sizes = [32, 256], strides = [1, 1]} : vector<96x256xf32> to vector<32x256xf32>
    %100 = vector.broadcast %97 : vector<32x1xf32> to vector<32x256xf32>
    %101 = arith.mulf %100, %99 : vector<32x256xf32>
    %102 = arith.addf %88, %101 : vector<32x256xf32>
    %103 = vector.extract_strided_slice %72 {offsets = [0, 0], sizes = [32, 256], strides = [1, 1]} : vector<96x256xf32> to vector<32x256xf32>
    %104 = arith.addf %89, %103 : vector<32x256xf32>
    %105 = vector.extract_strided_slice %18 {offsets = [0, 0], sizes = [32, 256], strides = [1, 1]} : vector<96x256xf32> to vector<32x256xf32>
    %106 = arith.addf %90, %105 : vector<32x256xf32>
    %107 = vector.extract_strided_slice %59 {offsets = [32, 0], sizes = [32, 256], strides = [1, 1]} : vector<96x256xf32> to vector<32x256xf32>
    %108 = arith.mulf %32, %107 : vector<32x256xf32>
    %cst_66 = arith.constant dense<0.000000e+00> : vector<32xf32>
    %109 = vector.multi_reduction <add>, %108, %cst_66 [1] : vector<32x256xf32> to vector<32xf32>
    %110 = vector.shape_cast %109 : vector<32xf32> to vector<32x1xf32>
    %cst_67 = arith.constant 6.250000e-02 : f32
    %111 = vector.broadcast %cst_67 : f32 to vector<32x1xf32>
    %112 = arith.mulf %110, %111 : vector<32x1xf32>
    %113 = math.exp %112 : vector<32x1xf32>
    %114 = arith.addf %98, %113 : vector<32x1xf32>
    %115 = vector.extract_strided_slice %86 {offsets = [32, 0], sizes = [32, 256], strides = [1, 1]} : vector<96x256xf32> to vector<32x256xf32>
    %116 = vector.broadcast %113 : vector<32x1xf32> to vector<32x256xf32>
    %117 = arith.mulf %116, %115 : vector<32x256xf32>
    %118 = arith.addf %102, %117 : vector<32x256xf32>
    %119 = vector.extract_strided_slice %72 {offsets = [32, 0], sizes = [32, 256], strides = [1, 1]} : vector<96x256xf32> to vector<32x256xf32>
    %120 = arith.addf %104, %119 : vector<32x256xf32>
    %121 = vector.extract_strided_slice %18 {offsets = [32, 0], sizes = [32, 256], strides = [1, 1]} : vector<96x256xf32> to vector<32x256xf32>
    %122 = arith.addf %106, %121 : vector<32x256xf32>
    %123 = vector.extract_strided_slice %59 {offsets = [64, 0], sizes = [32, 256], strides = [1, 1]} : vector<96x256xf32> to vector<32x256xf32>
    %124 = arith.mulf %32, %123 : vector<32x256xf32>
    %cst_68 = arith.constant dense<0.000000e+00> : vector<32xf32>
    %125 = vector.multi_reduction <add>, %124, %cst_68 [1] : vector<32x256xf32> to vector<32xf32>
    %126 = vector.shape_cast %125 : vector<32xf32> to vector<32x1xf32>
    %cst_69 = arith.constant 6.250000e-02 : f32
    %127 = vector.broadcast %cst_69 : f32 to vector<32x1xf32>
    %128 = arith.mulf %126, %127 : vector<32x1xf32>
    %129 = math.exp %128 : vector<32x1xf32>
    %130 = arith.addf %114, %129 : vector<32x1xf32>
    %131 = vector.extract_strided_slice %86 {offsets = [64, 0], sizes = [32, 256], strides = [1, 1]} : vector<96x256xf32> to vector<32x256xf32>
    %132 = vector.broadcast %129 : vector<32x1xf32> to vector<32x256xf32>
    %133 = arith.mulf %132, %131 : vector<32x256xf32>
    %134 = arith.addf %118, %133 : vector<32x256xf32>
    %135 = vector.extract_strided_slice %72 {offsets = [64, 0], sizes = [32, 256], strides = [1, 1]} : vector<96x256xf32> to vector<32x256xf32>
    %136 = arith.addf %120, %135 : vector<32x256xf32>
    %137 = vector.extract_strided_slice %18 {offsets = [64, 0], sizes = [32, 256], strides = [1, 1]} : vector<96x256xf32> to vector<32x256xf32>
    %138 = arith.addf %122, %137 : vector<32x256xf32>
    %139 = tpu.reciprocal %130 {approx = true} : vector<32x1xf32> -> vector<32x1xf32>
    %140 = vector.broadcast %139 : vector<32x1xf32> to vector<32x256xf32>
    %141 = arith.mulf %134, %140 : vector<32x256xf32>
    %cst_70 = arith.constant 0.333333343 : f32
    %142 = vector.broadcast %cst_70 : f32 to vector<32x256xf32>
    %143 = arith.mulf %136, %142 : vector<32x256xf32>
    %cst_71 = arith.constant 0.333333343 : f32
    %144 = vector.broadcast %cst_71 : f32 to vector<32x256xf32>
    %145 = arith.mulf %138, %144 : vector<32x256xf32>
    %146 = arith.addf %143, %141 : vector<32x256xf32>
    %cst_72 = arith.constant dense<0.000000e+00> : vector<32xf32>
    %147 = vector.multi_reduction <add>, %146, %cst_72 [1] : vector<32x256xf32> to vector<32xf32>
    %148 = vector.shape_cast %147 : vector<32xf32> to vector<32x1xf32>
    %cst_73 = arith.constant 2.560000e+02 : f32
    %149 = vector.broadcast %cst_73 : f32 to vector<32x1xf32>
    %150 = arith.divf %148, %149 : vector<32x1xf32>
    %151 = vector.broadcast %150 : vector<32x1xf32> to vector<32x256xf32>
    %152 = arith.subf %146, %151 : vector<32x256xf32>
    %153 = arith.mulf %152, %152 : vector<32x256xf32>
    %cst_74 = arith.constant dense<0.000000e+00> : vector<32xf32>
    %154 = vector.multi_reduction <add>, %153, %cst_74 [1] : vector<32x256xf32> to vector<32xf32>
    %155 = vector.shape_cast %154 : vector<32xf32> to vector<32x1xf32>
    %cst_75 = arith.constant 2.560000e+02 : f32
    %156 = vector.broadcast %cst_75 : f32 to vector<32x1xf32>
    %157 = arith.divf %155, %156 : vector<32x1xf32>
    %cst_76 = arith.constant 9.99999974E-6 : f32
    %158 = vector.broadcast %cst_76 : f32 to vector<32x1xf32>
    %159 = arith.addf %157, %158 : vector<32x1xf32>
    %160 = math.rsqrt %159 : vector<32x1xf32>
    %161 = vector.broadcast %160 : vector<32x1xf32> to vector<32x256xf32>
    %162 = arith.mulf %152, %161 : vector<32x256xf32>
    %c0_77 = arith.constant 0 : index
    %c0_78 = arith.constant 0 : index
    %163 = vector.load %arg33[%c0_77, %c0_78] : memref<1x256xf32, #tpu.memory_space<vmem>>, vector<1x256xf32>
    %164 = vector.broadcast %163 : vector<1x256xf32> to vector<32x256xf32>
    %165 = arith.mulf %162, %164 : vector<32x256xf32>
    %c0_79 = arith.constant 0 : index
    %c0_80 = arith.constant 0 : index
    %166 = vector.load %arg34[%c0_79, %c0_80] : memref<1x256xf32, #tpu.memory_space<vmem>>, vector<1x256xf32>
    %167 = vector.broadcast %166 : vector<1x256xf32> to vector<32x256xf32>
    %168 = arith.addf %165, %167 : vector<32x256xf32>
    %169 = arith.addf %45, %145 : vector<32x256xf32>
    %170 = arith.addf %169, %17 : vector<32x256xf32>
    %cst_81 = arith.constant dense<0.000000e+00> : vector<32xf32>
    %171 = vector.multi_reduction <add>, %170, %cst_81 [1] : vector<32x256xf32> to vector<32xf32>
    %172 = vector.shape_cast %171 : vector<32xf32> to vector<32x1xf32>
    %cst_82 = arith.constant 2.560000e+02 : f32
    %173 = vector.broadcast %cst_82 : f32 to vector<32x1xf32>
    %174 = arith.divf %172, %173 : vector<32x1xf32>
    %175 = vector.broadcast %174 : vector<32x1xf32> to vector<32x256xf32>
    %176 = arith.subf %170, %175 : vector<32x256xf32>
    %177 = arith.mulf %176, %176 : vector<32x256xf32>
    %cst_83 = arith.constant dense<0.000000e+00> : vector<32xf32>
    %178 = vector.multi_reduction <add>, %177, %cst_83 [1] : vector<32x256xf32> to vector<32xf32>
    %179 = vector.shape_cast %178 : vector<32xf32> to vector<32x1xf32>
    %cst_84 = arith.constant 2.560000e+02 : f32
    %180 = vector.broadcast %cst_84 : f32 to vector<32x1xf32>
    %181 = arith.divf %179, %180 : vector<32x1xf32>
    %cst_85 = arith.constant 9.99999974E-6 : f32
    %182 = vector.broadcast %cst_85 : f32 to vector<32x1xf32>
    %183 = arith.addf %181, %182 : vector<32x1xf32>
    %184 = math.rsqrt %183 : vector<32x1xf32>
    %185 = vector.broadcast %184 : vector<32x1xf32> to vector<32x256xf32>
    %186 = arith.mulf %176, %185 : vector<32x256xf32>
    %c0_86 = arith.constant 0 : index
    %c0_87 = arith.constant 0 : index
    %187 = vector.load %arg35[%c0_86, %c0_87] : memref<1x256xf32, #tpu.memory_space<vmem>>, vector<1x256xf32>
    %188 = vector.broadcast %187 : vector<1x256xf32> to vector<32x256xf32>
    %189 = arith.mulf %186, %188 : vector<32x256xf32>
    %c0_88 = arith.constant 0 : index
    %c0_89 = arith.constant 0 : index
    %190 = vector.load %arg36[%c0_88, %c0_89] : memref<1x256xf32, #tpu.memory_space<vmem>>, vector<1x256xf32>
    %191 = vector.broadcast %190 : vector<1x256xf32> to vector<32x256xf32>
    %192 = arith.addf %189, %191 : vector<32x256xf32>
    %193 = arith.truncf %192 : vector<32x256xf32> to vector<32x256xbf16>
    %c0_90 = arith.constant 0 : index
    %c0_91 = arith.constant 0 : index
    %194 = vector.load %arg26[%c0_90, %c0_91] : memref<256x256xbf16, #tpu.memory_space<vmem>>, vector<256x256xbf16>
    %cst_92 = arith.constant dense<0.000000e+00> : vector<32x256xf32>
    %195 = tpu.matmul %193, %194, %cst_92 {dimension_numbers = #tpu.dot_dimension_numbers<[1], [0], [0], [1], [0, 0, 1, 1], [], []>} : vector<32x256xbf16>, vector<256x256xbf16>, vector<32x256xf32> -> vector<32x256xf32>
    %196 = arith.truncf %168 : vector<32x256xf32> to vector<32x256xbf16>
    %c0_93 = arith.constant 0 : index
    %c0_94 = arith.constant 0 : index
    %197 = vector.load %arg27[%c0_93, %c0_94] : memref<256x256xbf16, #tpu.memory_space<vmem>>, vector<256x256xbf16>
    %cst_95 = arith.constant dense<0.000000e+00> : vector<32x256xf32>
    %198 = tpu.matmul %196, %197, %cst_95 {dimension_numbers = #tpu.dot_dimension_numbers<[1], [0], [0], [1], [0, 0, 1, 1], [], []>} : vector<32x256xbf16>, vector<256x256xbf16>, vector<32x256xf32> -> vector<32x256xf32>
    %199 = arith.addf %195, %198 : vector<32x256xf32>
    %c0_96 = arith.constant 0 : index
    %c0_97 = arith.constant 0 : index
    %200 = vector.load %arg28[%c0_96, %c0_97] : memref<1x256xf32, #tpu.memory_space<vmem>>, vector<1x256xf32>
    %201 = vector.broadcast %200 : vector<1x256xf32> to vector<32x256xf32>
    %202 = arith.addf %199, %201 : vector<32x256xf32>
    %203 = math.tanh %202 : vector<32x256xf32>
    %204 = arith.truncf %203 : vector<32x256xf32> to vector<32x256xbf16>
    %c0_98 = arith.constant 0 : index
    %c0_99 = arith.constant 0 : index
    %205 = vector.load %arg29[%c0_98, %c0_99] : memref<256x256xbf16, #tpu.memory_space<vmem>>, vector<256x256xbf16>
    %cst_100 = arith.constant dense<0.000000e+00> : vector<32x256xf32>
    %206 = tpu.matmul %204, %205, %cst_100 {dimension_numbers = #tpu.dot_dimension_numbers<[1], [0], [0], [1], [0, 0, 1, 1], [], []>} : vector<32x256xbf16>, vector<256x256xbf16>, vector<32x256xf32> -> vector<32x256xf32>
    %c0_101 = arith.constant 0 : index
    %c0_102 = arith.constant 0 : index
    %207 = vector.load %arg30[%c0_101, %c0_102] : memref<1x256xf32, #tpu.memory_space<vmem>>, vector<1x256xf32>
    %208 = vector.broadcast %207 : vector<1x256xf32> to vector<32x256xf32>
    %209 = arith.addf %206, %208 : vector<32x256xf32>
    %210 = math.tanh %209 : vector<32x256xf32>
    %211 = arith.truncf %210 : vector<32x256xf32> to vector<32x256xbf16>
    %c0_103 = arith.constant 0 : index
    %c0_104 = arith.constant 0 : index
    %212 = vector.load %arg31[%c0_103, %c0_104] : memref<256x128xbf16, #tpu.memory_space<vmem>>, vector<256x128xbf16>
    %cst_105 = arith.constant dense<0.000000e+00> : vector<32x128xf32>
    %213 = tpu.matmul %211, %212, %cst_105 {dimension_numbers = #tpu.dot_dimension_numbers<[1], [0], [0], [1], [0, 0, 1, 1], [], []>} : vector<32x256xbf16>, vector<256x128xbf16>, vector<32x128xf32> -> vector<32x128xf32>
    %c0_106 = arith.constant 0 : index
    %c0_107 = arith.constant 0 : index
    %214 = vector.load %arg32[%c0_106, %c0_107] : memref<1x128xf32, #tpu.memory_space<vmem>>, vector<1x128xf32>
    %215 = vector.broadcast %214 : vector<1x128xf32> to vector<32x128xf32>
    %216 = arith.addf %213, %215 : vector<32x128xf32>
    %217 = tpu.iota {dimensions = array<i32: 1>} : vector<32x128xi32>
    %c5_i32 = arith.constant 5 : i32
    %218 = vector.broadcast %c5_i32 : i32 to vector<32x128xi32>
    %219 = arith.cmpi eq, %217, %218 : vector<32x128xi32>
    %cst_108 = arith.constant 0.000000e+00 : f32
    %220 = vector.shape_cast %96 : vector<32x1xf32> to vector<32x1xf32>
    %221 = vector.broadcast %220 : vector<32x1xf32> to vector<32x128xf32>
    %222 = vector.broadcast %cst_108 : f32 to vector<32x128xf32>
    %223 = arith.select %219, %221, %222 : vector<32x128xi1>, vector<32x128xf32>
    %224 = arith.addf %216, %223 : vector<32x128xf32>
    %c8_i32 = arith.constant 8 : i32
    %225 = vector.broadcast %c8_i32 : i32 to vector<32x128xi32>
    %226 = arith.cmpi eq, %217, %225 : vector<32x128xi32>
    %227 = arith.mulf %97, %139 : vector<32x1xf32>
    %cst_109 = arith.constant 0.000000e+00 : f32
    %228 = vector.shape_cast %227 : vector<32x1xf32> to vector<32x1xf32>
    %229 = vector.broadcast %228 : vector<32x1xf32> to vector<32x128xf32>
    %230 = vector.broadcast %cst_109 : f32 to vector<32x128xf32>
    %231 = arith.select %226, %229, %230 : vector<32x128xi1>, vector<32x128xf32>
    %232 = arith.addf %224, %231 : vector<32x128xf32>
    %c6_i32 = arith.constant 6 : i32
    %233 = vector.broadcast %c6_i32 : i32 to vector<32x128xi32>
    %234 = arith.cmpi eq, %217, %233 : vector<32x128xi32>
    %cst_110 = arith.constant 0.000000e+00 : f32
    %235 = vector.shape_cast %112 : vector<32x1xf32> to vector<32x1xf32>
    %236 = vector.broadcast %235 : vector<32x1xf32> to vector<32x128xf32>
    %237 = vector.broadcast %cst_110 : f32 to vector<32x128xf32>
    %238 = arith.select %234, %236, %237 : vector<32x128xi1>, vector<32x128xf32>
    %239 = arith.addf %232, %238 : vector<32x128xf32>
    %c9_i32 = arith.constant 9 : i32
    %240 = vector.broadcast %c9_i32 : i32 to vector<32x128xi32>
    %241 = arith.cmpi eq, %217, %240 : vector<32x128xi32>
    %242 = arith.mulf %113, %139 : vector<32x1xf32>
    %cst_111 = arith.constant 0.000000e+00 : f32
    %243 = vector.shape_cast %242 : vector<32x1xf32> to vector<32x1xf32>
    %244 = vector.broadcast %243 : vector<32x1xf32> to vector<32x128xf32>
    %245 = vector.broadcast %cst_111 : f32 to vector<32x128xf32>
    %246 = arith.select %241, %244, %245 : vector<32x128xi1>, vector<32x128xf32>
    %247 = arith.addf %239, %246 : vector<32x128xf32>
    %c7_i32 = arith.constant 7 : i32
    %248 = vector.broadcast %c7_i32 : i32 to vector<32x128xi32>
    %249 = arith.cmpi eq, %217, %248 : vector<32x128xi32>
    %cst_112 = arith.constant 0.000000e+00 : f32
    %250 = vector.shape_cast %128 : vector<32x1xf32> to vector<32x1xf32>
    %251 = vector.broadcast %250 : vector<32x1xf32> to vector<32x128xf32>
    %252 = vector.broadcast %cst_112 : f32 to vector<32x128xf32>
    %253 = arith.select %249, %251, %252 : vector<32x128xi1>, vector<32x128xf32>
    %254 = arith.addf %247, %253 : vector<32x128xf32>
    %c10_i32 = arith.constant 10 : i32
    %255 = vector.broadcast %c10_i32 : i32 to vector<32x128xi32>
    %256 = arith.cmpi eq, %217, %255 : vector<32x128xi32>
    %257 = arith.mulf %129, %139 : vector<32x1xf32>
    %cst_113 = arith.constant 0.000000e+00 : f32
    %258 = vector.shape_cast %257 : vector<32x1xf32> to vector<32x1xf32>
    %259 = vector.broadcast %258 : vector<32x1xf32> to vector<32x128xf32>
    %260 = vector.broadcast %cst_113 : f32 to vector<32x128xf32>
    %261 = arith.select %256, %259, %260 : vector<32x128xi1>, vector<32x128xf32>
    %262 = arith.addf %254, %261 : vector<32x128xf32>
    %c0_114 = arith.constant 0 : index
    %c0_115 = arith.constant 0 : index
    %263 = vector.load %arg37[%c0_114, %c0_115] : memref<32x128xf32, #tpu.memory_space<vmem>>, vector<32x128xf32>
    tpu.vector_store %arg37[%c0_114, %c0_115], %262 {strides = array<i32>} : memref<32x128xf32, #tpu.memory_space<vmem>>, vector<32x128xf32>,
    return
  }
  func.func @transform_0(%arg0: i32) -> (i32, i32) {
    %c0_i32 = arith.constant 0 : i32
    %c0_i32_0 = arith.constant 0 : i32
    return %arg0, %c0_i32 : i32, i32
  }
  func.func @transform_1(%arg0: i32) -> (i32, i32) {
    %c0_i32 = arith.constant 0 : i32
    %c0_i32_0 = arith.constant 0 : i32
    %c0_i32_1 = arith.constant 0 : i32
    return %c0_i32, %c0_i32_0 : i32, i32
  }
  func.func @transform_2(%arg0: i32) -> (i32, i32) {
    %c0_i32 = arith.constant 0 : i32
    %c0_i32_0 = arith.constant 0 : i32
    %c0_i32_1 = arith.constant 0 : i32
    return %c0_i32, %c0_i32_0 : i32, i32
  }
  func.func @transform_3(%arg0: i32) -> (i32, i32) {
    %c0_i32 = arith.constant 0 : i32
    %c0_i32_0 = arith.constant 0 : i32
    %c0_i32_1 = arith.constant 0 : i32
    return %c0_i32, %c0_i32_0 : i32, i32
  }
  func.func @transform_4(%arg0: i32) -> (i32, i32) {
    %c0_i32 = arith.constant 0 : i32
    %c0_i32_0 = arith.constant 0 : i32
    %c0_i32_1 = arith.constant 0 : i32
    return %c0_i32, %c0_i32_0 : i32, i32
  }
  func.func @transform_5(%arg0: i32) -> (i32, i32) {
    %c0_i32 = arith.constant 0 : i32
    %c0_i32_0 = arith.constant 0 : i32
    %c0_i32_1 = arith.constant 0 : i32
    return %c0_i32, %c0_i32_0 : i32, i32
  }
  func.func @transform_6(%arg0: i32) -> (i32, i32) {
    %c0_i32 = arith.constant 0 : i32
    %c0_i32_0 = arith.constant 0 : i32
    %c0_i32_1 = arith.constant 0 : i32
    return %c0_i32, %c0_i32_0 : i32, i32
  }
  func.func @transform_7(%arg0: i32) -> (i32, i32) {
    %c0_i32 = arith.constant 0 : i32
    %c0_i32_0 = arith.constant 0 : i32
    %c0_i32_1 = arith.constant 0 : i32
    return %c0_i32, %c0_i32_0 : i32, i32
  }
  func.func @transform_8(%arg0: i32) -> (i32, i32) {
    %c0_i32 = arith.constant 0 : i32
    %c0_i32_0 = arith.constant 0 : i32
    %c0_i32_1 = arith.constant 0 : i32
    return %c0_i32, %c0_i32_0 : i32, i32
  }
  func.func @transform_9(%arg0: i32) -> (i32, i32) {
    %c0_i32 = arith.constant 0 : i32
    %c0_i32_0 = arith.constant 0 : i32
    %c0_i32_1 = arith.constant 0 : i32
    return %c0_i32, %c0_i32_0 : i32, i32
  }
  func.func @transform_10(%arg0: i32) -> (i32, i32) {
    %c0_i32 = arith.constant 0 : i32
    %c0_i32_0 = arith.constant 0 : i32
    %c0_i32_1 = arith.constant 0 : i32
    return %c0_i32, %c0_i32_0 : i32, i32
  }
  func.func @transform_11(%arg0: i32) -> (i32, i32) {
    %c0_i32 = arith.constant 0 : i32
    %c0_i32_0 = arith.constant 0 : i32
    %c0_i32_1 = arith.constant 0 : i32
    return %c0_i32, %c0_i32_0 : i32, i32
  }
  func.func @transform_12(%arg0: i32) -> (i32, i32) {
    %c0_i32 = arith.constant 0 : i32
    %c0_i32_0 = arith.constant 0 : i32
    %c0_i32_1 = arith.constant 0 : i32
    return %c0_i32, %c0_i32_0 : i32, i32
  }
  func.func @transform_13(%arg0: i32) -> (i32, i32) {
    %c0_i32 = arith.constant 0 : i32
    %c0_i32_0 = arith.constant 0 : i32
    %c0_i32_1 = arith.constant 0 : i32
    return %c0_i32, %c0_i32_0 : i32, i32
  }
  func.func @transform_14(%arg0: i32) -> (i32, i32) {
    %c0_i32 = arith.constant 0 : i32
    %c0_i32_0 = arith.constant 0 : i32
    %c0_i32_1 = arith.constant 0 : i32
    return %c0_i32, %c0_i32_0 : i32, i32
  }
  func.func @transform_15(%arg0: i32) -> (i32, i32) {
    %c0_i32 = arith.constant 0 : i32
    %c0_i32_0 = arith.constant 0 : i32
    %c0_i32_1 = arith.constant 0 : i32
    return %c0_i32, %c0_i32_0 : i32, i32
  }
  func.func @transform_16(%arg0: i32) -> (i32, i32) {
    %c0_i32 = arith.constant 0 : i32
    %c0_i32_0 = arith.constant 0 : i32
    %c0_i32_1 = arith.constant 0 : i32
    return %c0_i32, %c0_i32_0 : i32, i32
  }
  func.func @transform_17(%arg0: i32) -> (i32, i32) {
    %c0_i32 = arith.constant 0 : i32
    %c0_i32_0 = arith.constant 0 : i32
    %c0_i32_1 = arith.constant 0 : i32
    return %c0_i32, %c0_i32_0 : i32, i32
  }
  func.func @transform_18(%arg0: i32) -> (i32, i32) {
    %c0_i32 = arith.constant 0 : i32
    %c0_i32_0 = arith.constant 0 : i32
    %c0_i32_1 = arith.constant 0 : i32
    return %c0_i32, %c0_i32_0 : i32, i32
  }
  func.func @transform_19(%arg0: i32) -> (i32, i32) {
    %c0_i32 = arith.constant 0 : i32
    %c0_i32_0 = arith.constant 0 : i32
    %c0_i32_1 = arith.constant 0 : i32
    return %c0_i32, %c0_i32_0 : i32, i32
  }
  func.func @transform_20(%arg0: i32) -> (i32, i32) {
    %c0_i32 = arith.constant 0 : i32
    %c0_i32_0 = arith.constant 0 : i32
    %c0_i32_1 = arith.constant 0 : i32
    return %c0_i32, %c0_i32_0 : i32, i32
  }
  func.func @transform_21(%arg0: i32) -> (i32, i32) {
    %c0_i32 = arith.constant 0 : i32
    %c0_i32_0 = arith.constant 0 : i32
    %c0_i32_1 = arith.constant 0 : i32
    return %c0_i32, %c0_i32_0 : i32, i32
  }
  func.func @transform_22(%arg0: i32) -> (i32, i32) {
    %c0_i32 = arith.constant 0 : i32
    %c0_i32_0 = arith.constant 0 : i32
    %c0_i32_1 = arith.constant 0 : i32
    return %c0_i32, %c0_i32_0 : i32, i32
  }
  func.func @transform_23(%arg0: i32) -> (i32, i32) {
    %c0_i32 = arith.constant 0 : i32
    %c0_i32_0 = arith.constant 0 : i32
    %c0_i32_1 = arith.constant 0 : i32
    return %c0_i32, %c0_i32_0 : i32, i32
  }
  func.func @transform_24(%arg0: i32) -> (i32, i32) {
    %c0_i32 = arith.constant 0 : i32
    %c0_i32_0 = arith.constant 0 : i32
    %c0_i32_1 = arith.constant 0 : i32
    return %c0_i32, %c0_i32_0 : i32, i32
  }
  func.func @transform_25(%arg0: i32) -> (i32, i32) {
    %c0_i32 = arith.constant 0 : i32
    %c0_i32_0 = arith.constant 0 : i32
    %c0_i32_1 = arith.constant 0 : i32
    return %c0_i32, %c0_i32_0 : i32, i32
  }
  func.func @transform_26(%arg0: i32) -> (i32, i32) {
    %c0_i32 = arith.constant 0 : i32
    %c0_i32_0 = arith.constant 0 : i32
    %c0_i32_1 = arith.constant 0 : i32
    return %c0_i32, %c0_i32_0 : i32, i32
  }
  func.func @transform_27(%arg0: i32) -> (i32, i32) {
    %c0_i32 = arith.constant 0 : i32
    %c0_i32_0 = arith.constant 0 : i32
    %c0_i32_1 = arith.constant 0 : i32
    return %c0_i32, %c0_i32_0 : i32, i32
  }
  func.func @transform_28(%arg0: i32) -> (i32, i32) {
    %c0_i32 = arith.constant 0 : i32
    %c0_i32_0 = arith.constant 0 : i32
    %c0_i32_1 = arith.constant 0 : i32
    return %c0_i32, %c0_i32_0 : i32, i32
  }
  func.func @transform_29(%arg0: i32) -> (i32, i32) {
    %c0_i32 = arith.constant 0 : i32
    %c0_i32_0 = arith.constant 0 : i32
    %c0_i32_1 = arith.constant 0 : i32
    return %c0_i32, %c0_i32_0 : i32, i32
  }
  func.func @transform_30(%arg0: i32) -> (i32, i32) {
    %c0_i32 = arith.constant 0 : i32
    %c0_i32_0 = arith.constant 0 : i32
    %c0_i32_1 = arith.constant 0 : i32
    return %c0_i32, %c0_i32_0 : i32, i32
  }
  func.func @transform_31(%arg0: i32) -> (i32, i32) {
    %c0_i32 = arith.constant 0 : i32
    %c0_i32_0 = arith.constant 0 : i32
    %c0_i32_1 = arith.constant 0 : i32
    return %c0_i32, %c0_i32_0 : i32, i32
  }
  func.func @transform_32(%arg0: i32) -> (i32, i32) {
    %c0_i32 = arith.constant 0 : i32
    %c0_i32_0 = arith.constant 0 : i32
    %c0_i32_1 = arith.constant 0 : i32
    return %c0_i32, %c0_i32_0 : i32, i32
  }
  func.func @transform_33(%arg0: i32) -> (i32, i32) {
    %c0_i32 = arith.constant 0 : i32
    %c0_i32_0 = arith.constant 0 : i32
    %c0_i32_1 = arith.constant 0 : i32
    return %c0_i32, %c0_i32_0 : i32, i32
  }
  func.func @transform_34(%arg0: i32) -> (i32, i32) {
    %c0_i32 = arith.constant 0 : i32
    %c0_i32_0 = arith.constant 0 : i32
    %c0_i32_1 = arith.constant 0 : i32
    return %c0_i32, %c0_i32_0 : i32, i32
  }
  func.func @transform_35(%arg0: i32) -> (i32, i32) {
    %c0_i32 = arith.constant 0 : i32
    %c0_i32_0 = arith.constant 0 : i32
    %c0_i32_1 = arith.constant 0 : i32
    return %c0_i32, %c0_i32_0 : i32, i32
  }
  func.func @transform_36(%arg0: i32) -> (i32, i32) {
    %c0_i32 = arith.constant 0 : i32
    %c0_i32_0 = arith.constant 0 : i32
    return %arg0, %c0_i32 : i32, i32
  }
}

</mosaic_0001>

<llo_original>
// kernel: tpu_custom_call.1
$region0: #{tpu_custom_call.1}
  #allocation0 [shape = 'u32[]', space=smem, size = 0x4, offset = 0x4, fixed_abs, tag = 'smem constant byte address 0x4 - core index']
  #allocation1 [shape = 'u32[72,128]{1,0:T(1,128)}', space=vmem, size = 0x9000, scoped, tag = 'internal scratch']
  %s0 = inlined_call_operand.smem [shape: u32[37], index: -1, kind: input, shape index: {}]
  %s1 = sld [smem:[%s0]]
  %s2 = scalar_lea.smem %s0, 1
  %s3 = sld [smem:[%s2]]
  %s4 = scalar_lea.smem %s0, 2
  %s5 = sld [smem:[%s4]]
  %s6 = scalar_lea.smem %s0, 3
  %s7 = sld [smem:[%s6]]
  %s8 = scalar_lea.smem %s0, 4
  %s9 = sld [smem:[%s8]]
  %s10 = scalar_lea.smem %s0, 5
  %s11 = sld [smem:[%s10]]
  %s12 = scalar_lea.smem %s0, 6
  %s13 = sld [smem:[%s12]]
  %s14 = scalar_lea.smem %s0, 7
  %s15 = sld [smem:[%s14]]
  %s16 = scalar_lea.smem %s0, 8
  %s17 = sld [smem:[%s16]]
  %s18 = scalar_lea.smem %s0, 9
  %s19 = sld [smem:[%s18]]
  %s20 = scalar_lea.smem %s0, 10
  %s21 = sld [smem:[%s20]]
  %s22 = scalar_lea.smem %s0, 11
  %s23 = sld [smem:[%s22]]
  %s24 = scalar_lea.smem %s0, 12
  %s25 = sld [smem:[%s24]]
  %s26 = scalar_lea.smem %s0, 13
  %s27 = sld [smem:[%s26]]
  %s28 = scalar_lea.smem %s0, 14
  %s29 = sld [smem:[%s28]]
  %s30 = scalar_lea.smem %s0, 15
  %s31 = sld [smem:[%s30]]
  %s32 = scalar_lea.smem %s0, 16
  %s33 = sld [smem:[%s32]]
  %s34 = scalar_lea.smem %s0, 17
  %s35 = sld [smem:[%s34]]
  %s36 = scalar_lea.smem %s0, 18
  %s37 = sld [smem:[%s36]]
  %s38 = scalar_lea.smem %s0, 19
  %s39 = sld [smem:[%s38]]
  %s40 = scalar_lea.smem %s0, 20
  %s41 = sld [smem:[%s40]]
  %s42 = scalar_lea.smem %s0, 21
  %s43 = sld [smem:[%s42]]
  %s44 = scalar_lea.smem %s0, 22
  %s45 = sld [smem:[%s44]]
  %s46 = scalar_lea.smem %s0, 23
  %s47 = sld [smem:[%s46]]
  %s48 = scalar_lea.smem %s0, 24
  %s49 = sld [smem:[%s48]]
  %s50 = scalar_lea.smem %s0, 25
  %s51 = sld [smem:[%s50]]
  %s52 = scalar_lea.smem %s0, 26
  %s53 = sld [smem:[%s52]]
  %s54 = scalar_lea.smem %s0, 27
  %s55 = sld [smem:[%s54]]
  %s56 = scalar_lea.smem %s0, 28
  %s57 = sld [smem:[%s56]]
  %s58 = scalar_lea.smem %s0, 29
  %s59 = sld [smem:[%s58]]
  %s60 = scalar_lea.smem %s0, 30
  %s61 = sld [smem:[%s60]]
  %s62 = scalar_lea.smem %s0, 31
  %s63 = sld [smem:[%s62]]
  %s64 = scalar_lea.smem %s0, 32
  %s65 = sld [smem:[%s64]]
  %s66 = scalar_lea.smem %s0, 33
  %s67 = sld [smem:[%s66]]
  %s68 = scalar_lea.smem %s0, 34
  %s69 = sld [smem:[%s68]]
  %s70 = scalar_lea.smem %s0, 35
  %s71 = sld [smem:[%s70]]
  %s72 = scalar_lea.smem %s0, 36
  %s73 = sld [smem:[%s72]]
  %s74 = sld [smem:[#allocation0]]
  $region266: #{tpu_custom_call.1} parent=0
    _
  %s76 = ssub.s32 1, %s74
  %s77 = scalar_select 0, %s76, %s74
  $region1: #{tpu_custom_call.1} parent=0
    #allocation2 [shape = 'u8[131072]{0}', space=vmem, size = 0x20000, scoped, tag = 'input window, operand 3, single buffered']
    #allocation3 [shape = 's32[1]{0}', space=sflag, size = 0x4, scoped, tag = 'scoped memory for tpu_custom_call.1']
    #allocation4 [shape = 's32[1]{0}', space=sflag, size = 0x4, scoped, tag = 'scoped memory for tpu_custom_call.1']
    #allocation5 [shape = 'u8[131072]{0}', space=vmem, size = 0x20000, scoped, tag = 'input window, operand 5, single buffered']
    #allocation6 [shape = 's32[1]{0}', space=sflag, size = 0x4, scoped, tag = 'scoped memory for tpu_custom_call.1']
    #allocation7 [shape = 'u8[1024]{0}', space=vmem, size = 0x400, scoped, tag = 'input window, operand 6, single buffered']
    #allocation8 [shape = 'u8[131072]{0}', space=vmem, size = 0x20000, scoped, tag = 'input window, operand 7, single buffered']
    #allocation9 [shape = 's32[1]{0}', space=sflag, size = 0x4, scoped, tag = 'scoped memory for tpu_custom_call.1']
    #allocation10 [shape = 'u8[1024]{0}', space=vmem, size = 0x400, scoped, tag = 'input window, operand 8, single buffered']
    #allocation11 [shape = 'u8[131072]{0}', space=vmem, size = 0x20000, scoped, tag = 'input window, operand 9, single buffered']
    #allocation12 [shape = 's32[1]{0}', space=sflag, size = 0x4, scoped, tag = 'scoped memory for tpu_custom_call.1']
    #allocation13 [shape = 'u8[1024]{0}', space=vmem, size = 0x400, scoped, tag = 'input window, operand 10, single buffered']
    #allocation14 [shape = 'u8[131072]{0}', space=vmem, size = 0x20000, scoped, tag = 'input window, operand 11, single buffered']
    #allocation15 [shape = 's32[1]{0}', space=sflag, size = 0x4, scoped, tag = 'scoped memory for tpu_custom_call.1']
    #allocation16 [shape = 'u8[1024]{0}', space=vmem, size = 0x400, scoped, tag = 'input window, operand 12, single buffered']
    #allocation17 [shape = 'u8[1024]{0}', space=vmem, size = 0x400, scoped, tag = 'input window, operand 14, single buffered']
    #allocation18 [shape = 's32[1]{0}', space=sflag, size = 0x4, scoped, tag = 'scoped memory for tpu_custom_call.1']
    #allocation19 [shape = 'u8[131072]{0}', space=vmem, size = 0x20000, scoped, tag = 'input window, operand 15, single buffered']
    #allocation20 [shape = 'u8[1024]{0}', space=vmem, size = 0x400, scoped, tag = 'input window, operand 16, single buffered']
    #allocation21 [shape = 's32[1]{0}', space=sflag, size = 0x4, scoped, tag = 'scoped memory for tpu_custom_call.1']
    #allocation22 [shape = 'u8[131072]{0}', space=vmem, size = 0x20000, scoped, tag = 'input window, operand 17, single buffered']
    #allocation23 [shape = 'u8[1024]{0}', space=vmem, size = 0x400, scoped, tag = 'input window, operand 18, single buffered']
    #allocation24 [shape = 's32[1]{0}', space=sflag, size = 0x4, scoped, tag = 'scoped memory for tpu_custom_call.1']
    #allocation25 [shape = 'u8[131072]{0}', space=vmem, size = 0x20000, scoped, tag = 'input window, operand 19, single buffered']
    #allocation26 [shape = 'u8[1024]{0}', space=vmem, size = 0x400, scoped, tag = 'input window, operand 20, single buffered']
    #allocation27 [shape = 's32[1]{0}', space=sflag, size = 0x4, scoped, tag = 'scoped memory for tpu_custom_call.1']
    #allocation28 [shape = 'u8[12288]{0}', space=vmem, size = 0x3000, scoped, tag = 'input window, operand 21, single buffered']
    #allocation29 [shape = 'u8[1024]{0}', space=vmem, size = 0x400, scoped, tag = 'input window, operand 22, single buffered']
    #allocation30 [shape = 's32[1]{0}', space=sflag, size = 0x4, scoped, tag = 'scoped memory for tpu_custom_call.1']
    #allocation31 [shape = 'u8[131072]{0}', space=vmem, size = 0x20000, scoped, tag = 'input window, operand 23, single buffered']
    #allocation32 [shape = 'u8[1024]{0}', space=vmem, size = 0x400, scoped, tag = 'input window, operand 24, single buffered']
    #allocation33 [shape = 's32[1]{0}', space=sflag, size = 0x4, scoped, tag = 'scoped memory for tpu_custom_call.1']
    #allocation34 [shape = 'u8[131072]{0}', space=vmem, size = 0x20000, scoped, tag = 'input window, operand 25, single buffered']
    #allocation35 [shape = 'u8[131072]{0}', space=vmem, size = 0x20000, scoped, tag = 'input window, operand 26, single buffered']
    #allocation36 [shape = 's32[1]{0}', space=sflag, size = 0x4, scoped, tag = 'scoped memory for tpu_custom_call.1']
    #allocation37 [shape = 'u8[1024]{0}', space=vmem, size = 0x400, scoped, tag = 'input window, operand 27, single buffered']
    #allocation38 [shape = 'u8[131072]{0}', space=vmem, size = 0x20000, scoped, tag = 'input window, operand 28, single buffered']
    #allocation39 [shape = 's32[1]{0}', space=sflag, size = 0x4, scoped, tag = 'scoped memory for tpu_custom_call.1']
    #allocation40 [shape = 'u8[1024]{0}', space=vmem, size = 0x400, scoped, tag = 'input window, operand 29, single buffered']
    #allocation41 [shape = 'u8[512]{0}', space=vmem, size = 0x400, scoped, tag = 'input window, operand 31, single buffered']
    #allocation42 [shape = 's32[1]{0}', space=sflag, size = 0x4, scoped, tag = 'scoped memory for tpu_custom_call.1']
    #allocation43 [shape = 'u8[1024]{0}', space=vmem, size = 0x400, scoped, tag = 'input window, operand 33, single buffered']
    #allocation44 [shape = 'u8[1024]{0}', space=vmem, size = 0x400, scoped, tag = 'input window, operand 35, single buffered']
    #allocation45 [shape = 's32[1]{0}', space=sflag, size = 0x4, scoped, tag = 'scoped memory for tpu_custom_call.1']
    #allocation46 [shape = 'u8[16384]{0}', space=vmem, size = 0x4000, scoped, tag = 'output window, operand 0, single buffered']
    %78 = vsyncpa [#allocation3], 0
    %79 = vsyncpa [#allocation6], 0
    %80 = vsyncpa [#allocation9], 0
    %81 = vsyncpa [#allocation12], 0
    %82 = vsyncpa [#allocation15], 0
    %83 = vsyncpa [#allocation18], 0
    %84 = vsyncpa [#allocation21], 0
    %85 = vsyncpa [#allocation24], 0
    %86 = vsyncpa [#allocation27], 0
    %87 = vsyncpa [#allocation30], 0
    %88 = vsyncpa [#allocation33], 0
    %89 = vsyncpa [#allocation36], 0
    %90 = vsyncpa [#allocation39], 0
    %91 = vsyncpa [#allocation42], 0
    %92 = vsyncpa [#allocation45], 0
    %93 = vsyncpa [#allocation4], 0
    // Predicated region
    $region2: #{tpu_custom_call.1} parent=1 // pred_check
      _
    $region3: #{tpu_custom_call.1} parent=1 // pred_check_branch
      %95 = sbr.rel (0) target = $region5
    $region4: #{tpu_custom_call.1} parent=1 // pred_region
      _
    $region5: #{tpu_custom_call.1} parent=1 // pred_fallthru
      _
    // Predicated region
    $region6: #{tpu_custom_call.1} parent=1 // pred_check
      _
    $region7: #{tpu_custom_call.1} parent=1 // pred_check_branch
      %97 = sbr.rel (0) target = $region9
    $region8: #{tpu_custom_call.1} parent=1 // pred_region
      _
    $region9: #{tpu_custom_call.1} parent=1 // pred_fallthru
      _
    // Predicated region
    $region10: #{tpu_custom_call.1} parent=1 // pred_check
      _
    $region11: #{tpu_custom_call.1} parent=1 // pred_check_branch
      %99 = sbr.rel (0) target = $region13
    $region12: #{tpu_custom_call.1} parent=1 // pred_region
      _
    $region13: #{tpu_custom_call.1} parent=1 // pred_fallthru
      _
    // Predicated region
    $region14: #{tpu_custom_call.1} parent=1 // pred_check
      _
    $region15: #{tpu_custom_call.1} parent=1 // pred_check_branch
      %101 = sbr.rel (0) target = $region17
    $region16: #{tpu_custom_call.1} parent=1 // pred_region
      %103 = vsyncadd [#allocation3], 0
      %s104 = sshll.u32 %s7, 4
      %s105 = int_to_ptr.hbm [resolvable:$true] %s104
      %s106 = sshll.u32 [#allocation2], 4
      %s107 = int_to_ptr.vmem [resolvable:$true] %s106
      %112 = dma.hbm_to_vmem [thread:$0]  %s105, 4096, %s107, [#allocation3], 128, 128, 8
    $region17: #{tpu_custom_call.1} parent=1 // pred_fallthru
      _
    // Predicated region
    $region18: #{tpu_custom_call.1} parent=1 // pred_check
      _
    $region19: #{tpu_custom_call.1} parent=1 // pred_check_branch
      %114 = sbr.rel (0) target = $region21
    $region20: #{tpu_custom_call.1} parent=1 // pred_region
      _
    $region21: #{tpu_custom_call.1} parent=1 // pred_fallthru
      _
    // Predicated region
    $region22: #{tpu_custom_call.1} parent=1 // pred_check
      _
    $region23: #{tpu_custom_call.1} parent=1 // pred_check_branch
      %116 = sbr.rel (0) target = $region25
    $region24: #{tpu_custom_call.1} parent=1 // pred_region
      %118 = vsyncadd [#allocation6], 0
      %s119 = sshll.u32 %s11, 4
      %s120 = int_to_ptr.hbm [resolvable:$true] %s119
      %s121 = sshll.u32 [#allocation5], 4
      %s122 = int_to_ptr.vmem [resolvable:$true] %s121
      %127 = dma.hbm_to_vmem [thread:$0]  %s120, 4096, %s122, [#allocation6], 128, 128, 8
    $region25: #{tpu_custom_call.1} parent=1 // pred_fallthru
      _
    // Predicated region
    $region26: #{tpu_custom_call.1} parent=1 // pred_check
      _
    $region27: #{tpu_custom_call.1} parent=1 // pred_check_branch
      %129 = sbr.rel (0) target = $region29
    $region28: #{tpu_custom_call.1} parent=1 // pred_region
      %131 = vsyncadd [#allocation6], 0
      %s133 = sshll.u32 %s13, 4
      %s134 = int_to_ptr.hbm [resolvable:$true] %s133
      %s135 = sshll.u32 [#allocation7], 4
      %s136 = int_to_ptr.vmem [resolvable:$true] %s135
      %138 = dma.hbm_to_vmem [thread:$0]  %s134, 32, %s136, [#allocation6]
    $region29: #{tpu_custom_call.1} parent=1 // pred_fallthru
      _
    // Predicated region
    $region30: #{tpu_custom_call.1} parent=1 // pred_check
      _
    $region31: #{tpu_custom_call.1} parent=1 // pred_check_branch
      %140 = sbr.rel (0) target = $region33
    $region32: #{tpu_custom_call.1} parent=1 // pred_region
      %142 = vsyncadd [#allocation9], 0
      %s143 = sshll.u32 %s15, 4
      %s144 = int_to_ptr.hbm [resolvable:$true] %s143
      %s145 = sshll.u32 [#allocation8], 4
      %s146 = int_to_ptr.vmem [resolvable:$true] %s145
      %151 = dma.hbm_to_vmem [thread:$0]  %s144, 4096, %s146, [#allocation9], 128, 128, 8
    $region33: #{tpu_custom_call.1} parent=1 // pred_fallthru
      _
    // Predicated region
    $region34: #{tpu_custom_call.1} parent=1 // pred_check
      _
    $region35: #{tpu_custom_call.1} parent=1 // pred_check_branch
      %153 = sbr.rel (0) target = $region37
    $region36: #{tpu_custom_call.1} parent=1 // pred_region
      %155 = vsyncadd [#allocation9], 0
      %s157 = sshll.u32 %s17, 4
      %s158 = int_to_ptr.hbm [resolvable:$true] %s157
      %s159 = sshll.u32 [#allocation10], 4
      %s160 = int_to_ptr.vmem [resolvable:$true] %s159
      %162 = dma.hbm_to_vmem [thread:$0]  %s158, 32, %s160, [#allocation9]
    $region37: #{tpu_custom_call.1} parent=1 // pred_fallthru
      _
    // Predicated region
    $region38: #{tpu_custom_call.1} parent=1 // pred_check
      _
    $region39: #{tpu_custom_call.1} parent=1 // pred_check_branch
      %164 = sbr.rel (0) target = $region41
    $region40: #{tpu_custom_call.1} parent=1 // pred_region
      %166 = vsyncadd [#allocation12], 0
      %s167 = sshll.u32 %s19, 4
      %s168 = int_to_ptr.hbm [resolvable:$true] %s167
      %s169 = sshll.u32 [#allocation11], 4
      %s170 = int_to_ptr.vmem [resolvable:$true] %s169
      %175 = dma.hbm_to_vmem [thread:$0]  %s168, 4096, %s170, [#allocation12], 128, 128, 8
    $region41: #{tpu_custom_call.1} parent=1 // pred_fallthru
      _
    // Predicated region
    $region42: #{tpu_custom_call.1} parent=1 // pred_check
      _
    $region43: #{tpu_custom_call.1} parent=1 // pred_check_branch
      %177 = sbr.rel (0) target = $region45
    $region44: #{tpu_custom_call.1} parent=1 // pred_region
      %179 = vsyncadd [#allocation12], 0
      %s181 = sshll.u32 %s21, 4
      %s182 = int_to_ptr.hbm [resolvable:$true] %s181
      %s183 = sshll.u32 [#allocation13], 4
      %s184 = int_to_ptr.vmem [resolvable:$true] %s183
      %186 = dma.hbm_to_vmem [thread:$0]  %s182, 32, %s184, [#allocation12]
    $region45: #{tpu_custom_call.1} parent=1 // pred_fallthru
      _
    // Predicated region
    $region46: #{tpu_custom_call.1} parent=1 // pred_check
      _
    $region47: #{tpu_custom_call.1} parent=1 // pred_check_branch
      %188 = sbr.rel (0) target = $region49
    $region48: #{tpu_custom_call.1} parent=1 // pred_region
      %190 = vsyncadd [#allocation15], 0
      %s191 = sshll.u32 %s23, 4
      %s192 = int_to_ptr.hbm [resolvable:$true] %s191
      %s193 = sshll.u32 [#allocation14], 4
      %s194 = int_to_ptr.vmem [resolvable:$true] %s193
      %199 = dma.hbm_to_vmem [thread:$0]  %s192, 4096, %s194, [#allocation15], 128, 128, 8
    $region49: #{tpu_custom_call.1} parent=1 // pred_fallthru
      _
    // Predicated region
    $region50: #{tpu_custom_call.1} parent=1 // pred_check
      _
    $region51: #{tpu_custom_call.1} parent=1 // pred_check_branch
      %201 = sbr.rel (0) target = $region53
    $region52: #{tpu_custom_call.1} parent=1 // pred_region
      %203 = vsyncadd [#allocation15], 0
      %s205 = sshll.u32 %s25, 4
      %s206 = int_to_ptr.hbm [resolvable:$true] %s205
      %s207 = sshll.u32 [#allocation16], 4
      %s208 = int_to_ptr.vmem [resolvable:$true] %s207
      %210 = dma.hbm_to_vmem [thread:$0]  %s206, 32, %s208, [#allocation15]
    $region53: #{tpu_custom_call.1} parent=1 // pred_fallthru
      _
    // Predicated region
    $region54: #{tpu_custom_call.1} parent=1 // pred_check
      _
    $region55: #{tpu_custom_call.1} parent=1 // pred_check_branch
      %212 = sbr.rel (0) target = $region57
    $region56: #{tpu_custom_call.1} parent=1 // pred_region
      _
    $region57: #{tpu_custom_call.1} parent=1 // pred_fallthru
      _
    // Predicated region
    $region58: #{tpu_custom_call.1} parent=1 // pred_check
      _
    $region59: #{tpu_custom_call.1} parent=1 // pred_check_branch
      %214 = sbr.rel (0) target = $region61
    $region60: #{tpu_custom_call.1} parent=1 // pred_region
      %216 = vsyncadd [#allocation18], 0
      %s218 = sshll.u32 %s29, 4
      %s219 = int_to_ptr.hbm [resolvable:$true] %s218
      %s220 = sshll.u32 [#allocation17], 4
      %s221 = int_to_ptr.vmem [resolvable:$true] %s220
      %223 = dma.hbm_to_vmem [thread:$0]  %s219, 32, %s221, [#allocation18]
    $region61: #{tpu_custom_call.1} parent=1 // pred_fallthru
      _
    // Predicated region
    $region62: #{tpu_custom_call.1} parent=1 // pred_check
      _
    $region63: #{tpu_custom_call.1} parent=1 // pred_check_branch
      %225 = sbr.rel (0) target = $region65
    $region64: #{tpu_custom_call.1} parent=1 // pred_region
      %227 = vsyncadd [#allocation18], 0
      %s228 = sshll.u32 %s31, 4
      %s229 = int_to_ptr.hbm [resolvable:$true] %s228
      %s230 = sshll.u32 [#allocation19], 4
      %s231 = int_to_ptr.vmem [resolvable:$true] %s230
      %236 = dma.hbm_to_vmem [thread:$0]  %s229, 4096, %s231, [#allocation18], 128, 128, 8
    $region65: #{tpu_custom_call.1} parent=1 // pred_fallthru
      _
    // Predicated region
    $region66: #{tpu_custom_call.1} parent=1 // pred_check
      _
    $region67: #{tpu_custom_call.1} parent=1 // pred_check_branch
      %238 = sbr.rel (0) target = $region69
    $region68: #{tpu_custom_call.1} parent=1 // pred_region
      %240 = vsyncadd [#allocation21], 0
      %s242 = sshll.u32 %s33, 4
      %s243 = int_to_ptr.hbm [resolvable:$true] %s242
      %s244 = sshll.u32 [#allocation20], 4
      %s245 = int_to_ptr.vmem [resolvable:$true] %s244
      %247 = dma.hbm_to_vmem [thread:$0]  %s243, 32, %s245, [#allocation21]
    $region69: #{tpu_custom_call.1} parent=1 // pred_fallthru
      _
    // Predicated region
    $region70: #{tpu_custom_call.1} parent=1 // pred_check
      _
    $region71: #{tpu_custom_call.1} parent=1 // pred_check_branch
      %249 = sbr.rel (0) target = $region73
    $region72: #{tpu_custom_call.1} parent=1 // pred_region
      %251 = vsyncadd [#allocation21], 0
      %s252 = sshll.u32 %s35, 4
      %s253 = int_to_ptr.hbm [resolvable:$true] %s252
      %s254 = sshll.u32 [#allocation22], 4
      %s255 = int_to_ptr.vmem [resolvable:$true] %s254
      %260 = dma.hbm_to_vmem [thread:$0]  %s253, 4096, %s255, [#allocation21], 128, 128, 8
    $region73: #{tpu_custom_call.1} parent=1 // pred_fallthru
      _
    // Predicated region
    $region74: #{tpu_custom_call.1} parent=1 // pred_check
      _
    $region75: #{tpu_custom_call.1} parent=1 // pred_check_branch
      %262 = sbr.rel (0) target = $region77
    $region76: #{tpu_custom_call.1} parent=1 // pred_region
      %264 = vsyncadd [#allocation24], 0
      %s266 = sshll.u32 %s37, 4
      %s267 = int_to_ptr.hbm [resolvable:$true] %s266
      %s268 = sshll.u32 [#allocation23], 4
      %s269 = int_to_ptr.vmem [resolvable:$true] %s268
      %271 = dma.hbm_to_vmem [thread:$0]  %s267, 32, %s269, [#allocation24]
    $region77: #{tpu_custom_call.1} parent=1 // pred_fallthru
      _
    // Predicated region
    $region78: #{tpu_custom_call.1} parent=1 // pred_check
      _
    $region79: #{tpu_custom_call.1} parent=1 // pred_check_branch
      %273 = sbr.rel (0) target = $region81
    $region80: #{tpu_custom_call.1} parent=1 // pred_region
      %275 = vsyncadd [#allocation24], 0
      %s276 = sshll.u32 %s39, 4
      %s277 = int_to_ptr.hbm [resolvable:$true] %s276
      %s278 = sshll.u32 [#allocation25], 4
      %s279 = int_to_ptr.vmem [resolvable:$true] %s278
      %284 = dma.hbm_to_vmem [thread:$0]  %s277, 4096, %s279, [#allocation24], 128, 128, 8
    $region81: #{tpu_custom_call.1} parent=1 // pred_fallthru
      _
    // Predicated region
    $region82: #{tpu_custom_call.1} parent=1 // pred_check
      _
    $region83: #{tpu_custom_call.1} parent=1 // pred_check_branch
      %286 = sbr.rel (0) target = $region85
    $region84: #{tpu_custom_call.1} parent=1 // pred_region
      %288 = vsyncadd [#allocation27], 0
      %s290 = sshll.u32 %s41, 4
      %s291 = int_to_ptr.hbm [resolvable:$true] %s290
      %s292 = sshll.u32 [#allocation26], 4
      %s293 = int_to_ptr.vmem [resolvable:$true] %s292
      %295 = dma.hbm_to_vmem [thread:$0]  %s291, 32, %s293, [#allocation27]
    $region85: #{tpu_custom_call.1} parent=1 // pred_fallthru
      _
    // Predicated region
    $region86: #{tpu_custom_call.1} parent=1 // pred_check
      _
    $region87: #{tpu_custom_call.1} parent=1 // pred_check_branch
      %297 = sbr.rel (0) target = $region89
    $region88: #{tpu_custom_call.1} parent=1 // pred_region
      %299 = vsyncadd [#allocation27], 0
      %s300 = sshll.u32 %s43, 4
      %s301 = int_to_ptr.hbm [resolvable:$true] %s300
      %s302 = sshll.u32 [#allocation28], 4
      %s303 = int_to_ptr.vmem [resolvable:$true] %s302
      %308 = dma.hbm_to_vmem [thread:$0]  %s301, 384, %s303, [#allocation27], 128, 128, 8
    $region89: #{tpu_custom_call.1} parent=1 // pred_fallthru
      _
    // Predicated region
    $region90: #{tpu_custom_call.1} parent=1 // pred_check
      _
    $region91: #{tpu_custom_call.1} parent=1 // pred_check_branch
      %310 = sbr.rel (0) target = $region93
    $region92: #{tpu_custom_call.1} parent=1 // pred_region
      %312 = vsyncadd [#allocation30], 0
      %s314 = sshll.u32 %s45, 4
      %s315 = int_to_ptr.hbm [resolvable:$true] %s314
      %s316 = sshll.u32 [#allocation29], 4
      %s317 = int_to_ptr.vmem [resolvable:$true] %s316
      %319 = dma.hbm_to_vmem [thread:$0]  %s315, 32, %s317, [#allocation30]
    $region93: #{tpu_custom_call.1} parent=1 // pred_fallthru
      _
    // Predicated region
    $region94: #{tpu_custom_call.1} parent=1 // pred_check
      _
    $region95: #{tpu_custom_call.1} parent=1 // pred_check_branch
      %321 = sbr.rel (0) target = $region97
    $region96: #{tpu_custom_call.1} parent=1 // pred_region
      %323 = vsyncadd [#allocation30], 0
      %s324 = sshll.u32 %s47, 4
      %s325 = int_to_ptr.hbm [resolvable:$true] %s324
      %s326 = sshll.u32 [#allocation31], 4
      %s327 = int_to_ptr.vmem [resolvable:$true] %s326
      %332 = dma.hbm_to_vmem [thread:$0]  %s325, 4096, %s327, [#allocation30], 128, 128, 8
    $region97: #{tpu_custom_call.1} parent=1 // pred_fallthru
      _
    // Predicated region
    $region98: #{tpu_custom_call.1} parent=1 // pred_check
      _
    $region99: #{tpu_custom_call.1} parent=1 // pred_check_branch
      %334 = sbr.rel (0) target = $region101
    $region100: #{tpu_custom_call.1} parent=1 // pred_region
      %336 = vsyncadd [#allocation33], 0
      %s338 = sshll.u32 %s49, 4
      %s339 = int_to_ptr.hbm [resolvable:$true] %s338
      %s340 = sshll.u32 [#allocation32], 4
      %s341 = int_to_ptr.vmem [resolvable:$true] %s340
      %343 = dma.hbm_to_vmem [thread:$0]  %s339, 32, %s341, [#allocation33]
    $region101: #{tpu_custom_call.1} parent=1 // pred_fallthru
      _
    // Predicated region
    $region102: #{tpu_custom_call.1} parent=1 // pred_check
      _
    $region103: #{tpu_custom_call.1} parent=1 // pred_check_branch
      %345 = sbr.rel (0) target = $region105
    $region104: #{tpu_custom_call.1} parent=1 // pred_region
      %347 = vsyncadd [#allocation33], 0
      %s348 = sshll.u32 %s51, 4
      %s349 = int_to_ptr.hbm [resolvable:$true] %s348
      %s350 = sshll.u32 [#allocation34], 4
      %s351 = int_to_ptr.vmem [resolvable:$true] %s350
      %356 = dma.hbm_to_vmem [thread:$0]  %s349, 4096, %s351, [#allocation33], 128, 128, 8
    $region105: #{tpu_custom_call.1} parent=1 // pred_fallthru
      _
    // Predicated region
    $region106: #{tpu_custom_call.1} parent=1 // pred_check
      _
    $region107: #{tpu_custom_call.1} parent=1 // pred_check_branch
      %358 = sbr.rel (0) target = $region109
    $region108: #{tpu_custom_call.1} parent=1 // pred_region
      %360 = vsyncadd [#allocation36], 0
      %s361 = sshll.u32 %s53, 4
      %s362 = int_to_ptr.hbm [resolvable:$true] %s361
      %s363 = sshll.u32 [#allocation35], 4
      %s364 = int_to_ptr.vmem [resolvable:$true] %s363
      %369 = dma.hbm_to_vmem [thread:$0]  %s362, 4096, %s364, [#allocation36], 128, 128, 8
    $region109: #{tpu_custom_call.1} parent=1 // pred_fallthru
      _
    // Predicated region
    $region110: #{tpu_custom_call.1} parent=1 // pred_check
      _
    $region111: #{tpu_custom_call.1} parent=1 // pred_check_branch
      %371 = sbr.rel (0) target = $region113
    $region112: #{tpu_custom_call.1} parent=1 // pred_region
      %373 = vsyncadd [#allocation36], 0
      %s375 = sshll.u32 %s55, 4
      %s376 = int_to_ptr.hbm [resolvable:$true] %s375
      %s377 = sshll.u32 [#allocation37], 4
      %s378 = int_to_ptr.vmem [resolvable:$true] %s377
      %380 = dma.hbm_to_vmem [thread:$0]  %s376, 32, %s378, [#allocation36]
    $region113: #{tpu_custom_call.1} parent=1 // pred_fallthru
      _
    // Predicated region
    $region114: #{tpu_custom_call.1} parent=1 // pred_check
      _
    $region115: #{tpu_custom_call.1} parent=1 // pred_check_branch
      %382 = sbr.rel (0) target = $region117
    $region116: #{tpu_custom_call.1} parent=1 // pred_region
      %384 = vsyncadd [#allocation39], 0
      %s385 = sshll.u32 %s57, 4
      %s386 = int_to_ptr.hbm [resolvable:$true] %s385
      %s387 = sshll.u32 [#allocation38], 4
      %s388 = int_to_ptr.vmem [resolvable:$true] %s387
      %393 = dma.hbm_to_vmem [thread:$0]  %s386, 4096, %s388, [#allocation39], 128, 128, 8
    $region117: #{tpu_custom_call.1} parent=1 // pred_fallthru
      _
    // Predicated region
    $region118: #{tpu_custom_call.1} parent=1 // pred_check
      _
    $region119: #{tpu_custom_call.1} parent=1 // pred_check_branch
      %395 = sbr.rel (0) target = $region121
    $region120: #{tpu_custom_call.1} parent=1 // pred_region
      %397 = vsyncadd [#allocation39], 0
      %s399 = sshll.u32 %s59, 4
      %s400 = int_to_ptr.hbm [resolvable:$true] %s399
      %s401 = sshll.u32 [#allocation40], 4
      %s402 = int_to_ptr.vmem [resolvable:$true] %s401
      %404 = dma.hbm_to_vmem [thread:$0]  %s400, 32, %s402, [#allocation39]
    $region121: #{tpu_custom_call.1} parent=1 // pred_fallthru
      _
    // Predicated region
    $region122: #{tpu_custom_call.1} parent=1 // pred_check
      _
    $region123: #{tpu_custom_call.1} parent=1 // pred_check_branch
      %406 = sbr.rel (0) target = $region125
    $region124: #{tpu_custom_call.1} parent=1 // pred_region
      _
    $region125: #{tpu_custom_call.1} parent=1 // pred_fallthru
      _
    // Predicated region
    $region126: #{tpu_custom_call.1} parent=1 // pred_check
      _
    $region127: #{tpu_custom_call.1} parent=1 // pred_check_branch
      %408 = sbr.rel (0) target = $region129
    $region128: #{tpu_custom_call.1} parent=1 // pred_region
      %410 = vsyncadd [#allocation42], 0
      %s412 = sshll.u32 %s63, 4
      %s413 = int_to_ptr.hbm [resolvable:$true] %s412
      %s414 = sshll.u32 [#allocation41], 4
      %s415 = int_to_ptr.vmem [resolvable:$true] %s414
      %417 = dma.hbm_to_vmem [thread:$0]  %s413, 16, %s415, [#allocation42]
    $region129: #{tpu_custom_call.1} parent=1 // pred_fallthru
      _
    // Predicated region
    $region130: #{tpu_custom_call.1} parent=1 // pred_check
      _
    $region131: #{tpu_custom_call.1} parent=1 // pred_check_branch
      %419 = sbr.rel (0) target = $region133
    $region132: #{tpu_custom_call.1} parent=1 // pred_region
      _
    $region133: #{tpu_custom_call.1} parent=1 // pred_fallthru
      _
    // Predicated region
    $region134: #{tpu_custom_call.1} parent=1 // pred_check
      _
    $region135: #{tpu_custom_call.1} parent=1 // pred_check_branch
      %421 = sbr.rel (0) target = $region137
    $region136: #{tpu_custom_call.1} parent=1 // pred_region
      %423 = vsyncadd [#allocation42], 0
      %s425 = sshll.u32 %s67, 4
      %s426 = int_to_ptr.hbm [resolvable:$true] %s425
      %s427 = sshll.u32 [#allocation43], 4
      %s428 = int_to_ptr.vmem [resolvable:$true] %s427
      %430 = dma.hbm_to_vmem [thread:$0]  %s426, 32, %s428, [#allocation42]
    $region137: #{tpu_custom_call.1} parent=1 // pred_fallthru
      _
    // Predicated region
    $region138: #{tpu_custom_call.1} parent=1 // pred_check
      _
    $region139: #{tpu_custom_call.1} parent=1 // pred_check_branch
      %432 = sbr.rel (0) target = $region141
    $region140: #{tpu_custom_call.1} parent=1 // pred_region
      _
    $region141: #{tpu_custom_call.1} parent=1 // pred_fallthru
      _
    // Predicated region
    $region142: #{tpu_custom_call.1} parent=1 // pred_check
      _
    $region143: #{tpu_custom_call.1} parent=1 // pred_check_branch
      %434 = sbr.rel (0) target = $region145
    $region144: #{tpu_custom_call.1} parent=1 // pred_region
      %436 = vsyncadd [#allocation45], 0
      %s438 = sshll.u32 %s71, 4
      %s439 = int_to_ptr.hbm [resolvable:$true] %s438
      %s440 = sshll.u32 [#allocation44], 4
      %s441 = int_to_ptr.vmem [resolvable:$true] %s440
      %443 = dma.hbm_to_vmem [thread:$0]  %s439, 32, %s441, [#allocation45]
    $region145: #{tpu_custom_call.1} parent=1 // pred_fallthru
      _
    // Predicated region
    $region146: #{tpu_custom_call.1} parent=1 // pred_check
      _
    $region147: #{tpu_custom_call.1} parent=1 // pred_check_branch
      %445 = sbr.rel (0) target = $region149
    $region148: #{tpu_custom_call.1} parent=1 // pred_region
      %447 = dma.done [#allocation3], 4096
    $region149: #{tpu_custom_call.1} parent=1 // pred_fallthru
      _
    // Predicated region
    $region150: #{tpu_custom_call.1} parent=1 // pred_check
      _
    $region151: #{tpu_custom_call.1} parent=1 // pred_check_branch
      %449 = sbr.rel (0) target = $region153
    $region152: #{tpu_custom_call.1} parent=1 // pred_region
      %451 = dma.done [#allocation6], 4096
    $region153: #{tpu_custom_call.1} parent=1 // pred_fallthru
      _
    // Predicated region
    $region154: #{tpu_custom_call.1} parent=1 // pred_check
      _
    $region155: #{tpu_custom_call.1} parent=1 // pred_check_branch
      %453 = sbr.rel (0) target = $region157
    $region156: #{tpu_custom_call.1} parent=1 // pred_region
      %455 = dma.done [#allocation6], 32
    $region157: #{tpu_custom_call.1} parent=1 // pred_fallthru
      _
    // Predicated region
    $region158: #{tpu_custom_call.1} parent=1 // pred_check
      _
    $region159: #{tpu_custom_call.1} parent=1 // pred_check_branch
      %457 = sbr.rel (0) target = $region161
    $region160: #{tpu_custom_call.1} parent=1 // pred_region
      %459 = dma.done [#allocation9], 4096
    $region161: #{tpu_custom_call.1} parent=1 // pred_fallthru
      _
    // Predicated region
    $region162: #{tpu_custom_call.1} parent=1 // pred_check
      _
    $region163: #{tpu_custom_call.1} parent=1 // pred_check_branch
      %461 = sbr.rel (0) target = $region165
    $region164: #{tpu_custom_call.1} parent=1 // pred_region
      %463 = dma.done [#allocation9], 32
    $region165: #{tpu_custom_call.1} parent=1 // pred_fallthru
      _
    // Predicated region
    $region166: #{tpu_custom_call.1} parent=1 // pred_check
      _
    $region167: #{tpu_custom_call.1} parent=1 // pred_check_branch
      %465 = sbr.rel (0) target = $region169
    $region168: #{tpu_custom_call.1} parent=1 // pred_region
      %467 = dma.done [#allocation12], 4096
    $region169: #{tpu_custom_call.1} parent=1 // pred_fallthru
      _
    // Predicated region
    $region170: #{tpu_custom_call.1} parent=1 // pred_check
      _
    $region171: #{tpu_custom_call.1} parent=1 // pred_check_branch
      %469 = sbr.rel (0) target = $region173
    $region172: #{tpu_custom_call.1} parent=1 // pred_region
      %471 = dma.done [#allocation12], 32
    $region173: #{tpu_custom_call.1} parent=1 // pred_fallthru
      _
    // Predicated region
    $region174: #{tpu_custom_call.1} parent=1 // pred_check
      _
    $region175: #{tpu_custom_call.1} parent=1 // pred_check_branch
      %473 = sbr.rel (0) target = $region177
    $region176: #{tpu_custom_call.1} parent=1 // pred_region
      %475 = dma.done [#allocation15], 4096
    $region177: #{tpu_custom_call.1} parent=1 // pred_fallthru
      _
    // Predicated region
    $region178: #{tpu_custom_call.1} parent=1 // pred_check
      _
    $region179: #{tpu_custom_call.1} parent=1 // pred_check_branch
      %477 = sbr.rel (0) target = $region181
    $region180: #{tpu_custom_call.1} parent=1 // pred_region
      %479 = dma.done [#allocation15], 32
    $region181: #{tpu_custom_call.1} parent=1 // pred_fallthru
      _
    // Predicated region
    $region182: #{tpu_custom_call.1} parent=1 // pred_check
      _
    $region183: #{tpu_custom_call.1} parent=1 // pred_check_branch
      %481 = sbr.rel (0) target = $region185
    $region184: #{tpu_custom_call.1} parent=1 // pred_region
      %483 = dma.done [#allocation18], 32
    $region185: #{tpu_custom_call.1} parent=1 // pred_fallthru
      _
    // Predicated region
    $region186: #{tpu_custom_call.1} parent=1 // pred_check
      _
    $region187: #{tpu_custom_call.1} parent=1 // pred_check_branch
      %485 = sbr.rel (0) target = $region189
    $region188: #{tpu_custom_call.1} parent=1 // pred_region
      %487 = dma.done [#allocation18], 4096
    $region189: #{tpu_custom_call.1} parent=1 // pred_fallthru
      _
    // Predicated region
    $region190: #{tpu_custom_call.1} parent=1 // pred_check
      _
    $region191: #{tpu_custom_call.1} parent=1 // pred_check_branch
      %489 = sbr.rel (0) target = $region193
    $region192: #{tpu_custom_call.1} parent=1 // pred_region
      %491 = dma.done [#allocation21], 32
    $region193: #{tpu_custom_call.1} parent=1 // pred_fallthru
      _
    // Predicated region
    $region194: #{tpu_custom_call.1} parent=1 // pred_check
      _
    $region195: #{tpu_custom_call.1} parent=1 // pred_check_branch
      %493 = sbr.rel (0) target = $region197
    $region196: #{tpu_custom_call.1} parent=1 // pred_region
      %495 = dma.done [#allocation21], 4096
    $region197: #{tpu_custom_call.1} parent=1 // pred_fallthru
      _
    // Predicated region
    $region198: #{tpu_custom_call.1} parent=1 // pred_check
      _
    $region199: #{tpu_custom_call.1} parent=1 // pred_check_branch
      %497 = sbr.rel (0) target = $region201
    $region200: #{tpu_custom_call.1} parent=1 // pred_region
      %499 = dma.done [#allocation24], 32
    $region201: #{tpu_custom_call.1} parent=1 // pred_fallthru
      _
    // Predicated region
    $region202: #{tpu_custom_call.1} parent=1 // pred_check
      _
    $region203: #{tpu_custom_call.1} parent=1 // pred_check_branch
      %501 = sbr.rel (0) target = $region205
    $region204: #{tpu_custom_call.1} parent=1 // pred_region
      %503 = dma.done [#allocation24], 4096
    $region205: #{tpu_custom_call.1} parent=1 // pred_fallthru
      _
    // Predicated region
    $region206: #{tpu_custom_call.1} parent=1 // pred_check
      _
    $region207: #{tpu_custom_call.1} parent=1 // pred_check_branch
      %505 = sbr.rel (0) target = $region209
    $region208: #{tpu_custom_call.1} parent=1 // pred_region
      %507 = dma.done [#allocation27], 32
    $region209: #{tpu_custom_call.1} parent=1 // pred_fallthru
      _
    // Predicated region
    $region210: #{tpu_custom_call.1} parent=1 // pred_check
      _
    $region211: #{tpu_custom_call.1} parent=1 // pred_check_branch
      %509 = sbr.rel (0) target = $region213
    $region212: #{tpu_custom_call.1} parent=1 // pred_region
      %511 = dma.done [#allocation27], 384
    $region213: #{tpu_custom_call.1} parent=1 // pred_fallthru
      _
    // Predicated region
    $region214: #{tpu_custom_call.1} parent=1 // pred_check
      _
    $region215: #{tpu_custom_call.1} parent=1 // pred_check_branch
      %513 = sbr.rel (0) target = $region217
    $region216: #{tpu_custom_call.1} parent=1 // pred_region
      %515 = dma.done [#allocation30], 32
    $region217: #{tpu_custom_call.1} parent=1 // pred_fallthru
      _
    // Predicated region
    $region218: #{tpu_custom_call.1} parent=1 // pred_check
      _
    $region219: #{tpu_custom_call.1} parent=1 // pred_check_branch
      %517 = sbr.rel (0) target = $region221
    $region220: #{tpu_custom_call.1} parent=1 // pred_region
      %519 = dma.done [#allocation30], 4096
    $region221: #{tpu_custom_call.1} parent=1 // pred_fallthru
      _
    // Predicated region
    $region222: #{tpu_custom_call.1} parent=1 // pred_check
      _
    $region223: #{tpu_custom_call.1} parent=1 // pred_check_branch
      %521 = sbr.rel (0) target = $region225
    $region224: #{tpu_custom_call.1} parent=1 // pred_region
      %523 = dma.done [#allocation33], 32
    $region225: #{tpu_custom_call.1} parent=1 // pred_fallthru
      _
    // Predicated region
    $region226: #{tpu_custom_call.1} parent=1 // pred_check
      _
    $region227: #{tpu_custom_call.1} parent=1 // pred_check_branch
      %525 = sbr.rel (0) target = $region229
    $region228: #{tpu_custom_call.1} parent=1 // pred_region
      %527 = dma.done [#allocation33], 4096
    $region229: #{tpu_custom_call.1} parent=1 // pred_fallthru
      _
    // Predicated region
    $region230: #{tpu_custom_call.1} parent=1 // pred_check
      _
    $region231: #{tpu_custom_call.1} parent=1 // pred_check_branch
      %529 = sbr.rel (0) target = $region233
    $region232: #{tpu_custom_call.1} parent=1 // pred_region
      %531 = dma.done [#allocation36], 4096
    $region233: #{tpu_custom_call.1} parent=1 // pred_fallthru
      _
    // Predicated region
    $region234: #{tpu_custom_call.1} parent=1 // pred_check
      _
    $region235: #{tpu_custom_call.1} parent=1 // pred_check_branch
      %533 = sbr.rel (0) target = $region237
    $region236: #{tpu_custom_call.1} parent=1 // pred_region
      %535 = dma.done [#allocation36], 32
    $region237: #{tpu_custom_call.1} parent=1 // pred_fallthru
      _
    // Predicated region
    $region238: #{tpu_custom_call.1} parent=1 // pred_check
      _
    $region239: #{tpu_custom_call.1} parent=1 // pred_check_branch
      %537 = sbr.rel (0) target = $region241
    $region240: #{tpu_custom_call.1} parent=1 // pred_region
      %539 = dma.done [#allocation39], 4096
    $region241: #{tpu_custom_call.1} parent=1 // pred_fallthru
      _
    // Predicated region
    $region242: #{tpu_custom_call.1} parent=1 // pred_check
      _
    $region243: #{tpu_custom_call.1} parent=1 // pred_check_branch
      %541 = sbr.rel (0) target = $region245
    $region244: #{tpu_custom_call.1} parent=1 // pred_region
      %543 = dma.done [#allocation39], 32
    $region245: #{tpu_custom_call.1} parent=1 // pred_fallthru
      _
    // Predicated region
    $region246: #{tpu_custom_call.1} parent=1 // pred_check
      _
    $region247: #{tpu_custom_call.1} parent=1 // pred_check_branch
      %545 = sbr.rel (0) target = $region249
    $region248: #{tpu_custom_call.1} parent=1 // pred_region
      %547 = dma.done [#allocation42], 16
    $region249: #{tpu_custom_call.1} parent=1 // pred_fallthru
      _
    // Predicated region
    $region250: #{tpu_custom_call.1} parent=1 // pred_check
      _
    $region251: #{tpu_custom_call.1} parent=1 // pred_check_branch
      %549 = sbr.rel (0) target = $region253
    $region252: #{tpu_custom_call.1} parent=1 // pred_region
      %551 = dma.done [#allocation42], 32
    $region253: #{tpu_custom_call.1} parent=1 // pred_fallthru
      _
    // Predicated region
    $region254: #{tpu_custom_call.1} parent=1 // pred_check
      _
    $region255: #{tpu_custom_call.1} parent=1 // pred_check_branch
      %553 = sbr.rel (0) target = $region257
    $region256: #{tpu_custom_call.1} parent=1 // pred_region
      %555 = dma.done [#allocation45], 32
    $region257: #{tpu_custom_call.1} parent=1 // pred_fallthru
      _
    %v557 = vld [vmem:[%s1] sm:$0xff]
    %v558 = vld [vmem:[%s1 + $0x8] sm:$0xff]
    %v559 = vld [vmem:[%s1 + $0x10] sm:$0xff]
    %v560 = vld [vmem:[%s1 + $0x18] sm:$0xff]
    %v561 = vld [vmem:[%s1 + $0x20] sm:$0xff]
    %v562 = vld [vmem:[%s1 + $0x28] sm:$0xff]
    %v563 = vld [vmem:[%s1 + $0x30] sm:$0xff]
    %v564 = vld [vmem:[%s1 + $0x38] sm:$0xff]
    %v565 = vld [vmem:[%s1 + $0x40] sm:$0xff]
    %v566 = vld [vmem:[%s1 + $0x48] sm:$0xff]
    %v567 = vld [vmem:[%s1 + $0x50] sm:$0xff]
    %v568 = vld [vmem:[%s1 + $0x58] sm:$0xff]
    %v569 = vld [vmem:[%s1 + $0x60] sm:$0xff]
    %v570 = vld [vmem:[%s1 + $0x68] sm:$0xff]
    %v571 = vld [vmem:[%s1 + $0x70] sm:$0xff]
    %v572 = vld [vmem:[%s1 + $0x78] sm:$0xff]
    %v573 = vpack.c.bf16 %v557, %v557
    %v574 = vpack.c.bf16 %v558, %v558
    %v575 = vpack.c.bf16 %v559, %v559
    %v576 = vpack.c.bf16 %v560, %v560
    %v577 = vpack.c.bf16 %v561, %v561
    %v578 = vpack.c.bf16 %v562, %v562
    %v579 = vpack.c.bf16 %v563, %v563
    %v580 = vpack.c.bf16 %v564, %v564
    %v581 = vpack.c.bf16 %v565, %v565
    %v582 = vpack.c.bf16 %v566, %v566
    %v583 = vpack.c.bf16 %v567, %v567
    %v584 = vpack.c.bf16 %v568, %v568
    %v585 = vpack.c.bf16 %v569, %v569
    %v586 = vpack.c.bf16 %v570, %v570
    %v587 = vpack.c.bf16 %v571, %v571
    %v588 = vpack.c.bf16 %v572, %v572
    %v589 = vld [vmem:[%s3] sm:$0xff]
    %v590 = vld [vmem:[%s3 + $0x8] sm:$0xff]
    %v591 = vld [vmem:[%s3 + $0x10] sm:$0x77]
    %v592 = vld [vmem:[%s5] sm:$0x3]
    %v594 = vperm.slane %v592, 0
    %v595 = vperm.slane %v592, 1
    %v614 = vunpack.c.l.b16 %v573
    %v615 = vunpack.c.l.b16 %v574
    %v616 = vunpack.c.l.b16 %v575
    %v617 = vunpack.c.l.b16 %v576
    %v618 = vunpack.c.l.b16 %v577
    %v619 = vunpack.c.l.b16 %v578
    %v620 = vunpack.c.l.b16 %v579
    %v621 = vunpack.c.l.b16 %v580
    %v622 = vunpack.c.l.b16 %v581
    %v623 = vunpack.c.l.b16 %v582
    %v624 = vunpack.c.l.b16 %v583
    %v625 = vunpack.c.l.b16 %v584
    %v626 = vunpack.c.l.b16 %v585
    %v627 = vunpack.c.l.b16 %v586
    %v628 = vunpack.c.l.b16 %v587
    %v629 = vunpack.c.l.b16 %v588
    %v630 = vpack.c.b16 %v615, %v614
    %v631 = vpack.c.b16 %v617, %v616
    %v632 = vpack.c.b16 %v619, %v618
    %v633 = vpack.c.b16 %v621, %v620
    %v634 = vpack.c.b16 %v623, %v622
    %v635 = vpack.c.b16 %v625, %v624
    %v636 = vpack.c.b16 %v627, %v626
    %v637 = vpack.c.b16 %v629, %v628
    %v641 = vunpack.c.l.b16 %v589
    %v642 = vunpack.c.h.b16 %v589
    %v643 = vunpack.c.l.b16 %v590
    %v644 = vunpack.c.h.b16 %v590
    %v645 = vunpack.c.l.b16 %v591
    %v646 = vunpack.c.h.b16 %v591
    %v647 = vpack.c.b16 %v643, %v641
    %v648 = vpack.c.b16 %v644, %v642
    %v649 = vpack.c.b16 %v645, %v645
    %v650 = vpack.c.b16 %v646, %v646
    %vm653 = vcmask 171008
    %v655 = vsel %vm653, %v630, 0
    %v658 = vsel %vm653, %v631, 0
    %v661 = vsel %vm653, %v632, 0
    %v664 = vsel %vm653, %v633, 0
    %v667 = vsel %vm653, %v634, 0
    %v670 = vsel %vm653, %v635, 0
    %v673 = vsel %vm653, %v636, 0
    %v676 = vsel %vm653, %v637, 0
    %vm678 = vcmask 1041408
    %vm679 = vcmask 1042432
    %v680 = vsel %vm678, 4294967295, 65535
    %v681 = vsel %vm679, %v680, 0
    %v683 = vand.u32 %v649, %v681
    %v686 = vand.u32 %v650, %v681
    %688 = vmatpush.bf16.msra.mxu0 0
    %689 = vmatpush.bf16.msra.mxu0 0
    %690 = vmatpush.bf16.msra.mxu0 0
    %691 = vmatpush.bf16.msra.mxu0 0
    %692 = vmatpush.bf16.msra.mxu0 0
    %693 = vmatpush.bf16.msra.mxu0 0
    %694 = vmatpush.bf16.msra.mxu0 %v683
    %695 = vmatpush.bf16.msra.mxu0 %v647
    %696 = vmatmul.bf16.gmra.mxu0 %v655
    %v697 = vpop.f32.mrf.mxu0
    %v698 = vadd.f32 %v594, %v697
    %v699 = vpop.f32.mrf.mxu0
    %v700 = vadd.f32 %v594, %v699
    %701 = vmatmul.bf16.gmra.mxu0 %v658
    %v702 = vpop.f32.mrf.mxu0
    %v703 = vadd.f32 %v594, %v702
    %v704 = vpop.f32.mrf.mxu0
    %v705 = vadd.f32 %v594, %v704
    %706 = vmatmul.bf16.gmra.mxu0 %v661
    %v707 = vpop.f32.mrf.mxu0
    %v708 = vadd.f32 %v594, %v707
    %v709 = vpop.f32.mrf.mxu0
    %v710 = vadd.f32 %v594, %v709
    %711 = vmatmul.bf16.gmra.mxu0 %v664
    %v712 = vpop.f32.mrf.mxu0
    %v713 = vadd.f32 %v594, %v712
    %v714 = vpop.f32.mrf.mxu0
    %v715 = vadd.f32 %v594, %v714
    %716 = vmatmul.bf16.gmra.mxu0 %v667
    %v717 = vpop.f32.mrf.mxu0
    %v718 = vadd.f32 %v594, %v717
    %v719 = vpop.f32.mrf.mxu0
    %v720 = vadd.f32 %v594, %v719
    %721 = vmatmul.bf16.gmra.mxu0 %v670
    %v722 = vpop.f32.mrf.mxu0
    %v723 = vadd.f32 %v594, %v722
    %v724 = vpop.f32.mrf.mxu0
    %v725 = vadd.f32 %v594, %v724
    %726 = vmatmul.bf16.gmra.mxu0 %v673
    %v727 = vpop.f32.mrf.mxu0
    %v728 = vadd.f32 %v594, %v727
    %v729 = vpop.f32.mrf.mxu0
    %v730 = vadd.f32 %v594, %v729
    %731 = vmatmul.bf16.gmra.mxu0 %v676
    %v732 = vpop.f32.mrf.mxu0
    %v733 = vadd.f32 %v594, %v732
    %v734 = vpop.f32.mrf.mxu0
    %v735 = vadd.f32 %v594, %v734
    %736 = vdwg.mxu0
    %737 = vmatpush.bf16.msra.mxu0 0
    %738 = vmatpush.bf16.msra.mxu0 0
    %739 = vmatpush.bf16.msra.mxu0 0
    %740 = vmatpush.bf16.msra.mxu0 0
    %741 = vmatpush.bf16.msra.mxu0 0
    %742 = vmatpush.bf16.msra.mxu0 0
    %743 = vmatpush.bf16.msra.mxu0 %v686
    %744 = vmatpush.bf16.msra.mxu0 %v648
    %745 = vmatmul.bf16.gmra.mxu0 %v655
    %v746 = vpop.f32.mrf.mxu0
    %v747 = vadd.f32 %v595, %v746
    %v748 = vpop.f32.mrf.mxu0
    %v749 = vadd.f32 %v595, %v748
    %750 = vmatmul.bf16.gmra.mxu0 %v658
    %v751 = vpop.f32.mrf.mxu0
    %v752 = vadd.f32 %v595, %v751
    %v753 = vpop.f32.mrf.mxu0
    %v754 = vadd.f32 %v595, %v753
    %755 = vmatmul.bf16.gmra.mxu0 %v661
    %v756 = vpop.f32.mrf.mxu0
    %v757 = vadd.f32 %v595, %v756
    %v758 = vpop.f32.mrf.mxu0
    %v759 = vadd.f32 %v595, %v758
    %760 = vmatmul.bf16.gmra.mxu0 %v664
    %v761 = vpop.f32.mrf.mxu0
    %v762 = vadd.f32 %v595, %v761
    %v763 = vpop.f32.mrf.mxu0
    %v764 = vadd.f32 %v595, %v763
    %765 = vmatmul.bf16.gmra.mxu0 %v667
    %v766 = vpop.f32.mrf.mxu0
    %v767 = vadd.f32 %v595, %v766
    %v768 = vpop.f32.mrf.mxu0
    %v769 = vadd.f32 %v595, %v768
    %770 = vmatmul.bf16.gmra.mxu0 %v670
    %v771 = vpop.f32.mrf.mxu0
    %v772 = vadd.f32 %v595, %v771
    %v773 = vpop.f32.mrf.mxu0
    %v774 = vadd.f32 %v595, %v773
    %775 = vmatmul.bf16.gmra.mxu0 %v673
    %v776 = vpop.f32.mrf.mxu0
    %v777 = vadd.f32 %v595, %v776
    %v778 = vpop.f32.mrf.mxu0
    %v779 = vadd.f32 %v595, %v778
    %780 = vmatmul.bf16.gmra.mxu0 %v676
    %v781 = vpop.f32.mrf.mxu0
    %v782 = vadd.f32 %v595, %v781
    %v783 = vpop.f32.mrf.mxu0
    %v784 = vadd.f32 %v595, %v783
    %785 = vdwg.mxu0
    %v786 = vtanh.pop %v698
    %v787 = vtanh.pop %v747
    %v788 = vtanh.pop %v700
    %v789 = vtanh.pop %v749
    %v790 = vtanh.pop %v703
    %v791 = vtanh.pop %v752
    %v792 = vtanh.pop %v705
    %v793 = vtanh.pop %v754
    %v794 = vtanh.pop %v708
    %v795 = vtanh.pop %v757
    %v796 = vtanh.pop %v710
    %v797 = vtanh.pop %v759
    %v798 = vtanh.pop %v713
    %v799 = vtanh.pop %v762
    %v800 = vtanh.pop %v715
    %v801 = vtanh.pop %v764
    %v802 = vtanh.pop %v718
    %v803 = vtanh.pop %v767
    %v804 = vtanh.pop %v720
    %v805 = vtanh.pop %v769
    %v806 = vtanh.pop %v723
    %v807 = vtanh.pop %v772
    %v808 = vtanh.pop %v725
    %v809 = vtanh.pop %v774
    %v810 = vtanh.pop %v728
    %v811 = vtanh.pop %v777
    %v812 = vtanh.pop %v730
    %v813 = vtanh.pop %v779
    %v814 = vtanh.pop %v733
    %v815 = vtanh.pop %v782
    %v816 = vtanh.pop %v735
    %v817 = vtanh.pop %v784
    %v818 = vpack.c.bf16 %v788, %v786
    %v819 = vpack.c.bf16 %v789, %v787
    %v820 = vpack.c.bf16 %v792, %v790
    %v821 = vpack.c.bf16 %v793, %v791
    %v822 = vpack.c.bf16 %v796, %v794
    %v823 = vpack.c.bf16 %v797, %v795
    %v824 = vpack.c.bf16 %v800, %v798
    %v825 = vpack.c.bf16 %v801, %v799
    %v826 = vpack.c.bf16 %v804, %v802
    %v827 = vpack.c.bf16 %v805, %v803
    %v828 = vpack.c.bf16 %v808, %v806
    %v829 = vpack.c.bf16 %v809, %v807
    %v830 = vpack.c.bf16 %v812, %v810
    %v831 = vpack.c.bf16 %v813, %v811
    %v832 = vpack.c.bf16 %v816, %v814
    %v833 = vpack.c.bf16 %v817, %v815
    %v834 = vld [vmem:[#allocation2] sm:$0xff]
    %v835 = vld [vmem:[#allocation2 + $0x8] sm:$0xff]
    %v836 = vld [vmem:[#allocation2 + $0x10] sm:$0xff]
    %v837 = vld [vmem:[#allocation2 + $0x18] sm:$0xff]
    %v838 = vld [vmem:[#allocation2 + $0x20] sm:$0xff]
    %v839 = vld [vmem:[#allocation2 + $0x28] sm:$0xff]
    %v840 = vld [vmem:[#allocation2 + $0x30] sm:$0xff]
    %v841 = vld [vmem:[#allocation2 + $0x38] sm:$0xff]
    %v842 = vld [vmem:[#allocation2 + $0x40] sm:$0xff]
    %v843 = vld [vmem:[#allocation2 + $0x48] sm:$0xff]
    %v844 = vld [vmem:[#allocation2 + $0x50] sm:$0xff]
    %v845 = vld [vmem:[#allocation2 + $0x58] sm:$0xff]
    %v846 = vld [vmem:[#allocation2 + $0x60] sm:$0xff]
    %v847 = vld [vmem:[#allocation2 + $0x68] sm:$0xff]
    %v848 = vld [vmem:[#allocation2 + $0x70] sm:$0xff]
    %v849 = vld [vmem:[#allocation2 + $0x78] sm:$0xff]
    %v850 = vld [vmem:[#allocation2 + $0x80] sm:$0xff]
    %v851 = vld [vmem:[#allocation2 + $0x88] sm:$0xff]
    %v852 = vld [vmem:[#allocation2 + $0x90] sm:$0xff]
    %v853 = vld [vmem:[#allocation2 + $0x98] sm:$0xff]
    %v854 = vld [vmem:[#allocation2 + $0xa0] sm:$0xff]
    %v855 = vld [vmem:[#allocation2 + $0xa8] sm:$0xff]
    %v856 = vld [vmem:[#allocation2 + $0xb0] sm:$0xff]
    %v857 = vld [vmem:[#allocation2 + $0xb8] sm:$0xff]
    %v858 = vld [vmem:[#allocation2 + $0xc0] sm:$0xff]
    %v859 = vld [vmem:[#allocation2 + $0xc8] sm:$0xff]
    %v860 = vld [vmem:[#allocation2 + $0xd0] sm:$0xff]
    %v861 = vld [vmem:[#allocation2 + $0xd8] sm:$0xff]
    %v862 = vld [vmem:[#allocation2 + $0xe0] sm:$0xff]
    %v863 = vld [vmem:[#allocation2 + $0xe8] sm:$0xff]
    %v864 = vld [vmem:[#allocation2 + $0xf0] sm:$0xff]
    %v865 = vld [vmem:[#allocation2 + $0xf8] sm:$0xff]
    %v866 = vld [vmem:[%s9] sm:$0x3]
    %v868 = vperm.slane %v866, 0
    %v869 = vperm.slane %v866, 1
    %v904 = vunpack.c.l.b16 %v834
    %v905 = vunpack.c.h.b16 %v834
    %v906 = vunpack.c.l.b16 %v835
    %v907 = vunpack.c.h.b16 %v835
    %v908 = vunpack.c.l.b16 %v836
    %v909 = vunpack.c.h.b16 %v836
    %v910 = vunpack.c.l.b16 %v837
    %v911 = vunpack.c.h.b16 %v837
    %v912 = vunpack.c.l.b16 %v838
    %v913 = vunpack.c.h.b16 %v838
    %v914 = vunpack.c.l.b16 %v839
    %v915 = vunpack.c.h.b16 %v839
    %v916 = vunpack.c.l.b16 %v840
    %v917 = vunpack.c.h.b16 %v840
    %v918 = vunpack.c.l.b16 %v841
    %v919 = vunpack.c.h.b16 %v841
    %v920 = vunpack.c.l.b16 %v842
    %v921 = vunpack.c.h.b16 %v842
    %v922 = vunpack.c.l.b16 %v843
    %v923 = vunpack.c.h.b16 %v843
    %v924 = vunpack.c.l.b16 %v844
    %v925 = vunpack.c.h.b16 %v844
    %v926 = vunpack.c.l.b16 %v845
    %v927 = vunpack.c.h.b16 %v845
    %v928 = vunpack.c.l.b16 %v846
    %v929 = vunpack.c.h.b16 %v846
    %v930 = vunpack.c.l.b16 %v847
    %v931 = vunpack.c.h.b16 %v847
    %v932 = vunpack.c.l.b16 %v848
    %v933 = vunpack.c.h.b16 %v848
    %v934 = vunpack.c.l.b16 %v849
    %v935 = vunpack.c.h.b16 %v849
    %v936 = vunpack.c.l.b16 %v850
    %v937 = vunpack.c.h.b16 %v850
    %v938 = vunpack.c.l.b16 %v851
    %v939 = vunpack.c.h.b16 %v851
    %v940 = vunpack.c.l.b16 %v852
    %v941 = vunpack.c.h.b16 %v852
    %v942 = vunpack.c.l.b16 %v853
    %v943 = vunpack.c.h.b16 %v853
    %v944 = vunpack.c.l.b16 %v854
    %v945 = vunpack.c.h.b16 %v854
    %v946 = vunpack.c.l.b16 %v855
    %v947 = vunpack.c.h.b16 %v855
    %v948 = vunpack.c.l.b16 %v856
    %v949 = vunpack.c.h.b16 %v856
    %v950 = vunpack.c.l.b16 %v857
    %v951 = vunpack.c.h.b16 %v857
    %v952 = vunpack.c.l.b16 %v858
    %v953 = vunpack.c.h.b16 %v858
    %v954 = vunpack.c.l.b16 %v859
    %v955 = vunpack.c.h.b16 %v859
    %v956 = vunpack.c.l.b16 %v860
    %v957 = vunpack.c.h.b16 %v860
    %v958 = vunpack.c.l.b16 %v861
    %v959 = vunpack.c.h.b16 %v861
    %v960 = vunpack.c.l.b16 %v862
    %v961 = vunpack.c.h.b16 %v862
    %v962 = vunpack.c.l.b16 %v863
    %v963 = vunpack.c.h.b16 %v863
    %v964 = vunpack.c.l.b16 %v864
    %v965 = vunpack.c.h.b16 %v864
    %v966 = vunpack.c.l.b16 %v865
    %v967 = vunpack.c.h.b16 %v865
    %v968 = vpack.c.b16 %v906, %v904
    %v969 = vpack.c.b16 %v907, %v905
    %v970 = vpack.c.b16 %v910, %v908
    %v971 = vpack.c.b16 %v911, %v909
    %v972 = vpack.c.b16 %v914, %v912
    %v973 = vpack.c.b16 %v915, %v913
    %v974 = vpack.c.b16 %v918, %v916
    %v975 = vpack.c.b16 %v919, %v917
    %v976 = vpack.c.b16 %v922, %v920
    %v977 = vpack.c.b16 %v923, %v921
    %v978 = vpack.c.b16 %v926, %v924
    %v979 = vpack.c.b16 %v927, %v925
    %v980 = vpack.c.b16 %v930, %v928
    %v981 = vpack.c.b16 %v931, %v929
    %v982 = vpack.c.b16 %v934, %v932
    %v983 = vpack.c.b16 %v935, %v933
    %v984 = vpack.c.b16 %v938, %v936
    %v985 = vpack.c.b16 %v939, %v937
    %v986 = vpack.c.b16 %v942, %v940
    %v987 = vpack.c.b16 %v943, %v941
    %v988 = vpack.c.b16 %v946, %v944
    %v989 = vpack.c.b16 %v947, %v945
    %v990 = vpack.c.b16 %v950, %v948
    %v991 = vpack.c.b16 %v951, %v949
    %v992 = vpack.c.b16 %v954, %v952
    %v993 = vpack.c.b16 %v955, %v953
    %v994 = vpack.c.b16 %v958, %v956
    %v995 = vpack.c.b16 %v959, %v957
    %v996 = vpack.c.b16 %v962, %v960
    %v997 = vpack.c.b16 %v963, %v961
    %v998 = vpack.c.b16 %v966, %v964
    %v999 = vpack.c.b16 %v967, %v965
    %1032 = vmatpush.bf16.msra.mxu0 %v982
    %1033 = vmatpush.bf16.msra.mxu0 %v980
    %1034 = vmatpush.bf16.msra.mxu0 %v978
    %1035 = vmatpush.bf16.msra.mxu0 %v976
    %1036 = vmatpush.bf16.msra.mxu0 %v974
    %1037 = vmatpush.bf16.msra.mxu0 %v972
    %1038 = vmatpush.bf16.msra.mxu0 %v970
    %1039 = vmatpush.bf16.msra.mxu0 %v968
    %1040 = vmatmul.bf16.gmra.mxu0 %v818
    %v1041 = vpop.f32.mrf.mxu0
    %v1042 = vadd.f32 %v868, %v1041
    %v1043 = vpop.f32.mrf.mxu0
    %v1044 = vadd.f32 %v868, %v1043
    %1045 = vmatmul.bf16.gmra.mxu0 %v820
    %v1046 = vpop.f32.mrf.mxu0
    %v1047 = vadd.f32 %v868, %v1046
    %v1048 = vpop.f32.mrf.mxu0
    %v1049 = vadd.f32 %v868, %v1048
    %1050 = vmatmul.bf16.gmra.mxu0 %v822
    %v1051 = vpop.f32.mrf.mxu0
    %v1052 = vadd.f32 %v868, %v1051
    %v1053 = vpop.f32.mrf.mxu0
    %v1054 = vadd.f32 %v868, %v1053
    %1055 = vmatmul.bf16.gmra.mxu0 %v824
    %v1056 = vpop.f32.mrf.mxu0
    %v1057 = vadd.f32 %v868, %v1056
    %v1058 = vpop.f32.mrf.mxu0
    %v1059 = vadd.f32 %v868, %v1058
    %1060 = vmatmul.bf16.gmra.mxu0 %v826
    %v1061 = vpop.f32.mrf.mxu0
    %v1062 = vadd.f32 %v868, %v1061
    %v1063 = vpop.f32.mrf.mxu0
    %v1064 = vadd.f32 %v868, %v1063
    %1065 = vmatmul.bf16.gmra.mxu0 %v828
    %v1066 = vpop.f32.mrf.mxu0
    %v1067 = vadd.f32 %v868, %v1066
    %v1068 = vpop.f32.mrf.mxu0
    %v1069 = vadd.f32 %v868, %v1068
    %1070 = vmatmul.bf16.gmra.mxu0 %v830
    %v1071 = vpop.f32.mrf.mxu0
    %v1072 = vadd.f32 %v868, %v1071
    %v1073 = vpop.f32.mrf.mxu0
    %v1074 = vadd.f32 %v868, %v1073
    %1075 = vmatmul.bf16.gmra.mxu0 %v832
    %v1076 = vpop.f32.mrf.mxu0
    %v1077 = vadd.f32 %v868, %v1076
    %v1078 = vpop.f32.mrf.mxu0
    %v1079 = vadd.f32 %v868, %v1078
    %1080 = vdwg.mxu0
    %1081 = vmatpush.bf16.msra.mxu0 %v998
    %1082 = vmatpush.bf16.msra.mxu0 %v996
    %1083 = vmatpush.bf16.msra.mxu0 %v994
    %1084 = vmatpush.bf16.msra.mxu0 %v992
    %1085 = vmatpush.bf16.msra.mxu0 %v990
    %1086 = vmatpush.bf16.msra.mxu0 %v988
    %1087 = vmatpush.bf16.msra.mxu0 %v986
    %1088 = vmatpush.bf16.msra.mxu0 %v984
    %1089 = vmatmul.bf16.gmra.mxu0 %v819
    %v1090 = vpop.f32.mrf.mxu0
    %v1091 = vadd.f32 %v1042, %v1090
    %v1092 = vpop.f32.mrf.mxu0
    %v1093 = vadd.f32 %v1044, %v1092
    %1094 = vmatmul.bf16.gmra.mxu0 %v821
    %v1095 = vpop.f32.mrf.mxu0
    %v1096 = vadd.f32 %v1047, %v1095
    %v1097 = vpop.f32.mrf.mxu0
    %v1098 = vadd.f32 %v1049, %v1097
    %1099 = vmatmul.bf16.gmra.mxu0 %v823
    %v1100 = vpop.f32.mrf.mxu0
    %v1101 = vadd.f32 %v1052, %v1100
    %v1102 = vpop.f32.mrf.mxu0
    %v1103 = vadd.f32 %v1054, %v1102
    %1104 = vmatmul.bf16.gmra.mxu0 %v825
    %v1105 = vpop.f32.mrf.mxu0
    %v1106 = vadd.f32 %v1057, %v1105
    %v1107 = vpop.f32.mrf.mxu0
    %v1108 = vadd.f32 %v1059, %v1107
    %1109 = vmatmul.bf16.gmra.mxu0 %v827
    %v1110 = vpop.f32.mrf.mxu0
    %v1111 = vadd.f32 %v1062, %v1110
    %v1112 = vpop.f32.mrf.mxu0
    %v1113 = vadd.f32 %v1064, %v1112
    %1114 = vmatmul.bf16.gmra.mxu0 %v829
    %v1115 = vpop.f32.mrf.mxu0
    %v1116 = vadd.f32 %v1067, %v1115
    %v1117 = vpop.f32.mrf.mxu0
    %v1118 = vadd.f32 %v1069, %v1117
    %1119 = vmatmul.bf16.gmra.mxu0 %v831
    %v1120 = vpop.f32.mrf.mxu0
    %v1121 = vadd.f32 %v1072, %v1120
    %v1122 = vpop.f32.mrf.mxu0
    %v1123 = vadd.f32 %v1074, %v1122
    %1124 = vmatmul.bf16.gmra.mxu0 %v833
    %v1125 = vpop.f32.mrf.mxu0
    %v1126 = vadd.f32 %v1077, %v1125
    %v1127 = vpop.f32.mrf.mxu0
    %v1128 = vadd.f32 %v1079, %v1127
    %1129 = vdwg.mxu0
    %1130 = vmatpush.bf16.msra.mxu0 %v983
    %1131 = vmatpush.bf16.msra.mxu0 %v981
    %1132 = vmatpush.bf16.msra.mxu0 %v979
    %1133 = vmatpush.bf16.msra.mxu0 %v977
    %1134 = vmatpush.bf16.msra.mxu0 %v975
    %1135 = vmatpush.bf16.msra.mxu0 %v973
    %1136 = vmatpush.bf16.msra.mxu0 %v971
    %1137 = vmatpush.bf16.msra.mxu0 %v969
    %1138 = vmatmul.bf16.gmra.mxu0 %v818
    %v1139 = vpop.f32.mrf.mxu0
    %v1140 = vadd.f32 %v869, %v1139
    %v1141 = vpop.f32.mrf.mxu0
    %v1142 = vadd.f32 %v869, %v1141
    %1143 = vmatmul.bf16.gmra.mxu0 %v820
    %v1144 = vpop.f32.mrf.mxu0
    %v1145 = vadd.f32 %v869, %v1144
    %v1146 = vpop.f32.mrf.mxu0
    %v1147 = vadd.f32 %v869, %v1146
    %1148 = vmatmul.bf16.gmra.mxu0 %v822
    %v1149 = vpop.f32.mrf.mxu0
    %v1150 = vadd.f32 %v869, %v1149
    %v1151 = vpop.f32.mrf.mxu0
    %v1152 = vadd.f32 %v869, %v1151
    %1153 = vmatmul.bf16.gmra.mxu0 %v824
    %v1154 = vpop.f32.mrf.mxu0
    %v1155 = vadd.f32 %v869, %v1154
    %v1156 = vpop.f32.mrf.mxu0
    %v1157 = vadd.f32 %v869, %v1156
    %1158 = vmatmul.bf16.gmra.mxu0 %v826
    %v1159 = vpop.f32.mrf.mxu0
    %v1160 = vadd.f32 %v869, %v1159
    %v1161 = vpop.f32.mrf.mxu0
    %v1162 = vadd.f32 %v869, %v1161
    %1163 = vmatmul.bf16.gmra.mxu0 %v828
    %v1164 = vpop.f32.mrf.mxu0
    %v1165 = vadd.f32 %v869, %v1164
    %v1166 = vpop.f32.mrf.mxu0
    %v1167 = vadd.f32 %v869, %v1166
    %1168 = vmatmul.bf16.gmra.mxu0 %v830
    %v1169 = vpop.f32.mrf.mxu0
    %v1170 = vadd.f32 %v869, %v1169
    %v1171 = vpop.f32.mrf.mxu0
    %v1172 = vadd.f32 %v869, %v1171
    %1173 = vmatmul.bf16.gmra.mxu0 %v832
    %v1174 = vpop.f32.mrf.mxu0
    %v1175 = vadd.f32 %v869, %v1174
    %v1176 = vpop.f32.mrf.mxu0
    %v1177 = vadd.f32 %v869, %v1176
    %1178 = vdwg.mxu0
    %1179 = vmatpush.bf16.msra.mxu0 %v999
    %1180 = vmatpush.bf16.msra.mxu0 %v997
    %1181 = vmatpush.bf16.msra.mxu0 %v995
    %1182 = vmatpush.bf16.msra.mxu0 %v993
    %1183 = vmatpush.bf16.msra.mxu0 %v991
    %1184 = vmatpush.bf16.msra.mxu0 %v989
    %1185 = vmatpush.bf16.msra.mxu0 %v987
    %1186 = vmatpush.bf16.msra.mxu0 %v985
    %1187 = vmatmul.bf16.gmra.mxu0 %v819
    %v1188 = vpop.f32.mrf.mxu0
    %v1189 = vadd.f32 %v1140, %v1188
    %v1190 = vpop.f32.mrf.mxu0
    %v1191 = vadd.f32 %v1142, %v1190
    %1192 = vmatmul.bf16.gmra.mxu0 %v821
    %v1193 = vpop.f32.mrf.mxu0
    %v1194 = vadd.f32 %v1145, %v1193
    %v1195 = vpop.f32.mrf.mxu0
    %v1196 = vadd.f32 %v1147, %v1195
    %1197 = vmatmul.bf16.gmra.mxu0 %v823
    %v1198 = vpop.f32.mrf.mxu0
    %v1199 = vadd.f32 %v1150, %v1198
    %v1200 = vpop.f32.mrf.mxu0
    %v1201 = vadd.f32 %v1152, %v1200
    %1202 = vmatmul.bf16.gmra.mxu0 %v825
    %v1203 = vpop.f32.mrf.mxu0
    %v1204 = vadd.f32 %v1155, %v1203
    %v1205 = vpop.f32.mrf.mxu0
    %v1206 = vadd.f32 %v1157, %v1205
    %1207 = vmatmul.bf16.gmra.mxu0 %v827
    %v1208 = vpop.f32.mrf.mxu0
    %v1209 = vadd.f32 %v1160, %v1208
    %v1210 = vpop.f32.mrf.mxu0
    %v1211 = vadd.f32 %v1162, %v1210
    %1212 = vmatmul.bf16.gmra.mxu0 %v829
    %v1213 = vpop.f32.mrf.mxu0
    %v1214 = vadd.f32 %v1165, %v1213
    %v1215 = vpop.f32.mrf.mxu0
    %v1216 = vadd.f32 %v1167, %v1215
    %1217 = vmatmul.bf16.gmra.mxu0 %v831
    %v1218 = vpop.f32.mrf.mxu0
    %v1219 = vadd.f32 %v1170, %v1218
    %v1220 = vpop.f32.mrf.mxu0
    %v1221 = vadd.f32 %v1172, %v1220
    %1222 = vmatmul.bf16.gmra.mxu0 %v833
    %v1223 = vpop.f32.mrf.mxu0
    %v1224 = vadd.f32 %v1175, %v1223
    %v1225 = vpop.f32.mrf.mxu0
    %v1226 = vadd.f32 %v1177, %v1225
    %1227 = vdwg.mxu0
    %v1228 = vtanh.pop %v1091
    %v1229 = vtanh.pop %v1189
    %v1230 = vtanh.pop %v1093
    %v1231 = vtanh.pop %v1191
    %v1232 = vtanh.pop %v1096
    %v1233 = vtanh.pop %v1194
    %v1234 = vtanh.pop %v1098
    %v1235 = vtanh.pop %v1196
    %v1236 = vtanh.pop %v1101
    %v1237 = vtanh.pop %v1199
    %v1238 = vtanh.pop %v1103
    %v1239 = vtanh.pop %v1201
    %v1240 = vtanh.pop %v1106
    %v1241 = vtanh.pop %v1204
    %v1242 = vtanh.pop %v1108
    %v1243 = vtanh.pop %v1206
    %v1244 = vtanh.pop %v1111
    %v1245 = vtanh.pop %v1209
    %v1246 = vtanh.pop %v1113
    %v1247 = vtanh.pop %v1211
    %v1248 = vtanh.pop %v1116
    %v1249 = vtanh.pop %v1214
    %v1250 = vtanh.pop %v1118
    %v1251 = vtanh.pop %v1216
    %v1252 = vtanh.pop %v1121
    %v1253 = vtanh.pop %v1219
    %v1254 = vtanh.pop %v1123
    %v1255 = vtanh.pop %v1221
    %v1256 = vtanh.pop %v1126
    %v1257 = vtanh.pop %v1224
    %v1258 = vtanh.pop %v1128
    %v1259 = vtanh.pop %v1226
    %v1260 = vpack.c.bf16 %v1230, %v1228
    %v1261 = vpack.c.bf16 %v1231, %v1229
    %v1262 = vpack.c.bf16 %v1234, %v1232
    %v1263 = vpack.c.bf16 %v1235, %v1233
    %v1264 = vld [vmem:[#allocation11] sm:$0xff]
    %v1265 = vld [vmem:[#allocation11 + $0x8] sm:$0xff]
    %v1266 = vld [vmem:[#allocation11 + $0x10] sm:$0xff]
    %v1267 = vld [vmem:[#allocation11 + $0x18] sm:$0xff]
    %v1268 = vld [vmem:[#allocation11 + $0x20] sm:$0xff]
    %v1269 = vld [vmem:[#allocation11 + $0x28] sm:$0xff]
    %v1270 = vld [vmem:[#allocation11 + $0x30] sm:$0xff]
    %v1271 = vld [vmem:[#allocation11 + $0x38] sm:$0xff]
    %v1272 = vld [vmem:[#allocation11 + $0x40] sm:$0xff]
    %v1273 = vld [vmem:[#allocation11 + $0x48] sm:$0xff]
    %v1274 = vld [vmem:[#allocation11 + $0x50] sm:$0xff]
    %v1275 = vld [vmem:[#allocation11 + $0x58] sm:$0xff]
    %v1276 = vld [vmem:[#allocation11 + $0x60] sm:$0xff]
    %v1277 = vld [vmem:[#allocation11 + $0x68] sm:$0xff]
    %v1278 = vld [vmem:[#allocation11 + $0x70] sm:$0xff]
    %v1279 = vld [vmem:[#allocation11 + $0x78] sm:$0xff]
    %v1280 = vld [vmem:[#allocation11 + $0x80] sm:$0xff]
    %v1281 = vld [vmem:[#allocation11 + $0x88] sm:$0xff]
    %v1282 = vld [vmem:[#allocation11 + $0x90] sm:$0xff]
    %v1283 = vld [vmem:[#allocation11 + $0x98] sm:$0xff]
    %v1284 = vld [vmem:[#allocation11 + $0xa0] sm:$0xff]
    %v1285 = vld [vmem:[#allocation11 + $0xa8] sm:$0xff]
    %v1286 = vld [vmem:[#allocation11 + $0xb0] sm:$0xff]
    %v1287 = vld [vmem:[#allocation11 + $0xb8] sm:$0xff]
    %v1288 = vld [vmem:[#allocation11 + $0xc0] sm:$0xff]
    %v1289 = vld [vmem:[#allocation11 + $0xc8] sm:$0xff]
    %v1290 = vld [vmem:[#allocation11 + $0xd0] sm:$0xff]
    %v1291 = vld [vmem:[#allocation11 + $0xd8] sm:$0xff]
    %v1292 = vld [vmem:[#allocation11 + $0xe0] sm:$0xff]
    %v1293 = vld [vmem:[#allocation11 + $0xe8] sm:$0xff]
    %v1294 = vld [vmem:[#allocation11 + $0xf0] sm:$0xff]
    %v1295 = vld [vmem:[#allocation11 + $0xf8] sm:$0xff]
    %v1296 = vld [vmem:[#allocation13] sm:$0x3]
    %v1298 = vperm.slane %v1296, 0
    %v1299 = vperm.slane %v1296, 1
    %v1334 = vunpack.c.l.b16 %v1264
    %v1335 = vunpack.c.h.b16 %v1264
    %v1336 = vunpack.c.l.b16 %v1265
    %v1337 = vunpack.c.h.b16 %v1265
    %v1338 = vunpack.c.l.b16 %v1266
    %v1339 = vunpack.c.h.b16 %v1266
    %v1340 = vunpack.c.l.b16 %v1267
    %v1341 = vunpack.c.h.b16 %v1267
    %v1342 = vunpack.c.l.b16 %v1268
    %v1343 = vunpack.c.h.b16 %v1268
    %v1344 = vunpack.c.l.b16 %v1269
    %v1345 = vunpack.c.h.b16 %v1269
    %v1346 = vunpack.c.l.b16 %v1270
    %v1347 = vunpack.c.h.b16 %v1270
    %v1348 = vunpack.c.l.b16 %v1271
    %v1349 = vunpack.c.h.b16 %v1271
    %v1350 = vunpack.c.l.b16 %v1272
    %v1351 = vunpack.c.h.b16 %v1272
    %v1352 = vunpack.c.l.b16 %v1273
    %v1353 = vunpack.c.h.b16 %v1273
    %v1354 = vunpack.c.l.b16 %v1274
    %v1355 = vunpack.c.h.b16 %v1274
    %v1356 = vunpack.c.l.b16 %v1275
    %v1357 = vunpack.c.h.b16 %v1275
    %v1358 = vunpack.c.l.b16 %v1276
    %v1359 = vunpack.c.h.b16 %v1276
    %v1360 = vunpack.c.l.b16 %v1277
    %v1361 = vunpack.c.h.b16 %v1277
    %v1362 = vunpack.c.l.b16 %v1278
    %v1363 = vunpack.c.h.b16 %v1278
    %v1364 = vunpack.c.l.b16 %v1279
    %v1365 = vunpack.c.h.b16 %v1279
    %v1366 = vunpack.c.l.b16 %v1280
    %v1367 = vunpack.c.h.b16 %v1280
    %v1368 = vunpack.c.l.b16 %v1281
    %v1369 = vunpack.c.h.b16 %v1281
    %v1370 = vunpack.c.l.b16 %v1282
    %v1371 = vunpack.c.h.b16 %v1282
    %v1372 = vunpack.c.l.b16 %v1283
    %v1373 = vunpack.c.h.b16 %v1283
    %v1374 = vunpack.c.l.b16 %v1284
    %v1375 = vunpack.c.h.b16 %v1284
    %v1376 = vunpack.c.l.b16 %v1285
    %v1377 = vunpack.c.h.b16 %v1285
    %v1378 = vunpack.c.l.b16 %v1286
    %v1379 = vunpack.c.h.b16 %v1286
    %v1380 = vunpack.c.l.b16 %v1287
    %v1381 = vunpack.c.h.b16 %v1287
    %v1382 = vunpack.c.l.b16 %v1288
    %v1383 = vunpack.c.h.b16 %v1288
    %v1384 = vunpack.c.l.b16 %v1289
    %v1385 = vunpack.c.h.b16 %v1289
    %v1386 = vunpack.c.l.b16 %v1290
    %v1387 = vunpack.c.h.b16 %v1290
    %v1388 = vunpack.c.l.b16 %v1291
    %v1389 = vunpack.c.h.b16 %v1291
    %v1390 = vunpack.c.l.b16 %v1292
    %v1391 = vunpack.c.h.b16 %v1292
    %v1392 = vunpack.c.l.b16 %v1293
    %v1393 = vunpack.c.h.b16 %v1293
    %v1394 = vunpack.c.l.b16 %v1294
    %v1395 = vunpack.c.h.b16 %v1294
    %v1396 = vunpack.c.l.b16 %v1295
    %v1397 = vunpack.c.h.b16 %v1295
    %v1398 = vpack.c.b16 %v1336, %v1334
    %v1399 = vpack.c.b16 %v1337, %v1335
    %v1400 = vpack.c.b16 %v1340, %v1338
    %v1401 = vpack.c.b16 %v1341, %v1339
    %v1402 = vpack.c.b16 %v1344, %v1342
    %v1403 = vpack.c.b16 %v1345, %v1343
    %v1404 = vpack.c.b16 %v1348, %v1346
    %v1405 = vpack.c.b16 %v1349, %v1347
    %v1406 = vpack.c.b16 %v1352, %v1350
    %v1407 = vpack.c.b16 %v1353, %v1351
    %v1408 = vpack.c.b16 %v1356, %v1354
    %v1409 = vpack.c.b16 %v1357, %v1355
    %v1410 = vpack.c.b16 %v1360, %v1358
    %v1411 = vpack.c.b16 %v1361, %v1359
    %v1412 = vpack.c.b16 %v1364, %v1362
    %v1413 = vpack.c.b16 %v1365, %v1363
    %v1414 = vpack.c.b16 %v1368, %v1366
    %v1415 = vpack.c.b16 %v1369, %v1367
    %v1416 = vpack.c.b16 %v1372, %v1370
    %v1417 = vpack.c.b16 %v1373, %v1371
    %v1418 = vpack.c.b16 %v1376, %v1374
    %v1419 = vpack.c.b16 %v1377, %v1375
    %v1420 = vpack.c.b16 %v1380, %v1378
    %v1421 = vpack.c.b16 %v1381, %v1379
    %v1422 = vpack.c.b16 %v1384, %v1382
    %v1423 = vpack.c.b16 %v1385, %v1383
    %v1424 = vpack.c.b16 %v1388, %v1386
    %v1425 = vpack.c.b16 %v1389, %v1387
    %v1426 = vpack.c.b16 %v1392, %v1390
    %v1427 = vpack.c.b16 %v1393, %v1391
    %v1428 = vpack.c.b16 %v1396, %v1394
    %v1429 = vpack.c.b16 %v1397, %v1395
    %1462 = vmatpush.bf16.msra.mxu0 %v1412
    %1463 = vmatpush.bf16.msra.mxu0 %v1410
    %1464 = vmatpush.bf16.msra.mxu0 %v1408
    %1465 = vmatpush.bf16.msra.mxu0 %v1406
    %1466 = vmatpush.bf16.msra.mxu0 %v1404
    %1467 = vmatpush.bf16.msra.mxu0 %v1402
    %1468 = vmatpush.bf16.msra.mxu0 %v1400
    %1469 = vmatpush.bf16.msra.mxu0 %v1398
    %1470 = vmatmul.bf16.gmra.mxu0 %v1260
    %v1471 = vpop.f32.mrf.mxu0
    %v1472 = vadd.f32 %v1298, %v1471
    %v1473 = vpop.f32.mrf.mxu0
    %v1474 = vadd.f32 %v1298, %v1473
    %1475 = vmatmul.bf16.gmra.mxu0 %v1262
    %v1476 = vpop.f32.mrf.mxu0
    %v1477 = vadd.f32 %v1298, %v1476
    %v1478 = vpop.f32.mrf.mxu0
    %v1479 = vadd.f32 %v1298, %v1478
    %1480 = vdwg.mxu0
    %1481 = vmatpush.bf16.msra.mxu0 %v1428
    %1482 = vmatpush.bf16.msra.mxu0 %v1426
    %1483 = vmatpush.bf16.msra.mxu0 %v1424
    %1484 = vmatpush.bf16.msra.mxu0 %v1422
    %1485 = vmatpush.bf16.msra.mxu0 %v1420
    %1486 = vmatpush.bf16.msra.mxu0 %v1418
    %1487 = vmatpush.bf16.msra.mxu0 %v1416
    %1488 = vmatpush.bf16.msra.mxu0 %v1414
    %1489 = vmatmul.bf16.gmra.mxu0 %v1261
    %v1490 = vpop.f32.mrf.mxu0
    %v1491 = vadd.f32 %v1472, %v1490
    %v1492 = vpop.f32.mrf.mxu0
    %v1493 = vadd.f32 %v1474, %v1492
    %1494 = vmatmul.bf16.gmra.mxu0 %v1263
    %v1495 = vpop.f32.mrf.mxu0
    %v1496 = vadd.f32 %v1477, %v1495
    %v1497 = vpop.f32.mrf.mxu0
    %v1498 = vadd.f32 %v1479, %v1497
    %1499 = vdwg.mxu0
    %1500 = vmatpush.bf16.msra.mxu0 %v1413
    %1501 = vmatpush.bf16.msra.mxu0 %v1411
    %1502 = vmatpush.bf16.msra.mxu0 %v1409
    %1503 = vmatpush.bf16.msra.mxu0 %v1407
    %1504 = vmatpush.bf16.msra.mxu0 %v1405
    %1505 = vmatpush.bf16.msra.mxu0 %v1403
    %1506 = vmatpush.bf16.msra.mxu0 %v1401
    %1507 = vmatpush.bf16.msra.mxu0 %v1399
    %1508 = vmatmul.bf16.gmra.mxu0 %v1260
    %v1509 = vpop.f32.mrf.mxu0
    %v1510 = vadd.f32 %v1299, %v1509
    %v1511 = vpop.f32.mrf.mxu0
    %v1512 = vadd.f32 %v1299, %v1511
    %1513 = vmatmul.bf16.gmra.mxu0 %v1262
    %v1514 = vpop.f32.mrf.mxu0
    %v1515 = vadd.f32 %v1299, %v1514
    %v1516 = vpop.f32.mrf.mxu0
    %v1517 = vadd.f32 %v1299, %v1516
    %1518 = vdwg.mxu0
    %1519 = vmatpush.bf16.msra.mxu0 %v1429
    %1520 = vmatpush.bf16.msra.mxu0 %v1427
    %1521 = vmatpush.bf16.msra.mxu0 %v1425
    %1522 = vmatpush.bf16.msra.mxu0 %v1423
    %1523 = vmatpush.bf16.msra.mxu0 %v1421
    %1524 = vmatpush.bf16.msra.mxu0 %v1419
    %1525 = vmatpush.bf16.msra.mxu0 %v1417
    %1526 = vmatpush.bf16.msra.mxu0 %v1415
    %1527 = vmatmul.bf16.gmra.mxu0 %v1261
    %v1528 = vpop.f32.mrf.mxu0
    %v1529 = vadd.f32 %v1510, %v1528
    %v1530 = vpop.f32.mrf.mxu0
    %v1531 = vadd.f32 %v1512, %v1530
    %1532 = vmatmul.bf16.gmra.mxu0 %v1263
    %v1533 = vpop.f32.mrf.mxu0
    %v1534 = vadd.f32 %v1515, %v1533
    %v1535 = vpop.f32.mrf.mxu0
    %v1536 = vadd.f32 %v1517, %v1535
    %1537 = vdwg.mxu0
    %v1538 = vtanh.pop %v1491
    %v1539 = vtanh.pop %v1529
    %v1540 = vtanh.pop %v1493
    %v1541 = vtanh.pop %v1531
    %v1542 = vtanh.pop %v1496
    %v1543 = vtanh.pop %v1534
    %v1544 = vtanh.pop %v1498
    %v1545 = vtanh.pop %v1536
    %v1546 = vpack.c.bf16 %v1540, %v1538
    %v1547 = vpack.c.bf16 %v1541, %v1539
    %v1548 = vpack.c.bf16 %v1544, %v1542
    %v1549 = vpack.c.bf16 %v1545, %v1543
    %v1550 = vld [vmem:[#allocation14] sm:$0xff]
    %v1551 = vld [vmem:[#allocation14 + $0x8] sm:$0xff]
    %v1552 = vld [vmem:[#allocation14 + $0x10] sm:$0xff]
    %v1553 = vld [vmem:[#allocation14 + $0x18] sm:$0xff]
    %v1554 = vld [vmem:[#allocation14 + $0x20] sm:$0xff]
    %v1555 = vld [vmem:[#allocation14 + $0x28] sm:$0xff]
    %v1556 = vld [vmem:[#allocation14 + $0x30] sm:$0xff]
    %v1557 = vld [vmem:[#allocation14 + $0x38] sm:$0xff]
    %v1558 = vld [vmem:[#allocation14 + $0x40] sm:$0xff]
    %v1559 = vld [vmem:[#allocation14 + $0x48] sm:$0xff]
    %v1560 = vld [vmem:[#allocation14 + $0x50] sm:$0xff]
    %v1561 = vld [vmem:[#allocation14 + $0x58] sm:$0xff]
    %v1562 = vld [vmem:[#allocation14 + $0x60] sm:$0xff]
    %v1563 = vld [vmem:[#allocation14 + $0x68] sm:$0xff]
    %v1564 = vld [vmem:[#allocation14 + $0x70] sm:$0xff]
    %v1565 = vld [vmem:[#allocation14 + $0x78] sm:$0xff]
    %v1566 = vld [vmem:[#allocation14 + $0x80] sm:$0xff]
    %v1567 = vld [vmem:[#allocation14 + $0x88] sm:$0xff]
    %v1568 = vld [vmem:[#allocation14 + $0x90] sm:$0xff]
    %v1569 = vld [vmem:[#allocation14 + $0x98] sm:$0xff]
    %v1570 = vld [vmem:[#allocation14 + $0xa0] sm:$0xff]
    %v1571 = vld [vmem:[#allocation14 + $0xa8] sm:$0xff]
    %v1572 = vld [vmem:[#allocation14 + $0xb0] sm:$0xff]
    %v1573 = vld [vmem:[#allocation14 + $0xb8] sm:$0xff]
    %v1574 = vld [vmem:[#allocation14 + $0xc0] sm:$0xff]
    %v1575 = vld [vmem:[#allocation14 + $0xc8] sm:$0xff]
    %v1576 = vld [vmem:[#allocation14 + $0xd0] sm:$0xff]
    %v1577 = vld [vmem:[#allocation14 + $0xd8] sm:$0xff]
    %v1578 = vld [vmem:[#allocation14 + $0xe0] sm:$0xff]
    %v1579 = vld [vmem:[#allocation14 + $0xe8] sm:$0xff]
    %v1580 = vld [vmem:[#allocation14 + $0xf0] sm:$0xff]
    %v1581 = vld [vmem:[#allocation14 + $0xf8] sm:$0xff]
    %v1582 = vld [vmem:[#allocation16] sm:$0x3]
    %v1584 = vperm.slane %v1582, 0
    %v1585 = vperm.slane %v1582, 1
    %v1620 = vunpack.c.l.b16 %v1550
    %v1621 = vunpack.c.h.b16 %v1550
    %v1622 = vunpack.c.l.b16 %v1551
    %v1623 = vunpack.c.h.b16 %v1551
    %v1624 = vunpack.c.l.b16 %v1552
    %v1625 = vunpack.c.h.b16 %v1552
    %v1626 = vunpack.c.l.b16 %v1553
    %v1627 = vunpack.c.h.b16 %v1553
    %v1628 = vunpack.c.l.b16 %v1554
    %v1629 = vunpack.c.h.b16 %v1554
    %v1630 = vunpack.c.l.b16 %v1555
    %v1631 = vunpack.c.h.b16 %v1555
    %v1632 = vunpack.c.l.b16 %v1556
    %v1633 = vunpack.c.h.b16 %v1556
    %v1634 = vunpack.c.l.b16 %v1557
    %v1635 = vunpack.c.h.b16 %v1557
    %v1636 = vunpack.c.l.b16 %v1558
    %v1637 = vunpack.c.h.b16 %v1558
    %v1638 = vunpack.c.l.b16 %v1559
    %v1639 = vunpack.c.h.b16 %v1559
    %v1640 = vunpack.c.l.b16 %v1560
    %v1641 = vunpack.c.h.b16 %v1560
    %v1642 = vunpack.c.l.b16 %v1561
    %v1643 = vunpack.c.h.b16 %v1561
    %v1644 = vunpack.c.l.b16 %v1562
    %v1645 = vunpack.c.h.b16 %v1562
    %v1646 = vunpack.c.l.b16 %v1563
    %v1647 = vunpack.c.h.b16 %v1563
    %v1648 = vunpack.c.l.b16 %v1564
    %v1649 = vunpack.c.h.b16 %v1564
    %v1650 = vunpack.c.l.b16 %v1565
    %v1651 = vunpack.c.h.b16 %v1565
    %v1652 = vunpack.c.l.b16 %v1566
    %v1653 = vunpack.c.h.b16 %v1566
    %v1654 = vunpack.c.l.b16 %v1567
    %v1655 = vunpack.c.h.b16 %v1567
    %v1656 = vunpack.c.l.b16 %v1568
    %v1657 = vunpack.c.h.b16 %v1568
    %v1658 = vunpack.c.l.b16 %v1569
    %v1659 = vunpack.c.h.b16 %v1569
    %v1660 = vunpack.c.l.b16 %v1570
    %v1661 = vunpack.c.h.b16 %v1570
    %v1662 = vunpack.c.l.b16 %v1571
    %v1663 = vunpack.c.h.b16 %v1571
    %v1664 = vunpack.c.l.b16 %v1572
    %v1665 = vunpack.c.h.b16 %v1572
    %v1666 = vunpack.c.l.b16 %v1573
    %v1667 = vunpack.c.h.b16 %v1573
    %v1668 = vunpack.c.l.b16 %v1574
    %v1669 = vunpack.c.h.b16 %v1574
    %v1670 = vunpack.c.l.b16 %v1575
    %v1671 = vunpack.c.h.b16 %v1575
    %v1672 = vunpack.c.l.b16 %v1576
    %v1673 = vunpack.c.h.b16 %v1576
    %v1674 = vunpack.c.l.b16 %v1577
    %v1675 = vunpack.c.h.b16 %v1577
    %v1676 = vunpack.c.l.b16 %v1578
    %v1677 = vunpack.c.h.b16 %v1578
    %v1678 = vunpack.c.l.b16 %v1579
    %v1679 = vunpack.c.h.b16 %v1579
    %v1680 = vunpack.c.l.b16 %v1580
    %v1681 = vunpack.c.h.b16 %v1580
    %v1682 = vunpack.c.l.b16 %v1581
    %v1683 = vunpack.c.h.b16 %v1581
    %v1684 = vpack.c.b16 %v1622, %v1620
    %v1685 = vpack.c.b16 %v1623, %v1621
    %v1686 = vpack.c.b16 %v1626, %v1624
    %v1687 = vpack.c.b16 %v1627, %v1625
    %v1688 = vpack.c.b16 %v1630, %v1628
    %v1689 = vpack.c.b16 %v1631, %v1629
    %v1690 = vpack.c.b16 %v1634, %v1632
    %v1691 = vpack.c.b16 %v1635, %v1633
    %v1692 = vpack.c.b16 %v1638, %v1636
    %v1693 = vpack.c.b16 %v1639, %v1637
    %v1694 = vpack.c.b16 %v1642, %v1640
    %v1695 = vpack.c.b16 %v1643, %v1641
    %v1696 = vpack.c.b16 %v1646, %v1644
    %v1697 = vpack.c.b16 %v1647, %v1645
    %v1698 = vpack.c.b16 %v1650, %v1648
    %v1699 = vpack.c.b16 %v1651, %v1649
    %v1700 = vpack.c.b16 %v1654, %v1652
    %v1701 = vpack.c.b16 %v1655, %v1653
    %v1702 = vpack.c.b16 %v1658, %v1656
    %v1703 = vpack.c.b16 %v1659, %v1657
    %v1704 = vpack.c.b16 %v1662, %v1660
    %v1705 = vpack.c.b16 %v1663, %v1661
    %v1706 = vpack.c.b16 %v1666, %v1664
    %v1707 = vpack.c.b16 %v1667, %v1665
    %v1708 = vpack.c.b16 %v1670, %v1668
    %v1709 = vpack.c.b16 %v1671, %v1669
    %v1710 = vpack.c.b16 %v1674, %v1672
    %v1711 = vpack.c.b16 %v1675, %v1673
    %v1712 = vpack.c.b16 %v1678, %v1676
    %v1713 = vpack.c.b16 %v1679, %v1677
    %v1714 = vpack.c.b16 %v1682, %v1680
    %v1715 = vpack.c.b16 %v1683, %v1681
    %1748 = vmatpush.bf16.msra.mxu0 %v1698
    %1749 = vmatpush.bf16.msra.mxu0 %v1696
    %1750 = vmatpush.bf16.msra.mxu0 %v1694
    %1751 = vmatpush.bf16.msra.mxu0 %v1692
    %1752 = vmatpush.bf16.msra.mxu0 %v1690
    %1753 = vmatpush.bf16.msra.mxu0 %v1688
    %1754 = vmatpush.bf16.msra.mxu0 %v1686
    %1755 = vmatpush.bf16.msra.mxu0 %v1684
    %1756 = vmatmul.bf16.gmra.mxu0 %v1546
    %v1757 = vpop.f32.mrf.mxu0
    %v1758 = vadd.f32 %v1584, %v1757
    %v1759 = vpop.f32.mrf.mxu0
    %v1760 = vadd.f32 %v1584, %v1759
    %1761 = vmatmul.bf16.gmra.mxu0 %v1548
    %v1762 = vpop.f32.mrf.mxu0
    %v1763 = vadd.f32 %v1584, %v1762
    %v1764 = vpop.f32.mrf.mxu0
    %v1765 = vadd.f32 %v1584, %v1764
    %1766 = vdwg.mxu0
    %1767 = vmatpush.bf16.msra.mxu0 %v1714
    %1768 = vmatpush.bf16.msra.mxu0 %v1712
    %1769 = vmatpush.bf16.msra.mxu0 %v1710
    %1770 = vmatpush.bf16.msra.mxu0 %v1708
    %1771 = vmatpush.bf16.msra.mxu0 %v1706
    %1772 = vmatpush.bf16.msra.mxu0 %v1704
    %1773 = vmatpush.bf16.msra.mxu0 %v1702
    %1774 = vmatpush.bf16.msra.mxu0 %v1700
    %1775 = vmatmul.bf16.gmra.mxu0 %v1547
    %v1776 = vpop.f32.mrf.mxu0
    %v1777 = vadd.f32 %v1758, %v1776
    %v1778 = vpop.f32.mrf.mxu0
    %v1779 = vadd.f32 %v1760, %v1778
    %1780 = vmatmul.bf16.gmra.mxu0 %v1549
    %v1781 = vpop.f32.mrf.mxu0
    %v1782 = vadd.f32 %v1763, %v1781
    %v1783 = vpop.f32.mrf.mxu0
    %v1784 = vadd.f32 %v1765, %v1783
    %1785 = vdwg.mxu0
    %1786 = vmatpush.bf16.msra.mxu0 %v1699
    %1787 = vmatpush.bf16.msra.mxu0 %v1697
    %1788 = vmatpush.bf16.msra.mxu0 %v1695
    %1789 = vmatpush.bf16.msra.mxu0 %v1693
    %1790 = vmatpush.bf16.msra.mxu0 %v1691
    %1791 = vmatpush.bf16.msra.mxu0 %v1689
    %1792 = vmatpush.bf16.msra.mxu0 %v1687
    %1793 = vmatpush.bf16.msra.mxu0 %v1685
    %1794 = vmatmul.bf16.gmra.mxu0 %v1546
    %v1795 = vpop.f32.mrf.mxu0
    %v1796 = vadd.f32 %v1585, %v1795
    %v1797 = vpop.f32.mrf.mxu0
    %v1798 = vadd.f32 %v1585, %v1797
    %1799 = vmatmul.bf16.gmra.mxu0 %v1548
    %v1800 = vpop.f32.mrf.mxu0
    %v1801 = vadd.f32 %v1585, %v1800
    %v1802 = vpop.f32.mrf.mxu0
    %v1803 = vadd.f32 %v1585, %v1802
    %1804 = vdwg.mxu0
    %1805 = vmatpush.bf16.msra.mxu0 %v1715
    %1806 = vmatpush.bf16.msra.mxu0 %v1713
    %1807 = vmatpush.bf16.msra.mxu0 %v1711
    %1808 = vmatpush.bf16.msra.mxu0 %v1709
    %1809 = vmatpush.bf16.msra.mxu0 %v1707
    %1810 = vmatpush.bf16.msra.mxu0 %v1705
    %1811 = vmatpush.bf16.msra.mxu0 %v1703
    %1812 = vmatpush.bf16.msra.mxu0 %v1701
    %1813 = vmatmul.bf16.gmra.mxu0 %v1547
    %v1814 = vpop.f32.mrf.mxu0
    %v1815 = vadd.f32 %v1796, %v1814
    %v1816 = vpop.f32.mrf.mxu0
    %v1817 = vadd.f32 %v1798, %v1816
    %1818 = vmatmul.bf16.gmra.mxu0 %v1549
    %v1819 = vpop.f32.mrf.mxu0
    %v1820 = vadd.f32 %v1801, %v1819
    %v1821 = vpop.f32.mrf.mxu0
    %v1822 = vadd.f32 %v1803, %v1821
    %1823 = vdwg.mxu0
    %v1824 = vtanh.pop %v1777
    %v1825 = vtanh.pop %v1815
    %v1826 = vtanh.pop %v1779
    %v1827 = vtanh.pop %v1817
    %v1828 = vtanh.pop %v1782
    %v1829 = vtanh.pop %v1820
    %v1830 = vtanh.pop %v1784
    %v1831 = vtanh.pop %v1822
    %v1832 = vld [vmem:[#allocation28] sm:$0xff]
    %v1833 = vld [vmem:[#allocation28 + $0x8] sm:$0xff]
    %v1834 = vld [vmem:[#allocation28 + $0x10] sm:$0x77]
    %v1835 = vld [vmem:[#allocation29] sm:$0x3]
    %v1837 = vperm.slane %v1835, 0
    %v1838 = vperm.slane %v1835, 1
    %v1844 = vunpack.c.l.b16 %v1832
    %v1845 = vunpack.c.h.b16 %v1832
    %v1846 = vunpack.c.l.b16 %v1833
    %v1847 = vunpack.c.h.b16 %v1833
    %v1848 = vunpack.c.l.b16 %v1834
    %v1849 = vunpack.c.h.b16 %v1834
    %v1850 = vpack.c.b16 %v1846, %v1844
    %v1851 = vpack.c.b16 %v1847, %v1845
    %v1852 = vpack.c.b16 %v1848, %v1848
    %v1853 = vpack.c.b16 %v1849, %v1849
    %v1857 = vand.u32 %v1852, %v681
    %v1860 = vand.u32 %v1853, %v681
    %1862 = vmatpush.bf16.msra.mxu0 0
    %1863 = vmatpush.bf16.msra.mxu0 0
    %1864 = vmatpush.bf16.msra.mxu0 0
    %1865 = vmatpush.bf16.msra.mxu0 0
    %1866 = vmatpush.bf16.msra.mxu0 0
    %1867 = vmatpush.bf16.msra.mxu0 0
    %1868 = vmatpush.bf16.msra.mxu0 %v1857
    %1869 = vmatpush.bf16.msra.mxu0 %v1850
    %1870 = vmatmul.bf16.gmra.mxu0 %v655
    %v1871 = vpop.f32.mrf.mxu0
    %v1872 = vadd.f32 %v1837, %v1871
    %v1873 = vpop.f32.mrf.mxu0
    %v1874 = vadd.f32 %v1837, %v1873
    %1875 = vmatmul.bf16.gmra.mxu0 %v658
    %v1876 = vpop.f32.mrf.mxu0
    %v1877 = vadd.f32 %v1837, %v1876
    %v1878 = vpop.f32.mrf.mxu0
    %v1879 = vadd.f32 %v1837, %v1878
    %1880 = vdwg.mxu0
    %1881 = vmatpush.bf16.msra.mxu0 0
    %1882 = vmatpush.bf16.msra.mxu0 0
    %1883 = vmatpush.bf16.msra.mxu0 0
    %1884 = vmatpush.bf16.msra.mxu0 0
    %1885 = vmatpush.bf16.msra.mxu0 0
    %1886 = vmatpush.bf16.msra.mxu0 0
    %1887 = vmatpush.bf16.msra.mxu0 %v1860
    %1888 = vmatpush.bf16.msra.mxu0 %v1851
    %1889 = vmatmul.bf16.gmra.mxu0 %v655
    %v1890 = vpop.f32.mrf.mxu0
    %v1891 = vadd.f32 %v1838, %v1890
    %v1892 = vpop.f32.mrf.mxu0
    %v1893 = vadd.f32 %v1838, %v1892
    %1894 = vmatmul.bf16.gmra.mxu0 %v658
    %v1895 = vpop.f32.mrf.mxu0
    %v1896 = vadd.f32 %v1838, %v1895
    %v1897 = vpop.f32.mrf.mxu0
    %v1898 = vadd.f32 %v1838, %v1897
    %1899 = vdwg.mxu0
    %v1900 = vtanh.pop %v1872
    %v1901 = vtanh.pop %v1891
    %v1902 = vtanh.pop %v1874
    %v1903 = vtanh.pop %v1893
    %v1904 = vtanh.pop %v1877
    %v1905 = vtanh.pop %v1896
    %v1906 = vtanh.pop %v1879
    %v1907 = vtanh.pop %v1898
    %v1908 = vpack.c.bf16 %v1902, %v1900
    %v1909 = vpack.c.bf16 %v1903, %v1901
    %v1910 = vpack.c.bf16 %v1906, %v1904
    %v1911 = vpack.c.bf16 %v1907, %v1905
    %v1912 = vld [vmem:[#allocation31] sm:$0xff]
    %v1913 = vld [vmem:[#allocation31 + $0x8] sm:$0xff]
    %v1914 = vld [vmem:[#allocation31 + $0x10] sm:$0xff]
    %v1915 = vld [vmem:[#allocation31 + $0x18] sm:$0xff]
    %v1916 = vld [vmem:[#allocation31 + $0x20] sm:$0xff]
    %v1917 = vld [vmem:[#allocation31 + $0x28] sm:$0xff]
    %v1918 = vld [vmem:[#allocation31 + $0x30] sm:$0xff]
    %v1919 = vld [vmem:[#allocation31 + $0x38] sm:$0xff]
    %v1920 = vld [vmem:[#allocation31 + $0x40] sm:$0xff]
    %v1921 = vld [vmem:[#allocation31 + $0x48] sm:$0xff]
    %v1922 = vld [vmem:[#allocation31 + $0x50] sm:$0xff]
    %v1923 = vld [vmem:[#allocation31 + $0x58] sm:$0xff]
    %v1924 = vld [vmem:[#allocation31 + $0x60] sm:$0xff]
    %v1925 = vld [vmem:[#allocation31 + $0x68] sm:$0xff]
    %v1926 = vld [vmem:[#allocation31 + $0x70] sm:$0xff]
    %v1927 = vld [vmem:[#allocation31 + $0x78] sm:$0xff]
    %v1928 = vld [vmem:[#allocation31 + $0x80] sm:$0xff]
    %v1929 = vld [vmem:[#allocation31 + $0x88] sm:$0xff]
    %v1930 = vld [vmem:[#allocation31 + $0x90] sm:$0xff]
    %v1931 = vld [vmem:[#allocation31 + $0x98] sm:$0xff]
    %v1932 = vld [vmem:[#allocation31 + $0xa0] sm:$0xff]
    %v1933 = vld [vmem:[#allocation31 + $0xa8] sm:$0xff]
    %v1934 = vld [vmem:[#allocation31 + $0xb0] sm:$0xff]
    %v1935 = vld [vmem:[#allocation31 + $0xb8] sm:$0xff]
    %v1936 = vld [vmem:[#allocation31 + $0xc0] sm:$0xff]
    %v1937 = vld [vmem:[#allocation31 + $0xc8] sm:$0xff]
    %v1938 = vld [vmem:[#allocation31 + $0xd0] sm:$0xff]
    %v1939 = vld [vmem:[#allocation31 + $0xd8] sm:$0xff]
    %v1940 = vld [vmem:[#allocation31 + $0xe0] sm:$0xff]
    %v1941 = vld [vmem:[#allocation31 + $0xe8] sm:$0xff]
    %v1942 = vld [vmem:[#allocation31 + $0xf0] sm:$0xff]
    %v1943 = vld [vmem:[#allocation31 + $0xf8] sm:$0xff]
    %v1944 = vld [vmem:[#allocation32] sm:$0x3]
    %v1946 = vperm.slane %v1944, 0
    %v1947 = vperm.slane %v1944, 1
    %v1982 = vunpack.c.l.b16 %v1912
    %v1983 = vunpack.c.h.b16 %v1912
    %v1984 = vunpack.c.l.b16 %v1913
    %v1985 = vunpack.c.h.b16 %v1913
    %v1986 = vunpack.c.l.b16 %v1914
    %v1987 = vunpack.c.h.b16 %v1914
    %v1988 = vunpack.c.l.b16 %v1915
    %v1989 = vunpack.c.h.b16 %v1915
    %v1990 = vunpack.c.l.b16 %v1916
    %v1991 = vunpack.c.h.b16 %v1916
    %v1992 = vunpack.c.l.b16 %v1917
    %v1993 = vunpack.c.h.b16 %v1917
    %v1994 = vunpack.c.l.b16 %v1918
    %v1995 = vunpack.c.h.b16 %v1918
    %v1996 = vunpack.c.l.b16 %v1919
    %v1997 = vunpack.c.h.b16 %v1919
    %v1998 = vunpack.c.l.b16 %v1920
    %v1999 = vunpack.c.h.b16 %v1920
    %v2000 = vunpack.c.l.b16 %v1921
    %v2001 = vunpack.c.h.b16 %v1921
    %v2002 = vunpack.c.l.b16 %v1922
    %v2003 = vunpack.c.h.b16 %v1922
    %v2004 = vunpack.c.l.b16 %v1923
    %v2005 = vunpack.c.h.b16 %v1923
    %v2006 = vunpack.c.l.b16 %v1924
    %v2007 = vunpack.c.h.b16 %v1924
    %v2008 = vunpack.c.l.b16 %v1925
    %v2009 = vunpack.c.h.b16 %v1925
    %v2010 = vunpack.c.l.b16 %v1926
    %v2011 = vunpack.c.h.b16 %v1926
    %v2012 = vunpack.c.l.b16 %v1927
    %v2013 = vunpack.c.h.b16 %v1927
    %v2014 = vunpack.c.l.b16 %v1928
    %v2015 = vunpack.c.h.b16 %v1928
    %v2016 = vunpack.c.l.b16 %v1929
    %v2017 = vunpack.c.h.b16 %v1929
    %v2018 = vunpack.c.l.b16 %v1930
    %v2019 = vunpack.c.h.b16 %v1930
    %v2020 = vunpack.c.l.b16 %v1931
    %v2021 = vunpack.c.h.b16 %v1931
    %v2022 = vunpack.c.l.b16 %v1932
    %v2023 = vunpack.c.h.b16 %v1932
    %v2024 = vunpack.c.l.b16 %v1933
    %v2025 = vunpack.c.h.b16 %v1933
    %v2026 = vunpack.c.l.b16 %v1934
    %v2027 = vunpack.c.h.b16 %v1934
    %v2028 = vunpack.c.l.b16 %v1935
    %v2029 = vunpack.c.h.b16 %v1935
    %v2030 = vunpack.c.l.b16 %v1936
    %v2031 = vunpack.c.h.b16 %v1936
    %v2032 = vunpack.c.l.b16 %v1937
    %v2033 = vunpack.c.h.b16 %v1937
    %v2034 = vunpack.c.l.b16 %v1938
    %v2035 = vunpack.c.h.b16 %v1938
    %v2036 = vunpack.c.l.b16 %v1939
    %v2037 = vunpack.c.h.b16 %v1939
    %v2038 = vunpack.c.l.b16 %v1940
    %v2039 = vunpack.c.h.b16 %v1940
    %v2040 = vunpack.c.l.b16 %v1941
    %v2041 = vunpack.c.h.b16 %v1941
    %v2042 = vunpack.c.l.b16 %v1942
    %v2043 = vunpack.c.h.b16 %v1942
    %v2044 = vunpack.c.l.b16 %v1943
    %v2045 = vunpack.c.h.b16 %v1943
    %v2046 = vpack.c.b16 %v1984, %v1982
    %v2047 = vpack.c.b16 %v1985, %v1983
    %v2048 = vpack.c.b16 %v1988, %v1986
    %v2049 = vpack.c.b16 %v1989, %v1987
    %v2050 = vpack.c.b16 %v1992, %v1990
    %v2051 = vpack.c.b16 %v1993, %v1991
    %v2052 = vpack.c.b16 %v1996, %v1994
    %v2053 = vpack.c.b16 %v1997, %v1995
    %v2054 = vpack.c.b16 %v2000, %v1998
    %v2055 = vpack.c.b16 %v2001, %v1999
    %v2056 = vpack.c.b16 %v2004, %v2002
    %v2057 = vpack.c.b16 %v2005, %v2003
    %v2058 = vpack.c.b16 %v2008, %v2006
    %v2059 = vpack.c.b16 %v2009, %v2007
    %v2060 = vpack.c.b16 %v2012, %v2010
    %v2061 = vpack.c.b16 %v2013, %v2011
    %v2062 = vpack.c.b16 %v2016, %v2014
    %v2063 = vpack.c.b16 %v2017, %v2015
    %v2064 = vpack.c.b16 %v2020, %v2018
    %v2065 = vpack.c.b16 %v2021, %v2019
    %v2066 = vpack.c.b16 %v2024, %v2022
    %v2067 = vpack.c.b16 %v2025, %v2023
    %v2068 = vpack.c.b16 %v2028, %v2026
    %v2069 = vpack.c.b16 %v2029, %v2027
    %v2070 = vpack.c.b16 %v2032, %v2030
    %v2071 = vpack.c.b16 %v2033, %v2031
    %v2072 = vpack.c.b16 %v2036, %v2034
    %v2073 = vpack.c.b16 %v2037, %v2035
    %v2074 = vpack.c.b16 %v2040, %v2038
    %v2075 = vpack.c.b16 %v2041, %v2039
    %v2076 = vpack.c.b16 %v2044, %v2042
    %v2077 = vpack.c.b16 %v2045, %v2043
    %2110 = vmatpush.bf16.msra.mxu0 %v2060
    %2111 = vmatpush.bf16.msra.mxu0 %v2058
    %2112 = vmatpush.bf16.msra.mxu0 %v2056
    %2113 = vmatpush.bf16.msra.mxu0 %v2054
    %2114 = vmatpush.bf16.msra.mxu0 %v2052
    %2115 = vmatpush.bf16.msra.mxu0 %v2050
    %2116 = vmatpush.bf16.msra.mxu0 %v2048
    %2117 = vmatpush.bf16.msra.mxu0 %v2046
    %2118 = vmatmul.bf16.gmra.mxu0 %v1908
    %v2119 = vpop.f32.mrf.mxu0
    %v2120 = vadd.f32 %v1946, %v2119
    %v2121 = vpop.f32.mrf.mxu0
    %v2122 = vadd.f32 %v1946, %v2121
    %2123 = vmatmul.bf16.gmra.mxu0 %v1910
    %v2124 = vpop.f32.mrf.mxu0
    %v2125 = vadd.f32 %v1946, %v2124
    %v2126 = vpop.f32.mrf.mxu0
    %v2127 = vadd.f32 %v1946, %v2126
    %2128 = vdwg.mxu0
    %2129 = vmatpush.bf16.msra.mxu0 %v2076
    %2130 = vmatpush.bf16.msra.mxu0 %v2074
    %2131 = vmatpush.bf16.msra.mxu0 %v2072
    %2132 = vmatpush.bf16.msra.mxu0 %v2070
    %2133 = vmatpush.bf16.msra.mxu0 %v2068
    %2134 = vmatpush.bf16.msra.mxu0 %v2066
    %2135 = vmatpush.bf16.msra.mxu0 %v2064
    %2136 = vmatpush.bf16.msra.mxu0 %v2062
    %2137 = vmatmul.bf16.gmra.mxu0 %v1909
    %v2138 = vpop.f32.mrf.mxu0
    %v2139 = vadd.f32 %v2120, %v2138
    %v2140 = vpop.f32.mrf.mxu0
    %v2141 = vadd.f32 %v2122, %v2140
    %2142 = vmatmul.bf16.gmra.mxu0 %v1911
    %v2143 = vpop.f32.mrf.mxu0
    %v2144 = vadd.f32 %v2125, %v2143
    %v2145 = vpop.f32.mrf.mxu0
    %v2146 = vadd.f32 %v2127, %v2145
    %2147 = vdwg.mxu0
    %2148 = vmatpush.bf16.msra.mxu0 %v2061
    %2149 = vmatpush.bf16.msra.mxu0 %v2059
    %2150 = vmatpush.bf16.msra.mxu0 %v2057
    %2151 = vmatpush.bf16.msra.mxu0 %v2055
    %2152 = vmatpush.bf16.msra.mxu0 %v2053
    %2153 = vmatpush.bf16.msra.mxu0 %v2051
    %2154 = vmatpush.bf16.msra.mxu0 %v2049
    %2155 = vmatpush.bf16.msra.mxu0 %v2047
    %2156 = vmatmul.bf16.gmra.mxu0 %v1908
    %v2157 = vpop.f32.mrf.mxu0
    %v2158 = vadd.f32 %v1947, %v2157
    %v2159 = vpop.f32.mrf.mxu0
    %v2160 = vadd.f32 %v1947, %v2159
    %2161 = vmatmul.bf16.gmra.mxu0 %v1910
    %v2162 = vpop.f32.mrf.mxu0
    %v2163 = vadd.f32 %v1947, %v2162
    %v2164 = vpop.f32.mrf.mxu0
    %v2165 = vadd.f32 %v1947, %v2164
    %2166 = vdwg.mxu0
    %2167 = vmatpush.bf16.msra.mxu0 %v2077
    %2168 = vmatpush.bf16.msra.mxu0 %v2075
    %2169 = vmatpush.bf16.msra.mxu0 %v2073
    %2170 = vmatpush.bf16.msra.mxu0 %v2071
    %2171 = vmatpush.bf16.msra.mxu0 %v2069
    %2172 = vmatpush.bf16.msra.mxu0 %v2067
    %2173 = vmatpush.bf16.msra.mxu0 %v2065
    %2174 = vmatpush.bf16.msra.mxu0 %v2063
    %2175 = vmatmul.bf16.gmra.mxu0 %v1909
    %v2176 = vpop.f32.mrf.mxu0
    %v2177 = vadd.f32 %v2158, %v2176
    %v2178 = vpop.f32.mrf.mxu0
    %v2179 = vadd.f32 %v2160, %v2178
    %2180 = vmatmul.bf16.gmra.mxu0 %v1911
    %v2181 = vpop.f32.mrf.mxu0
    %v2182 = vadd.f32 %v2163, %v2181
    %v2183 = vpop.f32.mrf.mxu0
    %v2184 = vadd.f32 %v2165, %v2183
    %2185 = vdwg.mxu0
    %v2186 = vtanh.pop %v2139
    %v2187 = vtanh.pop %v2177
    %v2188 = vtanh.pop %v2141
    %v2189 = vtanh.pop %v2179
    %v2190 = vtanh.pop %v2144
    %v2191 = vtanh.pop %v2182
    %v2192 = vtanh.pop %v2146
    %v2193 = vtanh.pop %v2184
    %v2194 = vpack.c.bf16 %v1238, %v1236
    %v2195 = vpack.c.bf16 %v1239, %v1237
    %v2196 = vpack.c.bf16 %v1242, %v1240
    %v2197 = vpack.c.bf16 %v1243, %v1241
    %v2198 = vpack.c.bf16 %v1246, %v1244
    %v2199 = vpack.c.bf16 %v1247, %v1245
    %v2200 = vpack.c.bf16 %v1250, %v1248
    %v2201 = vpack.c.bf16 %v1251, %v1249
    %v2202 = vpack.c.bf16 %v1254, %v1252
    %v2203 = vpack.c.bf16 %v1255, %v1253
    %v2204 = vpack.c.bf16 %v1258, %v1256
    %v2205 = vpack.c.bf16 %v1259, %v1257
    %v2206 = vld [vmem:[#allocation5] sm:$0xff]
    %v2207 = vld [vmem:[#allocation5 + $0x8] sm:$0xff]
    %v2208 = vld [vmem:[#allocation5 + $0x10] sm:$0xff]
    %v2209 = vld [vmem:[#allocation5 + $0x18] sm:$0xff]
    %v2210 = vld [vmem:[#allocation5 + $0x20] sm:$0xff]
    %v2211 = vld [vmem:[#allocation5 + $0x28] sm:$0xff]
    %v2212 = vld [vmem:[#allocation5 + $0x30] sm:$0xff]
    %v2213 = vld [vmem:[#allocation5 + $0x38] sm:$0xff]
    %v2214 = vld [vmem:[#allocation5 + $0x40] sm:$0xff]
    %v2215 = vld [vmem:[#allocation5 + $0x48] sm:$0xff]
    %v2216 = vld [vmem:[#allocation5 + $0x50] sm:$0xff]
    %v2217 = vld [vmem:[#allocation5 + $0x58] sm:$0xff]
    %v2218 = vld [vmem:[#allocation5 + $0x60] sm:$0xff]
    %v2219 = vld [vmem:[#allocation5 + $0x68] sm:$0xff]
    %v2220 = vld [vmem:[#allocation5 + $0x70] sm:$0xff]
    %v2221 = vld [vmem:[#allocation5 + $0x78] sm:$0xff]
    %v2222 = vld [vmem:[#allocation5 + $0x80] sm:$0xff]
    %v2223 = vld [vmem:[#allocation5 + $0x88] sm:$0xff]
    %v2224 = vld [vmem:[#allocation5 + $0x90] sm:$0xff]
    %v2225 = vld [vmem:[#allocation5 + $0x98] sm:$0xff]
    %v2226 = vld [vmem:[#allocation5 + $0xa0] sm:$0xff]
    %v2227 = vld [vmem:[#allocation5 + $0xa8] sm:$0xff]
    %v2228 = vld [vmem:[#allocation5 + $0xb0] sm:$0xff]
    %v2229 = vld [vmem:[#allocation5 + $0xb8] sm:$0xff]
    %v2230 = vld [vmem:[#allocation5 + $0xc0] sm:$0xff]
    %v2231 = vld [vmem:[#allocation5 + $0xc8] sm:$0xff]
    %v2232 = vld [vmem:[#allocation5 + $0xd0] sm:$0xff]
    %v2233 = vld [vmem:[#allocation5 + $0xd8] sm:$0xff]
    %v2234 = vld [vmem:[#allocation5 + $0xe0] sm:$0xff]
    %v2235 = vld [vmem:[#allocation5 + $0xe8] sm:$0xff]
    %v2236 = vld [vmem:[#allocation5 + $0xf0] sm:$0xff]
    %v2237 = vld [vmem:[#allocation5 + $0xf8] sm:$0xff]
    %v2238 = vld [vmem:[#allocation7] sm:$0x3]
    %v2240 = vperm.slane %v2238, 0
    %v2241 = vperm.slane %v2238, 1
    %v2276 = vunpack.c.l.b16 %v2206
    %v2277 = vunpack.c.h.b16 %v2206
    %v2278 = vunpack.c.l.b16 %v2207
    %v2279 = vunpack.c.h.b16 %v2207
    %v2280 = vunpack.c.l.b16 %v2208
    %v2281 = vunpack.c.h.b16 %v2208
    %v2282 = vunpack.c.l.b16 %v2209
    %v2283 = vunpack.c.h.b16 %v2209
    %v2284 = vunpack.c.l.b16 %v2210
    %v2285 = vunpack.c.h.b16 %v2210
    %v2286 = vunpack.c.l.b16 %v2211
    %v2287 = vunpack.c.h.b16 %v2211
    %v2288 = vunpack.c.l.b16 %v2212
    %v2289 = vunpack.c.h.b16 %v2212
    %v2290 = vunpack.c.l.b16 %v2213
    %v2291 = vunpack.c.h.b16 %v2213
    %v2292 = vunpack.c.l.b16 %v2214
    %v2293 = vunpack.c.h.b16 %v2214
    %v2294 = vunpack.c.l.b16 %v2215
    %v2295 = vunpack.c.h.b16 %v2215
    %v2296 = vunpack.c.l.b16 %v2216
    %v2297 = vunpack.c.h.b16 %v2216
    %v2298 = vunpack.c.l.b16 %v2217
    %v2299 = vunpack.c.h.b16 %v2217
    %v2300 = vunpack.c.l.b16 %v2218
    %v2301 = vunpack.c.h.b16 %v2218
    %v2302 = vunpack.c.l.b16 %v2219
    %v2303 = vunpack.c.h.b16 %v2219
    %v2304 = vunpack.c.l.b16 %v2220
    %v2305 = vunpack.c.h.b16 %v2220
    %v2306 = vunpack.c.l.b16 %v2221
    %v2307 = vunpack.c.h.b16 %v2221
    %v2308 = vunpack.c.l.b16 %v2222
    %v2309 = vunpack.c.h.b16 %v2222
    %v2310 = vunpack.c.l.b16 %v2223
    %v2311 = vunpack.c.h.b16 %v2223
    %v2312 = vunpack.c.l.b16 %v2224
    %v2313 = vunpack.c.h.b16 %v2224
    %v2314 = vunpack.c.l.b16 %v2225
    %v2315 = vunpack.c.h.b16 %v2225
    %v2316 = vunpack.c.l.b16 %v2226
    %v2317 = vunpack.c.h.b16 %v2226
    %v2318 = vunpack.c.l.b16 %v2227
    %v2319 = vunpack.c.h.b16 %v2227
    %v2320 = vunpack.c.l.b16 %v2228
    %v2321 = vunpack.c.h.b16 %v2228
    %v2322 = vunpack.c.l.b16 %v2229
    %v2323 = vunpack.c.h.b16 %v2229
    %v2324 = vunpack.c.l.b16 %v2230
    %v2325 = vunpack.c.h.b16 %v2230
    %v2326 = vunpack.c.l.b16 %v2231
    %v2327 = vunpack.c.h.b16 %v2231
    %v2328 = vunpack.c.l.b16 %v2232
    %v2329 = vunpack.c.h.b16 %v2232
    %v2330 = vunpack.c.l.b16 %v2233
    %v2331 = vunpack.c.h.b16 %v2233
    %v2332 = vunpack.c.l.b16 %v2234
    %v2333 = vunpack.c.h.b16 %v2234
    %v2334 = vunpack.c.l.b16 %v2235
    %v2335 = vunpack.c.h.b16 %v2235
    %v2336 = vunpack.c.l.b16 %v2236
    %v2337 = vunpack.c.h.b16 %v2236
    %v2338 = vunpack.c.l.b16 %v2237
    %v2339 = vunpack.c.h.b16 %v2237
    %v2340 = vpack.c.b16 %v2278, %v2276
    %v2341 = vpack.c.b16 %v2279, %v2277
    %v2342 = vpack.c.b16 %v2282, %v2280
    %v2343 = vpack.c.b16 %v2283, %v2281
    %v2344 = vpack.c.b16 %v2286, %v2284
    %v2345 = vpack.c.b16 %v2287, %v2285
    %v2346 = vpack.c.b16 %v2290, %v2288
    %v2347 = vpack.c.b16 %v2291, %v2289
    %v2348 = vpack.c.b16 %v2294, %v2292
    %v2349 = vpack.c.b16 %v2295, %v2293
    %v2350 = vpack.c.b16 %v2298, %v2296
    %v2351 = vpack.c.b16 %v2299, %v2297
    %v2352 = vpack.c.b16 %v2302, %v2300
    %v2353 = vpack.c.b16 %v2303, %v2301
    %v2354 = vpack.c.b16 %v2306, %v2304
    %v2355 = vpack.c.b16 %v2307, %v2305
    %v2356 = vpack.c.b16 %v2310, %v2308
    %v2357 = vpack.c.b16 %v2311, %v2309
    %v2358 = vpack.c.b16 %v2314, %v2312
    %v2359 = vpack.c.b16 %v2315, %v2313
    %v2360 = vpack.c.b16 %v2318, %v2316
    %v2361 = vpack.c.b16 %v2319, %v2317
    %v2362 = vpack.c.b16 %v2322, %v2320
    %v2363 = vpack.c.b16 %v2323, %v2321
    %v2364 = vpack.c.b16 %v2326, %v2324
    %v2365 = vpack.c.b16 %v2327, %v2325
    %v2366 = vpack.c.b16 %v2330, %v2328
    %v2367 = vpack.c.b16 %v2331, %v2329
    %v2368 = vpack.c.b16 %v2334, %v2332
    %v2369 = vpack.c.b16 %v2335, %v2333
    %v2370 = vpack.c.b16 %v2338, %v2336
    %v2371 = vpack.c.b16 %v2339, %v2337
    %2404 = vmatpush.bf16.msra.mxu0 %v2354
    %2405 = vmatpush.bf16.msra.mxu0 %v2352
    %2406 = vmatpush.bf16.msra.mxu0 %v2350
    %2407 = vmatpush.bf16.msra.mxu0 %v2348
    %2408 = vmatpush.bf16.msra.mxu0 %v2346
    %2409 = vmatpush.bf16.msra.mxu0 %v2344
    %2410 = vmatpush.bf16.msra.mxu0 %v2342
    %2411 = vmatpush.bf16.msra.mxu0 %v2340
    %2412 = vmatmul.bf16.gmra.mxu0 %v2194
    %v2413 = vpop.f32.mrf.mxu0
    %v2414 = vadd.f32 %v2240, %v2413
    %v2415 = vpop.f32.mrf.mxu0
    %v2416 = vadd.f32 %v2240, %v2415
    %2417 = vmatmul.bf16.gmra.mxu0 %v2196
    %v2418 = vpop.f32.mrf.mxu0
    %v2419 = vadd.f32 %v2240, %v2418
    %v2420 = vpop.f32.mrf.mxu0
    %v2421 = vadd.f32 %v2240, %v2420
    %2422 = vmatmul.bf16.gmra.mxu0 %v2198
    %v2423 = vpop.f32.mrf.mxu0
    %v2424 = vadd.f32 %v2240, %v2423
    %v2425 = vpop.f32.mrf.mxu0
    %v2426 = vadd.f32 %v2240, %v2425
    %2427 = vmatmul.bf16.gmra.mxu0 %v2200
    %v2428 = vpop.f32.mrf.mxu0
    %v2429 = vadd.f32 %v2240, %v2428
    %v2430 = vpop.f32.mrf.mxu0
    %v2431 = vadd.f32 %v2240, %v2430
    %2432 = vmatmul.bf16.gmra.mxu0 %v2202
    %v2433 = vpop.f32.mrf.mxu0
    %v2434 = vadd.f32 %v2240, %v2433
    %v2435 = vpop.f32.mrf.mxu0
    %v2436 = vadd.f32 %v2240, %v2435
    %2437 = vmatmul.bf16.gmra.mxu0 %v2204
    %v2438 = vpop.f32.mrf.mxu0
    %v2439 = vadd.f32 %v2240, %v2438
    %v2440 = vpop.f32.mrf.mxu0
    %v2441 = vadd.f32 %v2240, %v2440
    %2442 = vdwg.mxu0
    %2443 = vmatpush.bf16.msra.mxu0 %v2370
    %2444 = vmatpush.bf16.msra.mxu0 %v2368
    %2445 = vmatpush.bf16.msra.mxu0 %v2366
    %2446 = vmatpush.bf16.msra.mxu0 %v2364
    %2447 = vmatpush.bf16.msra.mxu0 %v2362
    %2448 = vmatpush.bf16.msra.mxu0 %v2360
    %2449 = vmatpush.bf16.msra.mxu0 %v2358
    %2450 = vmatpush.bf16.msra.mxu0 %v2356
    %2451 = vmatmul.bf16.gmra.mxu0 %v2195
    %v2452 = vpop.f32.mrf.mxu0
    %v2453 = vadd.f32 %v2414, %v2452
    %v2454 = vpop.f32.mrf.mxu0
    %v2455 = vadd.f32 %v2416, %v2454
    %2456 = vmatmul.bf16.gmra.mxu0 %v2197
    %v2457 = vpop.f32.mrf.mxu0
    %v2458 = vadd.f32 %v2419, %v2457
    %v2459 = vpop.f32.mrf.mxu0
    %v2460 = vadd.f32 %v2421, %v2459
    %2461 = vmatmul.bf16.gmra.mxu0 %v2199
    %v2462 = vpop.f32.mrf.mxu0
    %v2463 = vadd.f32 %v2424, %v2462
    %v2464 = vpop.f32.mrf.mxu0
    %v2465 = vadd.f32 %v2426, %v2464
    %2466 = vmatmul.bf16.gmra.mxu0 %v2201
    %v2467 = vpop.f32.mrf.mxu0
    %v2468 = vadd.f32 %v2429, %v2467
    %v2469 = vpop.f32.mrf.mxu0
    %v2470 = vadd.f32 %v2431, %v2469
    %2471 = vmatmul.bf16.gmra.mxu0 %v2203
    %v2472 = vpop.f32.mrf.mxu0
    %v2473 = vadd.f32 %v2434, %v2472
    %v2474 = vpop.f32.mrf.mxu0
    %v2475 = vadd.f32 %v2436, %v2474
    %2476 = vmatmul.bf16.gmra.mxu0 %v2205
    %v2477 = vpop.f32.mrf.mxu0
    %v2478 = vadd.f32 %v2439, %v2477
    %v2479 = vpop.f32.mrf.mxu0
    %v2480 = vadd.f32 %v2441, %v2479
    %2481 = vdwg.mxu0
    %2482 = vmatpush.bf16.msra.mxu0 %v2355
    %2483 = vmatpush.bf16.msra.mxu0 %v2353
    %2484 = vmatpush.bf16.msra.mxu0 %v2351
    %2485 = vmatpush.bf16.msra.mxu0 %v2349
    %2486 = vmatpush.bf16.msra.mxu0 %v2347
    %2487 = vmatpush.bf16.msra.mxu0 %v2345
    %2488 = vmatpush.bf16.msra.mxu0 %v2343
    %2489 = vmatpush.bf16.msra.mxu0 %v2341
    %2490 = vmatmul.bf16.gmra.mxu0 %v2194
    %v2491 = vpop.f32.mrf.mxu0
    %v2492 = vadd.f32 %v2241, %v2491
    %v2493 = vpop.f32.mrf.mxu0
    %v2494 = vadd.f32 %v2241, %v2493
    %2495 = vmatmul.bf16.gmra.mxu0 %v2196
    %v2496 = vpop.f32.mrf.mxu0
    %v2497 = vadd.f32 %v2241, %v2496
    %v2498 = vpop.f32.mrf.mxu0
    %v2499 = vadd.f32 %v2241, %v2498
    %2500 = vmatmul.bf16.gmra.mxu0 %v2198
    %v2501 = vpop.f32.mrf.mxu0
    %v2502 = vadd.f32 %v2241, %v2501
    %v2503 = vpop.f32.mrf.mxu0
    %v2504 = vadd.f32 %v2241, %v2503
    %2505 = vmatmul.bf16.gmra.mxu0 %v2200
    %v2506 = vpop.f32.mrf.mxu0
    %v2507 = vadd.f32 %v2241, %v2506
    %v2508 = vpop.f32.mrf.mxu0
    %v2509 = vadd.f32 %v2241, %v2508
    %2510 = vmatmul.bf16.gmra.mxu0 %v2202
    %v2511 = vpop.f32.mrf.mxu0
    %v2512 = vadd.f32 %v2241, %v2511
    %v2513 = vpop.f32.mrf.mxu0
    %v2514 = vadd.f32 %v2241, %v2513
    %2515 = vmatmul.bf16.gmra.mxu0 %v2204
    %v2516 = vpop.f32.mrf.mxu0
    %v2517 = vadd.f32 %v2241, %v2516
    %v2518 = vpop.f32.mrf.mxu0
    %v2519 = vadd.f32 %v2241, %v2518
    %2520 = vdwg.mxu0
    %2521 = vmatpush.bf16.msra.mxu0 %v2371
    %2522 = vmatpush.bf16.msra.mxu0 %v2369
    %2523 = vmatpush.bf16.msra.mxu0 %v2367
    %2524 = vmatpush.bf16.msra.mxu0 %v2365
    %2525 = vmatpush.bf16.msra.mxu0 %v2363
    %2526 = vmatpush.bf16.msra.mxu0 %v2361
    %2527 = vmatpush.bf16.msra.mxu0 %v2359
    %2528 = vmatpush.bf16.msra.mxu0 %v2357
    %2529 = vmatmul.bf16.gmra.mxu0 %v2195
    %v2530 = vpop.f32.mrf.mxu0
    %v2531 = vadd.f32 %v2492, %v2530
    %v2532 = vpop.f32.mrf.mxu0
    %v2533 = vadd.f32 %v2494, %v2532
    %2534 = vmatmul.bf16.gmra.mxu0 %v2197
    %v2535 = vpop.f32.mrf.mxu0
    %v2536 = vadd.f32 %v2497, %v2535
    %v2537 = vpop.f32.mrf.mxu0
    %v2538 = vadd.f32 %v2499, %v2537
    %2539 = vmatmul.bf16.gmra.mxu0 %v2199
    %v2540 = vpop.f32.mrf.mxu0
    %v2541 = vadd.f32 %v2502, %v2540
    %v2542 = vpop.f32.mrf.mxu0
    %v2543 = vadd.f32 %v2504, %v2542
    %2544 = vmatmul.bf16.gmra.mxu0 %v2201
    %v2545 = vpop.f32.mrf.mxu0
    %v2546 = vadd.f32 %v2507, %v2545
    %v2547 = vpop.f32.mrf.mxu0
    %v2548 = vadd.f32 %v2509, %v2547
    %2549 = vmatmul.bf16.gmra.mxu0 %v2203
    %v2550 = vpop.f32.mrf.mxu0
    %v2551 = vadd.f32 %v2512, %v2550
    %v2552 = vpop.f32.mrf.mxu0
    %v2553 = vadd.f32 %v2514, %v2552
    %2554 = vmatmul.bf16.gmra.mxu0 %v2205
    %v2555 = vpop.f32.mrf.mxu0
    %v2556 = vadd.f32 %v2517, %v2555
    %v2557 = vpop.f32.mrf.mxu0
    %v2558 = vadd.f32 %v2519, %v2557
    %2559 = vdwg.mxu0
    %v2560 = vtanh.pop %v2453
    %v2561 = vtanh.pop %v2531
    %v2562 = vtanh.pop %v2455
    %v2563 = vtanh.pop %v2533
    %v2564 = vtanh.pop %v2458
    %v2565 = vtanh.pop %v2536
    %v2566 = vtanh.pop %v2460
    %v2567 = vtanh.pop %v2538
    %v2568 = vtanh.pop %v2463
    %v2569 = vtanh.pop %v2541
    %v2570 = vtanh.pop %v2465
    %v2571 = vtanh.pop %v2543
    %v2572 = vtanh.pop %v2468
    %v2573 = vtanh.pop %v2546
    %v2574 = vtanh.pop %v2470
    %v2575 = vtanh.pop %v2548
    %v2576 = vtanh.pop %v2473
    %v2577 = vtanh.pop %v2551
    %v2578 = vtanh.pop %v2475
    %v2579 = vtanh.pop %v2553
    %v2580 = vtanh.pop %v2478
    %v2581 = vtanh.pop %v2556
    %v2582 = vtanh.pop %v2480
    %v2583 = vtanh.pop %v2558
    %v2584 = vpack.c.bf16 %v2562, %v2560
    %v2585 = vpack.c.bf16 %v2563, %v2561
    %v2586 = vpack.c.bf16 %v2566, %v2564
    %v2587 = vpack.c.bf16 %v2567, %v2565
    %v2588 = vpack.c.bf16 %v2570, %v2568
    %v2589 = vpack.c.bf16 %v2571, %v2569
    %v2590 = vpack.c.bf16 %v2574, %v2572
    %v2591 = vpack.c.bf16 %v2575, %v2573
    %v2592 = vpack.c.bf16 %v2578, %v2576
    %v2593 = vpack.c.bf16 %v2579, %v2577
    %v2594 = vpack.c.bf16 %v2582, %v2580
    %v2595 = vpack.c.bf16 %v2583, %v2581
    %v2596 = vld [vmem:[#allocation8] sm:$0xff]
    %v2597 = vld [vmem:[#allocation8 + $0x8] sm:$0xff]
    %v2598 = vld [vmem:[#allocation8 + $0x10] sm:$0xff]
    %v2599 = vld [vmem:[#allocation8 + $0x18] sm:$0xff]
    %v2600 = vld [vmem:[#allocation8 + $0x20] sm:$0xff]
    %v2601 = vld [vmem:[#allocation8 + $0x28] sm:$0xff]
    %v2602 = vld [vmem:[#allocation8 + $0x30] sm:$0xff]
    %v2603 = vld [vmem:[#allocation8 + $0x38] sm:$0xff]
    %v2604 = vld [vmem:[#allocation8 + $0x40] sm:$0xff]
    %v2605 = vld [vmem:[#allocation8 + $0x48] sm:$0xff]
    %v2606 = vld [vmem:[#allocation8 + $0x50] sm:$0xff]
    %v2607 = vld [vmem:[#allocation8 + $0x58] sm:$0xff]
    %v2608 = vld [vmem:[#allocation8 + $0x60] sm:$0xff]
    %v2609 = vld [vmem:[#allocation8 + $0x68] sm:$0xff]
    %v2610 = vld [vmem:[#allocation8 + $0x70] sm:$0xff]
    %v2611 = vld [vmem:[#allocation8 + $0x78] sm:$0xff]
    %v2612 = vld [vmem:[#allocation8 + $0x80] sm:$0xff]
    %v2613 = vld [vmem:[#allocation8 + $0x88] sm:$0xff]
    %v2614 = vld [vmem:[#allocation8 + $0x90] sm:$0xff]
    %v2615 = vld [vmem:[#allocation8 + $0x98] sm:$0xff]
    %v2616 = vld [vmem:[#allocation8 + $0xa0] sm:$0xff]
    %v2617 = vld [vmem:[#allocation8 + $0xa8] sm:$0xff]
    %v2618 = vld [vmem:[#allocation8 + $0xb0] sm:$0xff]
    %v2619 = vld [vmem:[#allocation8 + $0xb8] sm:$0xff]
    %v2620 = vld [vmem:[#allocation8 + $0xc0] sm:$0xff]
    %v2621 = vld [vmem:[#allocation8 + $0xc8] sm:$0xff]
    %v2622 = vld [vmem:[#allocation8 + $0xd0] sm:$0xff]
    %v2623 = vld [vmem:[#allocation8 + $0xd8] sm:$0xff]
    %v2624 = vld [vmem:[#allocation8 + $0xe0] sm:$0xff]
    %v2625 = vld [vmem:[#allocation8 + $0xe8] sm:$0xff]
    %v2626 = vld [vmem:[#allocation8 + $0xf0] sm:$0xff]
    %v2627 = vld [vmem:[#allocation8 + $0xf8] sm:$0xff]
    %v2628 = vld [vmem:[#allocation10] sm:$0x3]
    %v2630 = vperm.slane %v2628, 0
    %v2631 = vperm.slane %v2628, 1
    %v2666 = vunpack.c.l.b16 %v2596
    %v2667 = vunpack.c.h.b16 %v2596
    %v2668 = vunpack.c.l.b16 %v2597
    %v2669 = vunpack.c.h.b16 %v2597
    %v2670 = vunpack.c.l.b16 %v2598
    %v2671 = vunpack.c.h.b16 %v2598
    %v2672 = vunpack.c.l.b16 %v2599
    %v2673 = vunpack.c.h.b16 %v2599
    %v2674 = vunpack.c.l.b16 %v2600
    %v2675 = vunpack.c.h.b16 %v2600
    %v2676 = vunpack.c.l.b16 %v2601
    %v2677 = vunpack.c.h.b16 %v2601
    %v2678 = vunpack.c.l.b16 %v2602
    %v2679 = vunpack.c.h.b16 %v2602
    %v2680 = vunpack.c.l.b16 %v2603
    %v2681 = vunpack.c.h.b16 %v2603
    %v2682 = vunpack.c.l.b16 %v2604
    %v2683 = vunpack.c.h.b16 %v2604
    %v2684 = vunpack.c.l.b16 %v2605
    %v2685 = vunpack.c.h.b16 %v2605
    %v2686 = vunpack.c.l.b16 %v2606
    %v2687 = vunpack.c.h.b16 %v2606
    %v2688 = vunpack.c.l.b16 %v2607
    %v2689 = vunpack.c.h.b16 %v2607
    %v2690 = vunpack.c.l.b16 %v2608
    %v2691 = vunpack.c.h.b16 %v2608
    %v2692 = vunpack.c.l.b16 %v2609
    %v2693 = vunpack.c.h.b16 %v2609
    %v2694 = vunpack.c.l.b16 %v2610
    %v2695 = vunpack.c.h.b16 %v2610
    %v2696 = vunpack.c.l.b16 %v2611
    %v2697 = vunpack.c.h.b16 %v2611
    %v2698 = vunpack.c.l.b16 %v2612
    %v2699 = vunpack.c.h.b16 %v2612
    %v2700 = vunpack.c.l.b16 %v2613
    %v2701 = vunpack.c.h.b16 %v2613
    %v2702 = vunpack.c.l.b16 %v2614
    %v2703 = vunpack.c.h.b16 %v2614
    %v2704 = vunpack.c.l.b16 %v2615
    %v2705 = vunpack.c.h.b16 %v2615
    %v2706 = vunpack.c.l.b16 %v2616
    %v2707 = vunpack.c.h.b16 %v2616
    %v2708 = vunpack.c.l.b16 %v2617
    %v2709 = vunpack.c.h.b16 %v2617
    %v2710 = vunpack.c.l.b16 %v2618
    %v2711 = vunpack.c.h.b16 %v2618
    %v2712 = vunpack.c.l.b16 %v2619
    %v2713 = vunpack.c.h.b16 %v2619
    %v2714 = vunpack.c.l.b16 %v2620
    %v2715 = vunpack.c.h.b16 %v2620
    %v2716 = vunpack.c.l.b16 %v2621
    %v2717 = vunpack.c.h.b16 %v2621
    %v2718 = vunpack.c.l.b16 %v2622
    %v2719 = vunpack.c.h.b16 %v2622
    %v2720 = vunpack.c.l.b16 %v2623
    %v2721 = vunpack.c.h.b16 %v2623
    %v2722 = vunpack.c.l.b16 %v2624
    %v2723 = vunpack.c.h.b16 %v2624
    %v2724 = vunpack.c.l.b16 %v2625
    %v2725 = vunpack.c.h.b16 %v2625
    %v2726 = vunpack.c.l.b16 %v2626
    %v2727 = vunpack.c.h.b16 %v2626
    %v2728 = vunpack.c.l.b16 %v2627
    %v2729 = vunpack.c.h.b16 %v2627
    %v2730 = vpack.c.b16 %v2668, %v2666
    %v2731 = vpack.c.b16 %v2669, %v2667
    %v2732 = vpack.c.b16 %v2672, %v2670
    %v2733 = vpack.c.b16 %v2673, %v2671
    %v2734 = vpack.c.b16 %v2676, %v2674
    %v2735 = vpack.c.b16 %v2677, %v2675
    %v2736 = vpack.c.b16 %v2680, %v2678
    %v2737 = vpack.c.b16 %v2681, %v2679
    %v2738 = vpack.c.b16 %v2684, %v2682
    %v2739 = vpack.c.b16 %v2685, %v2683
    %v2740 = vpack.c.b16 %v2688, %v2686
    %v2741 = vpack.c.b16 %v2689, %v2687
    %v2742 = vpack.c.b16 %v2692, %v2690
    %v2743 = vpack.c.b16 %v2693, %v2691
    %v2744 = vpack.c.b16 %v2696, %v2694
    %v2745 = vpack.c.b16 %v2697, %v2695
    %v2746 = vpack.c.b16 %v2700, %v2698
    %v2747 = vpack.c.b16 %v2701, %v2699
    %v2748 = vpack.c.b16 %v2704, %v2702
    %v2749 = vpack.c.b16 %v2705, %v2703
    %v2750 = vpack.c.b16 %v2708, %v2706
    %v2751 = vpack.c.b16 %v2709, %v2707
    %v2752 = vpack.c.b16 %v2712, %v2710
    %v2753 = vpack.c.b16 %v2713, %v2711
    %v2754 = vpack.c.b16 %v2716, %v2714
    %v2755 = vpack.c.b16 %v2717, %v2715
    %v2756 = vpack.c.b16 %v2720, %v2718
    %v2757 = vpack.c.b16 %v2721, %v2719
    %v2758 = vpack.c.b16 %v2724, %v2722
    %v2759 = vpack.c.b16 %v2725, %v2723
    %v2760 = vpack.c.b16 %v2728, %v2726
    %v2761 = vpack.c.b16 %v2729, %v2727
    %2794 = vmatpush.bf16.msra.mxu0 %v2744
    %2795 = vmatpush.bf16.msra.mxu0 %v2742
    %2796 = vmatpush.bf16.msra.mxu0 %v2740
    %2797 = vmatpush.bf16.msra.mxu0 %v2738
    %2798 = vmatpush.bf16.msra.mxu0 %v2736
    %2799 = vmatpush.bf16.msra.mxu0 %v2734
    %2800 = vmatpush.bf16.msra.mxu0 %v2732
    %2801 = vmatpush.bf16.msra.mxu0 %v2730
    %2802 = vmatmul.bf16.gmra.mxu0 %v2584
    %v2803 = vpop.f32.mrf.mxu0
    %v2804 = vadd.f32 %v2630, %v2803
    %v2805 = vpop.f32.mrf.mxu0
    %v2806 = vadd.f32 %v2630, %v2805
    %2807 = vmatmul.bf16.gmra.mxu0 %v2586
    %v2808 = vpop.f32.mrf.mxu0
    %v2809 = vadd.f32 %v2630, %v2808
    %v2810 = vpop.f32.mrf.mxu0
    %v2811 = vadd.f32 %v2630, %v2810
    %2812 = vmatmul.bf16.gmra.mxu0 %v2588
    %v2813 = vpop.f32.mrf.mxu0
    %v2814 = vadd.f32 %v2630, %v2813
    %v2815 = vpop.f32.mrf.mxu0
    %v2816 = vadd.f32 %v2630, %v2815
    %2817 = vmatmul.bf16.gmra.mxu0 %v2590
    %v2818 = vpop.f32.mrf.mxu0
    %v2819 = vadd.f32 %v2630, %v2818
    %v2820 = vpop.f32.mrf.mxu0
    %v2821 = vadd.f32 %v2630, %v2820
    %2822 = vmatmul.bf16.gmra.mxu0 %v2592
    %v2823 = vpop.f32.mrf.mxu0
    %v2824 = vadd.f32 %v2630, %v2823
    %v2825 = vpop.f32.mrf.mxu0
    %v2826 = vadd.f32 %v2630, %v2825
    %2827 = vmatmul.bf16.gmra.mxu0 %v2594
    %v2828 = vpop.f32.mrf.mxu0
    %v2829 = vadd.f32 %v2630, %v2828
    %v2830 = vpop.f32.mrf.mxu0
    %v2831 = vadd.f32 %v2630, %v2830
    %2832 = vdwg.mxu0
    %2833 = vmatpush.bf16.msra.mxu0 %v2760
    %2834 = vmatpush.bf16.msra.mxu0 %v2758
    %2835 = vmatpush.bf16.msra.mxu0 %v2756
    %2836 = vmatpush.bf16.msra.mxu0 %v2754
    %2837 = vmatpush.bf16.msra.mxu0 %v2752
    %2838 = vmatpush.bf16.msra.mxu0 %v2750
    %2839 = vmatpush.bf16.msra.mxu0 %v2748
    %2840 = vmatpush.bf16.msra.mxu0 %v2746
    %2841 = vmatmul.bf16.gmra.mxu0 %v2585
    %v2842 = vpop.f32.mrf.mxu0
    %v2843 = vadd.f32 %v2804, %v2842
    %v2844 = vpop.f32.mrf.mxu0
    %v2845 = vadd.f32 %v2806, %v2844
    %2846 = vmatmul.bf16.gmra.mxu0 %v2587
    %v2847 = vpop.f32.mrf.mxu0
    %v2848 = vadd.f32 %v2809, %v2847
    %v2849 = vpop.f32.mrf.mxu0
    %v2850 = vadd.f32 %v2811, %v2849
    %2851 = vmatmul.bf16.gmra.mxu0 %v2589
    %v2852 = vpop.f32.mrf.mxu0
    %v2853 = vadd.f32 %v2814, %v2852
    %v2854 = vpop.f32.mrf.mxu0
    %v2855 = vadd.f32 %v2816, %v2854
    %2856 = vmatmul.bf16.gmra.mxu0 %v2591
    %v2857 = vpop.f32.mrf.mxu0
    %v2858 = vadd.f32 %v2819, %v2857
    %v2859 = vpop.f32.mrf.mxu0
    %v2860 = vadd.f32 %v2821, %v2859
    %2861 = vmatmul.bf16.gmra.mxu0 %v2593
    %v2862 = vpop.f32.mrf.mxu0
    %v2863 = vadd.f32 %v2824, %v2862
    %v2864 = vpop.f32.mrf.mxu0
    %v2865 = vadd.f32 %v2826, %v2864
    %2866 = vmatmul.bf16.gmra.mxu0 %v2595
    %v2867 = vpop.f32.mrf.mxu0
    %v2868 = vadd.f32 %v2829, %v2867
    %v2869 = vpop.f32.mrf.mxu0
    %v2870 = vadd.f32 %v2831, %v2869
    %2871 = vdwg.mxu0
    %2872 = vmatpush.bf16.msra.mxu0 %v2745
    %2873 = vmatpush.bf16.msra.mxu0 %v2743
    %2874 = vmatpush.bf16.msra.mxu0 %v2741
    %2875 = vmatpush.bf16.msra.mxu0 %v2739
    %2876 = vmatpush.bf16.msra.mxu0 %v2737
    %2877 = vmatpush.bf16.msra.mxu0 %v2735
    %2878 = vmatpush.bf16.msra.mxu0 %v2733
    %2879 = vmatpush.bf16.msra.mxu0 %v2731
    %2880 = vmatmul.bf16.gmra.mxu0 %v2584
    %v2881 = vpop.f32.mrf.mxu0
    %v2882 = vadd.f32 %v2631, %v2881
    %v2883 = vpop.f32.mrf.mxu0
    %v2884 = vadd.f32 %v2631, %v2883
    %2885 = vmatmul.bf16.gmra.mxu0 %v2586
    %v2886 = vpop.f32.mrf.mxu0
    %v2887 = vadd.f32 %v2631, %v2886
    %v2888 = vpop.f32.mrf.mxu0
    %v2889 = vadd.f32 %v2631, %v2888
    %2890 = vmatmul.bf16.gmra.mxu0 %v2588
    %v2891 = vpop.f32.mrf.mxu0
    %v2892 = vadd.f32 %v2631, %v2891
    %v2893 = vpop.f32.mrf.mxu0
    %v2894 = vadd.f32 %v2631, %v2893
    %2895 = vmatmul.bf16.gmra.mxu0 %v2590
    %v2896 = vpop.f32.mrf.mxu0
    %v2897 = vadd.f32 %v2631, %v2896
    %v2898 = vpop.f32.mrf.mxu0
    %v2899 = vadd.f32 %v2631, %v2898
    %2900 = vmatmul.bf16.gmra.mxu0 %v2592
    %v2901 = vpop.f32.mrf.mxu0
    %v2902 = vadd.f32 %v2631, %v2901
    %v2903 = vpop.f32.mrf.mxu0
    %v2904 = vadd.f32 %v2631, %v2903
    %2905 = vmatmul.bf16.gmra.mxu0 %v2594
    %v2906 = vpop.f32.mrf.mxu0
    %v2907 = vadd.f32 %v2631, %v2906
    %v2908 = vpop.f32.mrf.mxu0
    %v2909 = vadd.f32 %v2631, %v2908
    %2910 = vdwg.mxu0
    %2911 = vmatpush.bf16.msra.mxu0 %v2761
    %2912 = vmatpush.bf16.msra.mxu0 %v2759
    %2913 = vmatpush.bf16.msra.mxu0 %v2757
    %2914 = vmatpush.bf16.msra.mxu0 %v2755
    %2915 = vmatpush.bf16.msra.mxu0 %v2753
    %2916 = vmatpush.bf16.msra.mxu0 %v2751
    %2917 = vmatpush.bf16.msra.mxu0 %v2749
    %2918 = vmatpush.bf16.msra.mxu0 %v2747
    %2919 = vmatmul.bf16.gmra.mxu0 %v2585
    %v2920 = vpop.f32.mrf.mxu0
    %v2921 = vadd.f32 %v2882, %v2920
    %v2922 = vpop.f32.mrf.mxu0
    %v2923 = vadd.f32 %v2884, %v2922
    %2924 = vmatmul.bf16.gmra.mxu0 %v2587
    %v2925 = vpop.f32.mrf.mxu0
    %v2926 = vadd.f32 %v2887, %v2925
    %v2927 = vpop.f32.mrf.mxu0
    %v2928 = vadd.f32 %v2889, %v2927
    %2929 = vmatmul.bf16.gmra.mxu0 %v2589
    %v2930 = vpop.f32.mrf.mxu0
    %v2931 = vadd.f32 %v2892, %v2930
    %v2932 = vpop.f32.mrf.mxu0
    %v2933 = vadd.f32 %v2894, %v2932
    %2934 = vmatmul.bf16.gmra.mxu0 %v2591
    %v2935 = vpop.f32.mrf.mxu0
    %v2936 = vadd.f32 %v2897, %v2935
    %v2937 = vpop.f32.mrf.mxu0
    %v2938 = vadd.f32 %v2899, %v2937
    %2939 = vmatmul.bf16.gmra.mxu0 %v2593
    %v2940 = vpop.f32.mrf.mxu0
    %v2941 = vadd.f32 %v2902, %v2940
    %v2942 = vpop.f32.mrf.mxu0
    %v2943 = vadd.f32 %v2904, %v2942
    %2944 = vmatmul.bf16.gmra.mxu0 %v2595
    %v2945 = vpop.f32.mrf.mxu0
    %v2946 = vadd.f32 %v2907, %v2945
    %v2947 = vpop.f32.mrf.mxu0
    %v2948 = vadd.f32 %v2909, %v2947
    %2949 = vdwg.mxu0
    %v2950 = vtanh.pop %v2843
    %v2951 = vtanh.pop %v2921
    %v2952 = vtanh.pop %v2845
    %v2953 = vtanh.pop %v2923
    %v2954 = vtanh.pop %v2848
    %v2955 = vtanh.pop %v2926
    %v2956 = vtanh.pop %v2850
    %v2957 = vtanh.pop %v2928
    %v2958 = vtanh.pop %v2853
    %v2959 = vtanh.pop %v2931
    %v2960 = vtanh.pop %v2855
    %v2961 = vtanh.pop %v2933
    %v2962 = vtanh.pop %v2858
    %v2963 = vtanh.pop %v2936
    %v2964 = vtanh.pop %v2860
    %v2965 = vtanh.pop %v2938
    %v2966 = vtanh.pop %v2863
    %v2967 = vtanh.pop %v2941
    %v2968 = vtanh.pop %v2865
    %v2969 = vtanh.pop %v2943
    %v2970 = vtanh.pop %v2868
    %v2971 = vtanh.pop %v2946
    %v2972 = vtanh.pop %v2870
    %v2973 = vtanh.pop %v2948
    %v2974 = vld [vmem:[%s27] sm:$0xff]
    %v2975 = vld [vmem:[%s27 + $0x8] sm:$0xff]
    %v2976 = vld [vmem:[%s27 + $0x10] sm:$0x77]
    %v2977 = vld [vmem:[#allocation17] sm:$0x3]
    %v2979 = vperm.slane %v2977, 0
    %v2980 = vperm.slane %v2977, 1
    %v2986 = vunpack.c.l.b16 %v2974
    %v2987 = vunpack.c.h.b16 %v2974
    %v2988 = vunpack.c.l.b16 %v2975
    %v2989 = vunpack.c.h.b16 %v2975
    %v2990 = vunpack.c.l.b16 %v2976
    %v2991 = vunpack.c.h.b16 %v2976
    %v2992 = vpack.c.b16 %v2988, %v2986
    %v2993 = vpack.c.b16 %v2989, %v2987
    %v2994 = vpack.c.b16 %v2990, %v2990
    %v2995 = vpack.c.b16 %v2991, %v2991
    %v2999 = vand.u32 %v2994, %v681
    %v3002 = vand.u32 %v2995, %v681
    %3004 = vmatpush.bf16.msra.mxu0 0
    %3005 = vmatpush.bf16.msra.mxu0 0
    %3006 = vmatpush.bf16.msra.mxu0 0
    %3007 = vmatpush.bf16.msra.mxu0 0
    %3008 = vmatpush.bf16.msra.mxu0 0
    %3009 = vmatpush.bf16.msra.mxu0 0
    %3010 = vmatpush.bf16.msra.mxu0 %v2999
    %3011 = vmatpush.bf16.msra.mxu0 %v2992
    %3012 = vmatmul.bf16.gmra.mxu0 %v661
    %v3013 = vpop.f32.mrf.mxu0
    %v3014 = vadd.f32 %v2979, %v3013
    %v3015 = vpop.f32.mrf.mxu0
    %v3016 = vadd.f32 %v2979, %v3015
    %3017 = vmatmul.bf16.gmra.mxu0 %v664
    %v3018 = vpop.f32.mrf.mxu0
    %v3019 = vadd.f32 %v2979, %v3018
    %v3020 = vpop.f32.mrf.mxu0
    %v3021 = vadd.f32 %v2979, %v3020
    %3022 = vmatmul.bf16.gmra.mxu0 %v667
    %v3023 = vpop.f32.mrf.mxu0
    %v3024 = vadd.f32 %v2979, %v3023
    %v3025 = vpop.f32.mrf.mxu0
    %v3026 = vadd.f32 %v2979, %v3025
    %3027 = vmatmul.bf16.gmra.mxu0 %v670
    %v3028 = vpop.f32.mrf.mxu0
    %v3029 = vadd.f32 %v2979, %v3028
    %v3030 = vpop.f32.mrf.mxu0
    %v3031 = vadd.f32 %v2979, %v3030
    %3032 = vmatmul.bf16.gmra.mxu0 %v673
    %v3033 = vpop.f32.mrf.mxu0
    %v3034 = vadd.f32 %v2979, %v3033
    %v3035 = vpop.f32.mrf.mxu0
    %v3036 = vadd.f32 %v2979, %v3035
    %3037 = vmatmul.bf16.gmra.mxu0 %v676
    %v3038 = vpop.f32.mrf.mxu0
    %v3039 = vadd.f32 %v2979, %v3038
    %v3040 = vpop.f32.mrf.mxu0
    %v3041 = vadd.f32 %v2979, %v3040
    %3042 = vdwg.mxu0
    %3043 = vmatpush.bf16.msra.mxu0 0
    %3044 = vmatpush.bf16.msra.mxu0 0
    %3045 = vmatpush.bf16.msra.mxu0 0
    %3046 = vmatpush.bf16.msra.mxu0 0
    %3047 = vmatpush.bf16.msra.mxu0 0
    %3048 = vmatpush.bf16.msra.mxu0 0
    %3049 = vmatpush.bf16.msra.mxu0 %v3002
    %3050 = vmatpush.bf16.msra.mxu0 %v2993
    %3051 = vmatmul.bf16.gmra.mxu0 %v661
    %v3052 = vpop.f32.mrf.mxu0
    %v3053 = vadd.f32 %v2980, %v3052
    %v3054 = vpop.f32.mrf.mxu0
    %v3055 = vadd.f32 %v2980, %v3054
    %3056 = vmatmul.bf16.gmra.mxu0 %v664
    %v3057 = vpop.f32.mrf.mxu0
    %v3058 = vadd.f32 %v2980, %v3057
    %v3059 = vpop.f32.mrf.mxu0
    %v3060 = vadd.f32 %v2980, %v3059
    %3061 = vmatmul.bf16.gmra.mxu0 %v667
    %v3062 = vpop.f32.mrf.mxu0
    %v3063 = vadd.f32 %v2980, %v3062
    %v3064 = vpop.f32.mrf.mxu0
    %v3065 = vadd.f32 %v2980, %v3064
    %3066 = vmatmul.bf16.gmra.mxu0 %v670
    %v3067 = vpop.f32.mrf.mxu0
    %v3068 = vadd.f32 %v2980, %v3067
    %v3069 = vpop.f32.mrf.mxu0
    %v3070 = vadd.f32 %v2980, %v3069
    %3071 = vmatmul.bf16.gmra.mxu0 %v673
    %v3072 = vpop.f32.mrf.mxu0
    %v3073 = vadd.f32 %v2980, %v3072
    %v3074 = vpop.f32.mrf.mxu0
    %v3075 = vadd.f32 %v2980, %v3074
    %3076 = vmatmul.bf16.gmra.mxu0 %v676
    %v3077 = vpop.f32.mrf.mxu0
    %v3078 = vadd.f32 %v2980, %v3077
    %v3079 = vpop.f32.mrf.mxu0
    %v3080 = vadd.f32 %v2980, %v3079
    %3081 = vdwg.mxu0
    %v3082 = vtanh.pop %v3014
    %v3083 = vtanh.pop %v3053
    %v3084 = vtanh.pop %v3016
    %v3085 = vtanh.pop %v3055
    %v3086 = vtanh.pop %v3019
    %v3087 = vtanh.pop %v3058
    %v3088 = vtanh.pop %v3021
    %v3089 = vtanh.pop %v3060
    %v3090 = vtanh.pop %v3024
    %v3091 = vtanh.pop %v3063
    %v3092 = vtanh.pop %v3026
    %v3093 = vtanh.pop %v3065
    %v3094 = vtanh.pop %v3029
    %v3095 = vtanh.pop %v3068
    %v3096 = vtanh.pop %v3031
    %v3097 = vtanh.pop %v3070
    %v3098 = vtanh.pop %v3034
    %v3099 = vtanh.pop %v3073
    %v3100 = vtanh.pop %v3036
    %v3101 = vtanh.pop %v3075
    %v3102 = vtanh.pop %v3039
    %v3103 = vtanh.pop %v3078
    %v3104 = vtanh.pop %v3041
    %v3105 = vtanh.pop %v3080
    %v3106 = vpack.c.bf16 %v3084, %v3082
    %v3107 = vpack.c.bf16 %v3085, %v3083
    %v3108 = vpack.c.bf16 %v3088, %v3086
    %v3109 = vpack.c.bf16 %v3089, %v3087
    %v3110 = vpack.c.bf16 %v3092, %v3090
    %v3111 = vpack.c.bf16 %v3093, %v3091
    %v3112 = vpack.c.bf16 %v3096, %v3094
    %v3113 = vpack.c.bf16 %v3097, %v3095
    %v3114 = vpack.c.bf16 %v3100, %v3098
    %v3115 = vpack.c.bf16 %v3101, %v3099
    %v3116 = vpack.c.bf16 %v3104, %v3102
    %v3117 = vpack.c.bf16 %v3105, %v3103
    %v3118 = vld [vmem:[#allocation19] sm:$0xff]
    %v3119 = vld [vmem:[#allocation19 + $0x8] sm:$0xff]
    %v3120 = vld [vmem:[#allocation19 + $0x10] sm:$0xff]
    %v3121 = vld [vmem:[#allocation19 + $0x18] sm:$0xff]
    %v3122 = vld [vmem:[#allocation19 + $0x20] sm:$0xff]
    %v3123 = vld [vmem:[#allocation19 + $0x28] sm:$0xff]
    %v3124 = vld [vmem:[#allocation19 + $0x30] sm:$0xff]
    %v3125 = vld [vmem:[#allocation19 + $0x38] sm:$0xff]
    %v3126 = vld [vmem:[#allocation19 + $0x40] sm:$0xff]
    %v3127 = vld [vmem:[#allocation19 + $0x48] sm:$0xff]
    %v3128 = vld [vmem:[#allocation19 + $0x50] sm:$0xff]
    %v3129 = vld [vmem:[#allocation19 + $0x58] sm:$0xff]
    %v3130 = vld [vmem:[#allocation19 + $0x60] sm:$0xff]
    %v3131 = vld [vmem:[#allocation19 + $0x68] sm:$0xff]
    %v3132 = vld [vmem:[#allocation19 + $0x70] sm:$0xff]
    %v3133 = vld [vmem:[#allocation19 + $0x78] sm:$0xff]
    %v3134 = vld [vmem:[#allocation19 + $0x80] sm:$0xff]
    %v3135 = vld [vmem:[#allocation19 + $0x88] sm:$0xff]
    %v3136 = vld [vmem:[#allocation19 + $0x90] sm:$0xff]
    %v3137 = vld [vmem:[#allocation19 + $0x98] sm:$0xff]
    %v3138 = vld [vmem:[#allocation19 + $0xa0] sm:$0xff]
    %v3139 = vld [vmem:[#allocation19 + $0xa8] sm:$0xff]
    %v3140 = vld [vmem:[#allocation19 + $0xb0] sm:$0xff]
    %v3141 = vld [vmem:[#allocation19 + $0xb8] sm:$0xff]
    %v3142 = vld [vmem:[#allocation19 + $0xc0] sm:$0xff]
    %v3143 = vld [vmem:[#allocation19 + $0xc8] sm:$0xff]
    %v3144 = vld [vmem:[#allocation19 + $0xd0] sm:$0xff]
    %v3145 = vld [vmem:[#allocation19 + $0xd8] sm:$0xff]
    %v3146 = vld [vmem:[#allocation19 + $0xe0] sm:$0xff]
    %v3147 = vld [vmem:[#allocation19 + $0xe8] sm:$0xff]
    %v3148 = vld [vmem:[#allocation19 + $0xf0] sm:$0xff]
    %v3149 = vld [vmem:[#allocation19 + $0xf8] sm:$0xff]
    %v3150 = vld [vmem:[#allocation20] sm:$0x3]
    %v3152 = vperm.slane %v3150, 0
    %v3153 = vperm.slane %v3150, 1
    %v3188 = vunpack.c.l.b16 %v3118
    %v3189 = vunpack.c.h.b16 %v3118
    %v3190 = vunpack.c.l.b16 %v3119
    %v3191 = vunpack.c.h.b16 %v3119
    %v3192 = vunpack.c.l.b16 %v3120
    %v3193 = vunpack.c.h.b16 %v3120
    %v3194 = vunpack.c.l.b16 %v3121
    %v3195 = vunpack.c.h.b16 %v3121
    %v3196 = vunpack.c.l.b16 %v3122
    %v3197 = vunpack.c.h.b16 %v3122
    %v3198 = vunpack.c.l.b16 %v3123
    %v3199 = vunpack.c.h.b16 %v3123
    %v3200 = vunpack.c.l.b16 %v3124
    %v3201 = vunpack.c.h.b16 %v3124
    %v3202 = vunpack.c.l.b16 %v3125
    %v3203 = vunpack.c.h.b16 %v3125
    %v3204 = vunpack.c.l.b16 %v3126
    %v3205 = vunpack.c.h.b16 %v3126
    %v3206 = vunpack.c.l.b16 %v3127
    %v3207 = vunpack.c.h.b16 %v3127
    %v3208 = vunpack.c.l.b16 %v3128
    %v3209 = vunpack.c.h.b16 %v3128
    %v3210 = vunpack.c.l.b16 %v3129
    %v3211 = vunpack.c.h.b16 %v3129
    %v3212 = vunpack.c.l.b16 %v3130
    %v3213 = vunpack.c.h.b16 %v3130
    %v3214 = vunpack.c.l.b16 %v3131
    %v3215 = vunpack.c.h.b16 %v3131
    %v3216 = vunpack.c.l.b16 %v3132
    %v3217 = vunpack.c.h.b16 %v3132
    %v3218 = vunpack.c.l.b16 %v3133
    %v3219 = vunpack.c.h.b16 %v3133
    %v3220 = vunpack.c.l.b16 %v3134
    %v3221 = vunpack.c.h.b16 %v3134
    %v3222 = vunpack.c.l.b16 %v3135
    %v3223 = vunpack.c.h.b16 %v3135
    %v3224 = vunpack.c.l.b16 %v3136
    %v3225 = vunpack.c.h.b16 %v3136
    %v3226 = vunpack.c.l.b16 %v3137
    %v3227 = vunpack.c.h.b16 %v3137
    %v3228 = vunpack.c.l.b16 %v3138
    %v3229 = vunpack.c.h.b16 %v3138
    %v3230 = vunpack.c.l.b16 %v3139
    %v3231 = vunpack.c.h.b16 %v3139
    %v3232 = vunpack.c.l.b16 %v3140
    %v3233 = vunpack.c.h.b16 %v3140
    %v3234 = vunpack.c.l.b16 %v3141
    %v3235 = vunpack.c.h.b16 %v3141
    %v3236 = vunpack.c.l.b16 %v3142
    %v3237 = vunpack.c.h.b16 %v3142
    %v3238 = vunpack.c.l.b16 %v3143
    %v3239 = vunpack.c.h.b16 %v3143
    %v3240 = vunpack.c.l.b16 %v3144
    %v3241 = vunpack.c.h.b16 %v3144
    %v3242 = vunpack.c.l.b16 %v3145
    %v3243 = vunpack.c.h.b16 %v3145
    %v3244 = vunpack.c.l.b16 %v3146
    %v3245 = vunpack.c.h.b16 %v3146
    %v3246 = vunpack.c.l.b16 %v3147
    %v3247 = vunpack.c.h.b16 %v3147
    %v3248 = vunpack.c.l.b16 %v3148
    %v3249 = vunpack.c.h.b16 %v3148
    %v3250 = vunpack.c.l.b16 %v3149
    %v3251 = vunpack.c.h.b16 %v3149
    %v3252 = vpack.c.b16 %v3190, %v3188
    %v3253 = vpack.c.b16 %v3191, %v3189
    %v3254 = vpack.c.b16 %v3194, %v3192
    %v3255 = vpack.c.b16 %v3195, %v3193
    %v3256 = vpack.c.b16 %v3198, %v3196
    %v3257 = vpack.c.b16 %v3199, %v3197
    %v3258 = vpack.c.b16 %v3202, %v3200
    %v3259 = vpack.c.b16 %v3203, %v3201
    %v3260 = vpack.c.b16 %v3206, %v3204
    %v3261 = vpack.c.b16 %v3207, %v3205
    %v3262 = vpack.c.b16 %v3210, %v3208
    %v3263 = vpack.c.b16 %v3211, %v3209
    %v3264 = vpack.c.b16 %v3214, %v3212
    %v3265 = vpack.c.b16 %v3215, %v3213
    %v3266 = vpack.c.b16 %v3218, %v3216
    %v3267 = vpack.c.b16 %v3219, %v3217
    %v3268 = vpack.c.b16 %v3222, %v3220
    %v3269 = vpack.c.b16 %v3223, %v3221
    %v3270 = vpack.c.b16 %v3226, %v3224
    %v3271 = vpack.c.b16 %v3227, %v3225
    %v3272 = vpack.c.b16 %v3230, %v3228
    %v3273 = vpack.c.b16 %v3231, %v3229
    %v3274 = vpack.c.b16 %v3234, %v3232
    %v3275 = vpack.c.b16 %v3235, %v3233
    %v3276 = vpack.c.b16 %v3238, %v3236
    %v3277 = vpack.c.b16 %v3239, %v3237
    %v3278 = vpack.c.b16 %v3242, %v3240
    %v3279 = vpack.c.b16 %v3243, %v3241
    %v3280 = vpack.c.b16 %v3246, %v3244
    %v3281 = vpack.c.b16 %v3247, %v3245
    %v3282 = vpack.c.b16 %v3250, %v3248
    %v3283 = vpack.c.b16 %v3251, %v3249
    %3316 = vmatpush.bf16.msra.mxu0 %v3266
    %3317 = vmatpush.bf16.msra.mxu0 %v3264
    %3318 = vmatpush.bf16.msra.mxu0 %v3262
    %3319 = vmatpush.bf16.msra.mxu0 %v3260
    %3320 = vmatpush.bf16.msra.mxu0 %v3258
    %3321 = vmatpush.bf16.msra.mxu0 %v3256
    %3322 = vmatpush.bf16.msra.mxu0 %v3254
    %3323 = vmatpush.bf16.msra.mxu0 %v3252
    %3324 = vmatmul.bf16.gmra.mxu0 %v3106
    %v3325 = vpop.f32.mrf.mxu0
    %v3326 = vadd.f32 %v3152, %v3325
    %v3327 = vpop.f32.mrf.mxu0
    %v3328 = vadd.f32 %v3152, %v3327
    %3329 = vmatmul.bf16.gmra.mxu0 %v3108
    %v3330 = vpop.f32.mrf.mxu0
    %v3331 = vadd.f32 %v3152, %v3330
    %v3332 = vpop.f32.mrf.mxu0
    %v3333 = vadd.f32 %v3152, %v3332
    %3334 = vmatmul.bf16.gmra.mxu0 %v3110
    %v3335 = vpop.f32.mrf.mxu0
    %v3336 = vadd.f32 %v3152, %v3335
    %v3337 = vpop.f32.mrf.mxu0
    %v3338 = vadd.f32 %v3152, %v3337
    %3339 = vmatmul.bf16.gmra.mxu0 %v3112
    %v3340 = vpop.f32.mrf.mxu0
    %v3341 = vadd.f32 %v3152, %v3340
    %v3342 = vpop.f32.mrf.mxu0
    %v3343 = vadd.f32 %v3152, %v3342
    %3344 = vmatmul.bf16.gmra.mxu0 %v3114
    %v3345 = vpop.f32.mrf.mxu0
    %v3346 = vadd.f32 %v3152, %v3345
    %v3347 = vpop.f32.mrf.mxu0
    %v3348 = vadd.f32 %v3152, %v3347
    %3349 = vmatmul.bf16.gmra.mxu0 %v3116
    %v3350 = vpop.f32.mrf.mxu0
    %v3351 = vadd.f32 %v3152, %v3350
    %v3352 = vpop.f32.mrf.mxu0
    %v3353 = vadd.f32 %v3152, %v3352
    %3354 = vdwg.mxu0
    %3355 = vmatpush.bf16.msra.mxu0 %v3282
    %3356 = vmatpush.bf16.msra.mxu0 %v3280
    %3357 = vmatpush.bf16.msra.mxu0 %v3278
    %3358 = vmatpush.bf16.msra.mxu0 %v3276
    %3359 = vmatpush.bf16.msra.mxu0 %v3274
    %3360 = vmatpush.bf16.msra.mxu0 %v3272
    %3361 = vmatpush.bf16.msra.mxu0 %v3270
    %3362 = vmatpush.bf16.msra.mxu0 %v3268
    %3363 = vmatmul.bf16.gmra.mxu0 %v3107
    %v3364 = vpop.f32.mrf.mxu0
    %v3365 = vadd.f32 %v3326, %v3364
    %v3366 = vpop.f32.mrf.mxu0
    %v3367 = vadd.f32 %v3328, %v3366
    %3368 = vmatmul.bf16.gmra.mxu0 %v3109
    %v3369 = vpop.f32.mrf.mxu0
    %v3370 = vadd.f32 %v3331, %v3369
    %v3371 = vpop.f32.mrf.mxu0
    %v3372 = vadd.f32 %v3333, %v3371
    %3373 = vmatmul.bf16.gmra.mxu0 %v3111
    %v3374 = vpop.f32.mrf.mxu0
    %v3375 = vadd.f32 %v3336, %v3374
    %v3376 = vpop.f32.mrf.mxu0
    %v3377 = vadd.f32 %v3338, %v3376
    %3378 = vmatmul.bf16.gmra.mxu0 %v3113
    %v3379 = vpop.f32.mrf.mxu0
    %v3380 = vadd.f32 %v3341, %v3379
    %v3381 = vpop.f32.mrf.mxu0
    %v3382 = vadd.f32 %v3343, %v3381
    %3383 = vmatmul.bf16.gmra.mxu0 %v3115
    %v3384 = vpop.f32.mrf.mxu0
    %v3385 = vadd.f32 %v3346, %v3384
    %v3386 = vpop.f32.mrf.mxu0
    %v3387 = vadd.f32 %v3348, %v3386
    %3388 = vmatmul.bf16.gmra.mxu0 %v3117
    %v3389 = vpop.f32.mrf.mxu0
    %v3390 = vadd.f32 %v3351, %v3389
    %v3391 = vpop.f32.mrf.mxu0
    %v3392 = vadd.f32 %v3353, %v3391
    %3393 = vdwg.mxu0
    %3394 = vmatpush.bf16.msra.mxu0 %v3267
    %3395 = vmatpush.bf16.msra.mxu0 %v3265
    %3396 = vmatpush.bf16.msra.mxu0 %v3263
    %3397 = vmatpush.bf16.msra.mxu0 %v3261
    %3398 = vmatpush.bf16.msra.mxu0 %v3259
    %3399 = vmatpush.bf16.msra.mxu0 %v3257
    %3400 = vmatpush.bf16.msra.mxu0 %v3255
    %3401 = vmatpush.bf16.msra.mxu0 %v3253
    %3402 = vmatmul.bf16.gmra.mxu0 %v3106
    %v3403 = vpop.f32.mrf.mxu0
    %v3404 = vadd.f32 %v3153, %v3403
    %v3405 = vpop.f32.mrf.mxu0
    %v3406 = vadd.f32 %v3153, %v3405
    %3407 = vmatmul.bf16.gmra.mxu0 %v3108
    %v3408 = vpop.f32.mrf.mxu0
    %v3409 = vadd.f32 %v3153, %v3408
    %v3410 = vpop.f32.mrf.mxu0
    %v3411 = vadd.f32 %v3153, %v3410
    %3412 = vmatmul.bf16.gmra.mxu0 %v3110
    %v3413 = vpop.f32.mrf.mxu0
    %v3414 = vadd.f32 %v3153, %v3413
    %v3415 = vpop.f32.mrf.mxu0
    %v3416 = vadd.f32 %v3153, %v3415
    %3417 = vmatmul.bf16.gmra.mxu0 %v3112
    %v3418 = vpop.f32.mrf.mxu0
    %v3419 = vadd.f32 %v3153, %v3418
    %v3420 = vpop.f32.mrf.mxu0
    %v3421 = vadd.f32 %v3153, %v3420
    %3422 = vmatmul.bf16.gmra.mxu0 %v3114
    %v3423 = vpop.f32.mrf.mxu0
    %v3424 = vadd.f32 %v3153, %v3423
    %v3425 = vpop.f32.mrf.mxu0
    %v3426 = vadd.f32 %v3153, %v3425
    %3427 = vmatmul.bf16.gmra.mxu0 %v3116
    %v3428 = vpop.f32.mrf.mxu0
    %v3429 = vadd.f32 %v3153, %v3428
    %v3430 = vpop.f32.mrf.mxu0
    %v3431 = vadd.f32 %v3153, %v3430
    %3432 = vdwg.mxu0
    %3433 = vmatpush.bf16.msra.mxu0 %v3283
    %3434 = vmatpush.bf16.msra.mxu0 %v3281
    %3435 = vmatpush.bf16.msra.mxu0 %v3279
    %3436 = vmatpush.bf16.msra.mxu0 %v3277
    %3437 = vmatpush.bf16.msra.mxu0 %v3275
    %3438 = vmatpush.bf16.msra.mxu0 %v3273
    %3439 = vmatpush.bf16.msra.mxu0 %v3271
    %3440 = vmatpush.bf16.msra.mxu0 %v3269
    %3441 = vmatmul.bf16.gmra.mxu0 %v3107
    %v3442 = vpop.f32.mrf.mxu0
    %v3443 = vadd.f32 %v3404, %v3442
    %v3444 = vpop.f32.mrf.mxu0
    %v3445 = vadd.f32 %v3406, %v3444
    %3446 = vmatmul.bf16.gmra.mxu0 %v3109
    %v3447 = vpop.f32.mrf.mxu0
    %v3448 = vadd.f32 %v3409, %v3447
    %v3449 = vpop.f32.mrf.mxu0
    %v3450 = vadd.f32 %v3411, %v3449
    %3451 = vmatmul.bf16.gmra.mxu0 %v3111
    %v3452 = vpop.f32.mrf.mxu0
    %v3453 = vadd.f32 %v3414, %v3452
    %v3454 = vpop.f32.mrf.mxu0
    %v3455 = vadd.f32 %v3416, %v3454
    %3456 = vmatmul.bf16.gmra.mxu0 %v3113
    %v3457 = vpop.f32.mrf.mxu0
    %v3458 = vadd.f32 %v3419, %v3457
    %v3459 = vpop.f32.mrf.mxu0
    %v3460 = vadd.f32 %v3421, %v3459
    %3461 = vmatmul.bf16.gmra.mxu0 %v3115
    %v3462 = vpop.f32.mrf.mxu0
    %v3463 = vadd.f32 %v3424, %v3462
    %v3464 = vpop.f32.mrf.mxu0
    %v3465 = vadd.f32 %v3426, %v3464
    %3466 = vmatmul.bf16.gmra.mxu0 %v3117
    %v3467 = vpop.f32.mrf.mxu0
    %v3468 = vadd.f32 %v3429, %v3467
    %v3469 = vpop.f32.mrf.mxu0
    %v3470 = vadd.f32 %v3431, %v3469
    %3471 = vdwg.mxu0
    %v3472 = vtanh.pop %v3365
    %v3473 = vtanh.pop %v3443
    %v3474 = vtanh.pop %v3367
    %v3475 = vtanh.pop %v3445
    %v3476 = vtanh.pop %v3370
    %v3477 = vtanh.pop %v3448
    %v3478 = vtanh.pop %v3372
    %v3479 = vtanh.pop %v3450
    %v3480 = vtanh.pop %v3375
    %v3481 = vtanh.pop %v3453
    %v3482 = vtanh.pop %v3377
    %v3483 = vtanh.pop %v3455
    %v3484 = vtanh.pop %v3380
    %v3485 = vtanh.pop %v3458
    %v3486 = vtanh.pop %v3382
    %v3487 = vtanh.pop %v3460
    %v3488 = vtanh.pop %v3385
    %v3489 = vtanh.pop %v3463
    %v3490 = vtanh.pop %v3387
    %v3491 = vtanh.pop %v3465
    %v3492 = vtanh.pop %v3390
    %v3493 = vtanh.pop %v3468
    %v3494 = vtanh.pop %v3392
    %v3495 = vtanh.pop %v3470
    %v3496 = vpack.c.bf16 %v3474, %v3472
    %v3497 = vpack.c.bf16 %v3475, %v3473
    %v3498 = vpack.c.bf16 %v3478, %v3476
    %v3499 = vpack.c.bf16 %v3479, %v3477
    %v3500 = vpack.c.bf16 %v3482, %v3480
    %v3501 = vpack.c.bf16 %v3483, %v3481
    %v3502 = vpack.c.bf16 %v3486, %v3484
    %v3503 = vpack.c.bf16 %v3487, %v3485
    %v3504 = vpack.c.bf16 %v3490, %v3488
    %v3505 = vpack.c.bf16 %v3491, %v3489
    %v3506 = vpack.c.bf16 %v3494, %v3492
    %v3507 = vpack.c.bf16 %v3495, %v3493
    %v3508 = vld [vmem:[#allocation22] sm:$0xff]
    %v3509 = vld [vmem:[#allocation22 + $0x8] sm:$0xff]
    %v3510 = vld [vmem:[#allocation22 + $0x10] sm:$0xff]
    %v3511 = vld [vmem:[#allocation22 + $0x18] sm:$0xff]
    %v3512 = vld [vmem:[#allocation22 + $0x20] sm:$0xff]
    %v3513 = vld [vmem:[#allocation22 + $0x28] sm:$0xff]
    %v3514 = vld [vmem:[#allocation22 + $0x30] sm:$0xff]
    %v3515 = vld [vmem:[#allocation22 + $0x38] sm:$0xff]
    %v3516 = vld [vmem:[#allocation22 + $0x40] sm:$0xff]
    %v3517 = vld [vmem:[#allocation22 + $0x48] sm:$0xff]
    %v3518 = vld [vmem:[#allocation22 + $0x50] sm:$0xff]
    %v3519 = vld [vmem:[#allocation22 + $0x58] sm:$0xff]
    %v3520 = vld [vmem:[#allocation22 + $0x60] sm:$0xff]
    %v3521 = vld [vmem:[#allocation22 + $0x68] sm:$0xff]
    %v3522 = vld [vmem:[#allocation22 + $0x70] sm:$0xff]
    %v3523 = vld [vmem:[#allocation22 + $0x78] sm:$0xff]
    %v3524 = vld [vmem:[#allocation22 + $0x80] sm:$0xff]
    %v3525 = vld [vmem:[#allocation22 + $0x88] sm:$0xff]
    %v3526 = vld [vmem:[#allocation22 + $0x90] sm:$0xff]
    %v3527 = vld [vmem:[#allocation22 + $0x98] sm:$0xff]
    %v3528 = vld [vmem:[#allocation22 + $0xa0] sm:$0xff]
    %v3529 = vld [vmem:[#allocation22 + $0xa8] sm:$0xff]
    %v3530 = vld [vmem:[#allocation22 + $0xb0] sm:$0xff]
    %v3531 = vld [vmem:[#allocation22 + $0xb8] sm:$0xff]
    %v3532 = vld [vmem:[#allocation22 + $0xc0] sm:$0xff]
    %v3533 = vld [vmem:[#allocation22 + $0xc8] sm:$0xff]
    %v3534 = vld [vmem:[#allocation22 + $0xd0] sm:$0xff]
    %v3535 = vld [vmem:[#allocation22 + $0xd8] sm:$0xff]
    %v3536 = vld [vmem:[#allocation22 + $0xe0] sm:$0xff]
    %v3537 = vld [vmem:[#allocation22 + $0xe8] sm:$0xff]
    %v3538 = vld [vmem:[#allocation22 + $0xf0] sm:$0xff]
    %v3539 = vld [vmem:[#allocation22 + $0xf8] sm:$0xff]
    %v3540 = vld [vmem:[#allocation23] sm:$0x3]
    %v3542 = vperm.slane %v3540, 0
    %v3543 = vperm.slane %v3540, 1
    %v3578 = vunpack.c.l.b16 %v3508
    %v3579 = vunpack.c.h.b16 %v3508
    %v3580 = vunpack.c.l.b16 %v3509
    %v3581 = vunpack.c.h.b16 %v3509
    %v3582 = vunpack.c.l.b16 %v3510
    %v3583 = vunpack.c.h.b16 %v3510
    %v3584 = vunpack.c.l.b16 %v3511
    %v3585 = vunpack.c.h.b16 %v3511
    %v3586 = vunpack.c.l.b16 %v3512
    %v3587 = vunpack.c.h.b16 %v3512
    %v3588 = vunpack.c.l.b16 %v3513
    %v3589 = vunpack.c.h.b16 %v3513
    %v3590 = vunpack.c.l.b16 %v3514
    %v3591 = vunpack.c.h.b16 %v3514
    %v3592 = vunpack.c.l.b16 %v3515
    %v3593 = vunpack.c.h.b16 %v3515
    %v3594 = vunpack.c.l.b16 %v3516
    %v3595 = vunpack.c.h.b16 %v3516
    %v3596 = vunpack.c.l.b16 %v3517
    %v3597 = vunpack.c.h.b16 %v3517
    %v3598 = vunpack.c.l.b16 %v3518
    %v3599 = vunpack.c.h.b16 %v3518
    %v3600 = vunpack.c.l.b16 %v3519
    %v3601 = vunpack.c.h.b16 %v3519
    %v3602 = vunpack.c.l.b16 %v3520
    %v3603 = vunpack.c.h.b16 %v3520
    %v3604 = vunpack.c.l.b16 %v3521
    %v3605 = vunpack.c.h.b16 %v3521
    %v3606 = vunpack.c.l.b16 %v3522
    %v3607 = vunpack.c.h.b16 %v3522
    %v3608 = vunpack.c.l.b16 %v3523
    %v3609 = vunpack.c.h.b16 %v3523
    %v3610 = vunpack.c.l.b16 %v3524
    %v3611 = vunpack.c.h.b16 %v3524
    %v3612 = vunpack.c.l.b16 %v3525
    %v3613 = vunpack.c.h.b16 %v3525
    %v3614 = vunpack.c.l.b16 %v3526
    %v3615 = vunpack.c.h.b16 %v3526
    %v3616 = vunpack.c.l.b16 %v3527
    %v3617 = vunpack.c.h.b16 %v3527
    %v3618 = vunpack.c.l.b16 %v3528
    %v3619 = vunpack.c.h.b16 %v3528
    %v3620 = vunpack.c.l.b16 %v3529
    %v3621 = vunpack.c.h.b16 %v3529
    %v3622 = vunpack.c.l.b16 %v3530
    %v3623 = vunpack.c.h.b16 %v3530
    %v3624 = vunpack.c.l.b16 %v3531
    %v3625 = vunpack.c.h.b16 %v3531
    %v3626 = vunpack.c.l.b16 %v3532
    %v3627 = vunpack.c.h.b16 %v3532
    %v3628 = vunpack.c.l.b16 %v3533
    %v3629 = vunpack.c.h.b16 %v3533
    %v3630 = vunpack.c.l.b16 %v3534
    %v3631 = vunpack.c.h.b16 %v3534
    %v3632 = vunpack.c.l.b16 %v3535
    %v3633 = vunpack.c.h.b16 %v3535
    %v3634 = vunpack.c.l.b16 %v3536
    %v3635 = vunpack.c.h.b16 %v3536
    %v3636 = vunpack.c.l.b16 %v3537
    %v3637 = vunpack.c.h.b16 %v3537
    %v3638 = vunpack.c.l.b16 %v3538
    %v3639 = vunpack.c.h.b16 %v3538
    %v3640 = vunpack.c.l.b16 %v3539
    %v3641 = vunpack.c.h.b16 %v3539
    %v3642 = vpack.c.b16 %v3580, %v3578
    %v3643 = vpack.c.b16 %v3581, %v3579
    %v3644 = vpack.c.b16 %v3584, %v3582
    %v3645 = vpack.c.b16 %v3585, %v3583
    %v3646 = vpack.c.b16 %v3588, %v3586
    %v3647 = vpack.c.b16 %v3589, %v3587
    %v3648 = vpack.c.b16 %v3592, %v3590
    %v3649 = vpack.c.b16 %v3593, %v3591
    %v3650 = vpack.c.b16 %v3596, %v3594
    %v3651 = vpack.c.b16 %v3597, %v3595
    %v3652 = vpack.c.b16 %v3600, %v3598
    %v3653 = vpack.c.b16 %v3601, %v3599
    %v3654 = vpack.c.b16 %v3604, %v3602
    %v3655 = vpack.c.b16 %v3605, %v3603
    %v3656 = vpack.c.b16 %v3608, %v3606
    %v3657 = vpack.c.b16 %v3609, %v3607
    %v3658 = vpack.c.b16 %v3612, %v3610
    %v3659 = vpack.c.b16 %v3613, %v3611
    %v3660 = vpack.c.b16 %v3616, %v3614
    %v3661 = vpack.c.b16 %v3617, %v3615
    %v3662 = vpack.c.b16 %v3620, %v3618
    %v3663 = vpack.c.b16 %v3621, %v3619
    %v3664 = vpack.c.b16 %v3624, %v3622
    %v3665 = vpack.c.b16 %v3625, %v3623
    %v3666 = vpack.c.b16 %v3628, %v3626
    %v3667 = vpack.c.b16 %v3629, %v3627
    %v3668 = vpack.c.b16 %v3632, %v3630
    %v3669 = vpack.c.b16 %v3633, %v3631
    %v3670 = vpack.c.b16 %v3636, %v3634
    %v3671 = vpack.c.b16 %v3637, %v3635
    %v3672 = vpack.c.b16 %v3640, %v3638
    %v3673 = vpack.c.b16 %v3641, %v3639
    %3706 = vmatpush.bf16.msra.mxu0 %v3656
    %3707 = vmatpush.bf16.msra.mxu0 %v3654
    %3708 = vmatpush.bf16.msra.mxu0 %v3652
    %3709 = vmatpush.bf16.msra.mxu0 %v3650
    %3710 = vmatpush.bf16.msra.mxu0 %v3648
    %3711 = vmatpush.bf16.msra.mxu0 %v3646
    %3712 = vmatpush.bf16.msra.mxu0 %v3644
    %3713 = vmatpush.bf16.msra.mxu0 %v3642
    %3714 = vmatmul.bf16.gmra.mxu0 %v3496
    %v3715 = vpop.f32.mrf.mxu0
    %v3716 = vadd.f32 %v3542, %v3715
    %v3717 = vpop.f32.mrf.mxu0
    %v3718 = vadd.f32 %v3542, %v3717
    %3719 = vmatmul.bf16.gmra.mxu0 %v3498
    %v3720 = vpop.f32.mrf.mxu0
    %v3721 = vadd.f32 %v3542, %v3720
    %v3722 = vpop.f32.mrf.mxu0
    %v3723 = vadd.f32 %v3542, %v3722
    %3724 = vmatmul.bf16.gmra.mxu0 %v3500
    %v3725 = vpop.f32.mrf.mxu0
    %v3726 = vadd.f32 %v3542, %v3725
    %v3727 = vpop.f32.mrf.mxu0
    %v3728 = vadd.f32 %v3542, %v3727
    %3729 = vmatmul.bf16.gmra.mxu0 %v3502
    %v3730 = vpop.f32.mrf.mxu0
    %v3731 = vadd.f32 %v3542, %v3730
    %v3732 = vpop.f32.mrf.mxu0
    %v3733 = vadd.f32 %v3542, %v3732
    %3734 = vmatmul.bf16.gmra.mxu0 %v3504
    %v3735 = vpop.f32.mrf.mxu0
    %v3736 = vadd.f32 %v3542, %v3735
    %v3737 = vpop.f32.mrf.mxu0
    %v3738 = vadd.f32 %v3542, %v3737
    %3739 = vmatmul.bf16.gmra.mxu0 %v3506
    %v3740 = vpop.f32.mrf.mxu0
    %v3741 = vadd.f32 %v3542, %v3740
    %v3742 = vpop.f32.mrf.mxu0
    %v3743 = vadd.f32 %v3542, %v3742
    %3744 = vdwg.mxu0
    %3745 = vmatpush.bf16.msra.mxu0 %v3672
    %3746 = vmatpush.bf16.msra.mxu0 %v3670
    %3747 = vmatpush.bf16.msra.mxu0 %v3668
    %3748 = vmatpush.bf16.msra.mxu0 %v3666
    %3749 = vmatpush.bf16.msra.mxu0 %v3664
    %3750 = vmatpush.bf16.msra.mxu0 %v3662
    %3751 = vmatpush.bf16.msra.mxu0 %v3660
    %3752 = vmatpush.bf16.msra.mxu0 %v3658
    %3753 = vmatmul.bf16.gmra.mxu0 %v3497
    %v3754 = vpop.f32.mrf.mxu0
    %v3755 = vadd.f32 %v3716, %v3754
    %v3756 = vpop.f32.mrf.mxu0
    %v3757 = vadd.f32 %v3718, %v3756
    %3758 = vmatmul.bf16.gmra.mxu0 %v3499
    %v3759 = vpop.f32.mrf.mxu0
    %v3760 = vadd.f32 %v3721, %v3759
    %v3761 = vpop.f32.mrf.mxu0
    %v3762 = vadd.f32 %v3723, %v3761
    %3763 = vmatmul.bf16.gmra.mxu0 %v3501
    %v3764 = vpop.f32.mrf.mxu0
    %v3765 = vadd.f32 %v3726, %v3764
    %v3766 = vpop.f32.mrf.mxu0
    %v3767 = vadd.f32 %v3728, %v3766
    %3768 = vmatmul.bf16.gmra.mxu0 %v3503
    %v3769 = vpop.f32.mrf.mxu0
    %v3770 = vadd.f32 %v3731, %v3769
    %v3771 = vpop.f32.mrf.mxu0
    %v3772 = vadd.f32 %v3733, %v3771
    %3773 = vmatmul.bf16.gmra.mxu0 %v3505
    %v3774 = vpop.f32.mrf.mxu0
    %v3775 = vadd.f32 %v3736, %v3774
    %v3776 = vpop.f32.mrf.mxu0
    %v3777 = vadd.f32 %v3738, %v3776
    %3778 = vmatmul.bf16.gmra.mxu0 %v3507
    %v3779 = vpop.f32.mrf.mxu0
    %v3780 = vadd.f32 %v3741, %v3779
    %v3781 = vpop.f32.mrf.mxu0
    %v3782 = vadd.f32 %v3743, %v3781
    %3783 = vdwg.mxu0
    %3784 = vmatpush.bf16.msra.mxu0 %v3657
    %3785 = vmatpush.bf16.msra.mxu0 %v3655
    %3786 = vmatpush.bf16.msra.mxu0 %v3653
    %3787 = vmatpush.bf16.msra.mxu0 %v3651
    %3788 = vmatpush.bf16.msra.mxu0 %v3649
    %3789 = vmatpush.bf16.msra.mxu0 %v3647
    %3790 = vmatpush.bf16.msra.mxu0 %v3645
    %3791 = vmatpush.bf16.msra.mxu0 %v3643
    %3792 = vmatmul.bf16.gmra.mxu0 %v3496
    %v3793 = vpop.f32.mrf.mxu0
    %v3794 = vadd.f32 %v3543, %v3793
    %v3795 = vpop.f32.mrf.mxu0
    %v3796 = vadd.f32 %v3543, %v3795
    %3797 = vmatmul.bf16.gmra.mxu0 %v3498
    %v3798 = vpop.f32.mrf.mxu0
    %v3799 = vadd.f32 %v3543, %v3798
    %v3800 = vpop.f32.mrf.mxu0
    %v3801 = vadd.f32 %v3543, %v3800
    %3802 = vmatmul.bf16.gmra.mxu0 %v3500
    %v3803 = vpop.f32.mrf.mxu0
    %v3804 = vadd.f32 %v3543, %v3803
    %v3805 = vpop.f32.mrf.mxu0
    %v3806 = vadd.f32 %v3543, %v3805
    %3807 = vmatmul.bf16.gmra.mxu0 %v3502
    %v3808 = vpop.f32.mrf.mxu0
    %v3809 = vadd.f32 %v3543, %v3808
    %v3810 = vpop.f32.mrf.mxu0
    %v3811 = vadd.f32 %v3543, %v3810
    %3812 = vmatmul.bf16.gmra.mxu0 %v3504
    %v3813 = vpop.f32.mrf.mxu0
    %v3814 = vadd.f32 %v3543, %v3813
    %v3815 = vpop.f32.mrf.mxu0
    %v3816 = vadd.f32 %v3543, %v3815
    %3817 = vmatmul.bf16.gmra.mxu0 %v3506
    %v3818 = vpop.f32.mrf.mxu0
    %v3819 = vadd.f32 %v3543, %v3818
    %v3820 = vpop.f32.mrf.mxu0
    %v3821 = vadd.f32 %v3543, %v3820
    %3822 = vdwg.mxu0
    %3823 = vmatpush.bf16.msra.mxu0 %v3673
    %3824 = vmatpush.bf16.msra.mxu0 %v3671
    %3825 = vmatpush.bf16.msra.mxu0 %v3669
    %3826 = vmatpush.bf16.msra.mxu0 %v3667
    %3827 = vmatpush.bf16.msra.mxu0 %v3665
    %3828 = vmatpush.bf16.msra.mxu0 %v3663
    %3829 = vmatpush.bf16.msra.mxu0 %v3661
    %3830 = vmatpush.bf16.msra.mxu0 %v3659
    %3831 = vmatmul.bf16.gmra.mxu0 %v3497
    %v3832 = vpop.f32.mrf.mxu0
    %v3833 = vadd.f32 %v3794, %v3832
    %v3834 = vpop.f32.mrf.mxu0
    %v3835 = vadd.f32 %v3796, %v3834
    %3836 = vmatmul.bf16.gmra.mxu0 %v3499
    %v3837 = vpop.f32.mrf.mxu0
    %v3838 = vadd.f32 %v3799, %v3837
    %v3839 = vpop.f32.mrf.mxu0
    %v3840 = vadd.f32 %v3801, %v3839
    %3841 = vmatmul.bf16.gmra.mxu0 %v3501
    %v3842 = vpop.f32.mrf.mxu0
    %v3843 = vadd.f32 %v3804, %v3842
    %v3844 = vpop.f32.mrf.mxu0
    %v3845 = vadd.f32 %v3806, %v3844
    %3846 = vmatmul.bf16.gmra.mxu0 %v3503
    %v3847 = vpop.f32.mrf.mxu0
    %v3848 = vadd.f32 %v3809, %v3847
    %v3849 = vpop.f32.mrf.mxu0
    %v3850 = vadd.f32 %v3811, %v3849
    %3851 = vmatmul.bf16.gmra.mxu0 %v3505
    %v3852 = vpop.f32.mrf.mxu0
    %v3853 = vadd.f32 %v3814, %v3852
    %v3854 = vpop.f32.mrf.mxu0
    %v3855 = vadd.f32 %v3816, %v3854
    %3856 = vmatmul.bf16.gmra.mxu0 %v3507
    %v3857 = vpop.f32.mrf.mxu0
    %v3858 = vadd.f32 %v3819, %v3857
    %v3859 = vpop.f32.mrf.mxu0
    %v3860 = vadd.f32 %v3821, %v3859
    %3861 = vdwg.mxu0
    %v3862 = vtanh.pop %v3755
    %v3863 = vtanh.pop %v3833
    %v3864 = vtanh.pop %v3757
    %v3865 = vtanh.pop %v3835
    %v3866 = vtanh.pop %v3760
    %v3867 = vtanh.pop %v3838
    %v3868 = vtanh.pop %v3762
    %v3869 = vtanh.pop %v3840
    %v3870 = vtanh.pop %v3765
    %v3871 = vtanh.pop %v3843
    %v3872 = vtanh.pop %v3767
    %v3873 = vtanh.pop %v3845
    %v3874 = vtanh.pop %v3770
    %v3875 = vtanh.pop %v3848
    %v3876 = vtanh.pop %v3772
    %v3877 = vtanh.pop %v3850
    %v3878 = vtanh.pop %v3775
    %v3879 = vtanh.pop %v3853
    %v3880 = vtanh.pop %v3777
    %v3881 = vtanh.pop %v3855
    %v3882 = vtanh.pop %v3780
    %v3883 = vtanh.pop %v3858
    %v3884 = vtanh.pop %v3782
    %v3885 = vtanh.pop %v3860
    %v3886 = vpack.c.bf16 %v3864, %v3862
    %v3887 = vpack.c.bf16 %v3865, %v3863
    %v3888 = vpack.c.bf16 %v3868, %v3866
    %v3889 = vpack.c.bf16 %v3869, %v3867
    %v3890 = vpack.c.bf16 %v3872, %v3870
    %v3891 = vpack.c.bf16 %v3873, %v3871
    %v3892 = vpack.c.bf16 %v3876, %v3874
    %v3893 = vpack.c.bf16 %v3877, %v3875
    %v3894 = vpack.c.bf16 %v3880, %v3878
    %v3895 = vpack.c.bf16 %v3881, %v3879
    %v3896 = vpack.c.bf16 %v3884, %v3882
    %v3897 = vpack.c.bf16 %v3885, %v3883
    %v3898 = vld [vmem:[#allocation25] sm:$0xff]
    %v3899 = vld [vmem:[#allocation25 + $0x8] sm:$0xff]
    %v3900 = vld [vmem:[#allocation25 + $0x10] sm:$0xff]
    %v3901 = vld [vmem:[#allocation25 + $0x18] sm:$0xff]
    %v3902 = vld [vmem:[#allocation25 + $0x20] sm:$0xff]
    %v3903 = vld [vmem:[#allocation25 + $0x28] sm:$0xff]
    %v3904 = vld [vmem:[#allocation25 + $0x30] sm:$0xff]
    %v3905 = vld [vmem:[#allocation25 + $0x38] sm:$0xff]
    %v3906 = vld [vmem:[#allocation25 + $0x40] sm:$0xff]
    %v3907 = vld [vmem:[#allocation25 + $0x48] sm:$0xff]
    %v3908 = vld [vmem:[#allocation25 + $0x50] sm:$0xff]
    %v3909 = vld [vmem:[#allocation25 + $0x58] sm:$0xff]
    %v3910 = vld [vmem:[#allocation25 + $0x60] sm:$0xff]
    %v3911 = vld [vmem:[#allocation25 + $0x68] sm:$0xff]
    %v3912 = vld [vmem:[#allocation25 + $0x70] sm:$0xff]
    %v3913 = vld [vmem:[#allocation25 + $0x78] sm:$0xff]
    %v3914 = vld [vmem:[#allocation25 + $0x80] sm:$0xff]
    %v3915 = vld [vmem:[#allocation25 + $0x88] sm:$0xff]
    %v3916 = vld [vmem:[#allocation25 + $0x90] sm:$0xff]
    %v3917 = vld [vmem:[#allocation25 + $0x98] sm:$0xff]
    %v3918 = vld [vmem:[#allocation25 + $0xa0] sm:$0xff]
    %v3919 = vld [vmem:[#allocation25 + $0xa8] sm:$0xff]
    %v3920 = vld [vmem:[#allocation25 + $0xb0] sm:$0xff]
    %v3921 = vld [vmem:[#allocation25 + $0xb8] sm:$0xff]
    %v3922 = vld [vmem:[#allocation25 + $0xc0] sm:$0xff]
    %v3923 = vld [vmem:[#allocation25 + $0xc8] sm:$0xff]
    %v3924 = vld [vmem:[#allocation25 + $0xd0] sm:$0xff]
    %v3925 = vld [vmem:[#allocation25 + $0xd8] sm:$0xff]
    %v3926 = vld [vmem:[#allocation25 + $0xe0] sm:$0xff]
    %v3927 = vld [vmem:[#allocation25 + $0xe8] sm:$0xff]
    %v3928 = vld [vmem:[#allocation25 + $0xf0] sm:$0xff]
    %v3929 = vld [vmem:[#allocation25 + $0xf8] sm:$0xff]
    %v3930 = vld [vmem:[#allocation26] sm:$0x3]
    %v3932 = vperm.slane %v3930, 0
    %v3933 = vperm.slane %v3930, 1
    %v3968 = vunpack.c.l.b16 %v3898
    %v3969 = vunpack.c.h.b16 %v3898
    %v3970 = vunpack.c.l.b16 %v3899
    %v3971 = vunpack.c.h.b16 %v3899
    %v3972 = vunpack.c.l.b16 %v3900
    %v3973 = vunpack.c.h.b16 %v3900
    %v3974 = vunpack.c.l.b16 %v3901
    %v3975 = vunpack.c.h.b16 %v3901
    %v3976 = vunpack.c.l.b16 %v3902
    %v3977 = vunpack.c.h.b16 %v3902
    %v3978 = vunpack.c.l.b16 %v3903
    %v3979 = vunpack.c.h.b16 %v3903
    %v3980 = vunpack.c.l.b16 %v3904
    %v3981 = vunpack.c.h.b16 %v3904
    %v3982 = vunpack.c.l.b16 %v3905
    %v3983 = vunpack.c.h.b16 %v3905
    %v3984 = vunpack.c.l.b16 %v3906
    %v3985 = vunpack.c.h.b16 %v3906
    %v3986 = vunpack.c.l.b16 %v3907
    %v3987 = vunpack.c.h.b16 %v3907
    %v3988 = vunpack.c.l.b16 %v3908
    %v3989 = vunpack.c.h.b16 %v3908
    %v3990 = vunpack.c.l.b16 %v3909
    %v3991 = vunpack.c.h.b16 %v3909
    %v3992 = vunpack.c.l.b16 %v3910
    %v3993 = vunpack.c.h.b16 %v3910
    %v3994 = vunpack.c.l.b16 %v3911
    %v3995 = vunpack.c.h.b16 %v3911
    %v3996 = vunpack.c.l.b16 %v3912
    %v3997 = vunpack.c.h.b16 %v3912
    %v3998 = vunpack.c.l.b16 %v3913
    %v3999 = vunpack.c.h.b16 %v3913
    %v4000 = vunpack.c.l.b16 %v3914
    %v4001 = vunpack.c.h.b16 %v3914
    %v4002 = vunpack.c.l.b16 %v3915
    %v4003 = vunpack.c.h.b16 %v3915
    %v4004 = vunpack.c.l.b16 %v3916
    %v4005 = vunpack.c.h.b16 %v3916
    %v4006 = vunpack.c.l.b16 %v3917
    %v4007 = vunpack.c.h.b16 %v3917
    %v4008 = vunpack.c.l.b16 %v3918
    %v4009 = vunpack.c.h.b16 %v3918
    %v4010 = vunpack.c.l.b16 %v3919
    %v4011 = vunpack.c.h.b16 %v3919
    %v4012 = vunpack.c.l.b16 %v3920
    %v4013 = vunpack.c.h.b16 %v3920
    %v4014 = vunpack.c.l.b16 %v3921
    %v4015 = vunpack.c.h.b16 %v3921
    %v4016 = vunpack.c.l.b16 %v3922
    %v4017 = vunpack.c.h.b16 %v3922
    %v4018 = vunpack.c.l.b16 %v3923
    %v4019 = vunpack.c.h.b16 %v3923
    %v4020 = vunpack.c.l.b16 %v3924
    %v4021 = vunpack.c.h.b16 %v3924
    %v4022 = vunpack.c.l.b16 %v3925
    %v4023 = vunpack.c.h.b16 %v3925
    %v4024 = vunpack.c.l.b16 %v3926
    %v4025 = vunpack.c.h.b16 %v3926
    %v4026 = vunpack.c.l.b16 %v3927
    %v4027 = vunpack.c.h.b16 %v3927
    %v4028 = vunpack.c.l.b16 %v3928
    %v4029 = vunpack.c.h.b16 %v3928
    %v4030 = vunpack.c.l.b16 %v3929
    %v4031 = vunpack.c.h.b16 %v3929
    %v4032 = vpack.c.b16 %v3970, %v3968
    %v4033 = vpack.c.b16 %v3971, %v3969
    %v4034 = vpack.c.b16 %v3974, %v3972
    %v4035 = vpack.c.b16 %v3975, %v3973
    %v4036 = vpack.c.b16 %v3978, %v3976
    %v4037 = vpack.c.b16 %v3979, %v3977
    %v4038 = vpack.c.b16 %v3982, %v3980
    %v4039 = vpack.c.b16 %v3983, %v3981
    %v4040 = vpack.c.b16 %v3986, %v3984
    %v4041 = vpack.c.b16 %v3987, %v3985
    %v4042 = vpack.c.b16 %v3990, %v3988
    %v4043 = vpack.c.b16 %v3991, %v3989
    %v4044 = vpack.c.b16 %v3994, %v3992
    %v4045 = vpack.c.b16 %v3995, %v3993
    %v4046 = vpack.c.b16 %v3998, %v3996
    %v4047 = vpack.c.b16 %v3999, %v3997
    %v4048 = vpack.c.b16 %v4002, %v4000
    %v4049 = vpack.c.b16 %v4003, %v4001
    %v4050 = vpack.c.b16 %v4006, %v4004
    %v4051 = vpack.c.b16 %v4007, %v4005
    %v4052 = vpack.c.b16 %v4010, %v4008
    %v4053 = vpack.c.b16 %v4011, %v4009
    %v4054 = vpack.c.b16 %v4014, %v4012
    %v4055 = vpack.c.b16 %v4015, %v4013
    %v4056 = vpack.c.b16 %v4018, %v4016
    %v4057 = vpack.c.b16 %v4019, %v4017
    %v4058 = vpack.c.b16 %v4022, %v4020
    %v4059 = vpack.c.b16 %v4023, %v4021
    %v4060 = vpack.c.b16 %v4026, %v4024
    %v4061 = vpack.c.b16 %v4027, %v4025
    %v4062 = vpack.c.b16 %v4030, %v4028
    %v4063 = vpack.c.b16 %v4031, %v4029
    %4096 = vmatpush.bf16.msra.mxu0 %v4046
    %4097 = vmatpush.bf16.msra.mxu0 %v4044
    %4098 = vmatpush.bf16.msra.mxu0 %v4042
    %4099 = vmatpush.bf16.msra.mxu0 %v4040
    %4100 = vmatpush.bf16.msra.mxu0 %v4038
    %4101 = vmatpush.bf16.msra.mxu0 %v4036
    %4102 = vmatpush.bf16.msra.mxu0 %v4034
    %4103 = vmatpush.bf16.msra.mxu0 %v4032
    %4104 = vmatmul.bf16.gmra.mxu0 %v3886
    %v4105 = vpop.f32.mrf.mxu0
    %v4106 = vadd.f32 %v3932, %v4105
    %v4107 = vpop.f32.mrf.mxu0
    %v4108 = vadd.f32 %v3932, %v4107
    %4109 = vmatmul.bf16.gmra.mxu0 %v3888
    %v4110 = vpop.f32.mrf.mxu0
    %v4111 = vadd.f32 %v3932, %v4110
    %v4112 = vpop.f32.mrf.mxu0
    %v4113 = vadd.f32 %v3932, %v4112
    %4114 = vmatmul.bf16.gmra.mxu0 %v3890
    %v4115 = vpop.f32.mrf.mxu0
    %v4116 = vadd.f32 %v3932, %v4115
    %v4117 = vpop.f32.mrf.mxu0
    %v4118 = vadd.f32 %v3932, %v4117
    %4119 = vmatmul.bf16.gmra.mxu0 %v3892
    %v4120 = vpop.f32.mrf.mxu0
    %v4121 = vadd.f32 %v3932, %v4120
    %v4122 = vpop.f32.mrf.mxu0
    %v4123 = vadd.f32 %v3932, %v4122
    %4124 = vmatmul.bf16.gmra.mxu0 %v3894
    %v4125 = vpop.f32.mrf.mxu0
    %v4126 = vadd.f32 %v3932, %v4125
    %v4127 = vpop.f32.mrf.mxu0
    %v4128 = vadd.f32 %v3932, %v4127
    %4129 = vmatmul.bf16.gmra.mxu0 %v3896
    %v4130 = vpop.f32.mrf.mxu0
    %v4131 = vadd.f32 %v3932, %v4130
    %v4132 = vpop.f32.mrf.mxu0
    %v4133 = vadd.f32 %v3932, %v4132
    %4134 = vdwg.mxu0
    %4135 = vmatpush.bf16.msra.mxu0 %v4062
    %4136 = vmatpush.bf16.msra.mxu0 %v4060
    %4137 = vmatpush.bf16.msra.mxu0 %v4058
    %4138 = vmatpush.bf16.msra.mxu0 %v4056
    %4139 = vmatpush.bf16.msra.mxu0 %v4054
    %4140 = vmatpush.bf16.msra.mxu0 %v4052
    %4141 = vmatpush.bf16.msra.mxu0 %v4050
    %4142 = vmatpush.bf16.msra.mxu0 %v4048
    %4143 = vmatmul.bf16.gmra.mxu0 %v3887
    %v4144 = vpop.f32.mrf.mxu0
    %v4145 = vadd.f32 %v4106, %v4144
    %v4146 = vpop.f32.mrf.mxu0
    %v4147 = vadd.f32 %v4108, %v4146
    %4148 = vmatmul.bf16.gmra.mxu0 %v3889
    %v4149 = vpop.f32.mrf.mxu0
    %v4150 = vadd.f32 %v4111, %v4149
    %v4151 = vpop.f32.mrf.mxu0
    %v4152 = vadd.f32 %v4113, %v4151
    %4153 = vmatmul.bf16.gmra.mxu0 %v3891
    %v4154 = vpop.f32.mrf.mxu0
    %v4155 = vadd.f32 %v4116, %v4154
    %v4156 = vpop.f32.mrf.mxu0
    %v4157 = vadd.f32 %v4118, %v4156
    %4158 = vmatmul.bf16.gmra.mxu0 %v3893
    %v4159 = vpop.f32.mrf.mxu0
    %v4160 = vadd.f32 %v4121, %v4159
    %v4161 = vpop.f32.mrf.mxu0
    %v4162 = vadd.f32 %v4123, %v4161
    %4163 = vmatmul.bf16.gmra.mxu0 %v3895
    %v4164 = vpop.f32.mrf.mxu0
    %v4165 = vadd.f32 %v4126, %v4164
    %v4166 = vpop.f32.mrf.mxu0
    %v4167 = vadd.f32 %v4128, %v4166
    %4168 = vmatmul.bf16.gmra.mxu0 %v3897
    %v4169 = vpop.f32.mrf.mxu0
    %v4170 = vadd.f32 %v4131, %v4169
    %v4171 = vpop.f32.mrf.mxu0
    %v4172 = vadd.f32 %v4133, %v4171
    %4173 = vdwg.mxu0
    %4174 = vmatpush.bf16.msra.mxu0 %v4047
    %4175 = vmatpush.bf16.msra.mxu0 %v4045
    %4176 = vmatpush.bf16.msra.mxu0 %v4043
    %4177 = vmatpush.bf16.msra.mxu0 %v4041
    %4178 = vmatpush.bf16.msra.mxu0 %v4039
    %4179 = vmatpush.bf16.msra.mxu0 %v4037
    %4180 = vmatpush.bf16.msra.mxu0 %v4035
    %4181 = vmatpush.bf16.msra.mxu0 %v4033
    %4182 = vmatmul.bf16.gmra.mxu0 %v3886
    %v4183 = vpop.f32.mrf.mxu0
    %v4184 = vadd.f32 %v3933, %v4183
    %v4185 = vpop.f32.mrf.mxu0
    %v4186 = vadd.f32 %v3933, %v4185
    %4187 = vmatmul.bf16.gmra.mxu0 %v3888
    %v4188 = vpop.f32.mrf.mxu0
    %v4189 = vadd.f32 %v3933, %v4188
    %v4190 = vpop.f32.mrf.mxu0
    %v4191 = vadd.f32 %v3933, %v4190
    %4192 = vmatmul.bf16.gmra.mxu0 %v3890
    %v4193 = vpop.f32.mrf.mxu0
    %v4194 = vadd.f32 %v3933, %v4193
    %v4195 = vpop.f32.mrf.mxu0
    %v4196 = vadd.f32 %v3933, %v4195
    %4197 = vmatmul.bf16.gmra.mxu0 %v3892
    %v4198 = vpop.f32.mrf.mxu0
    %v4199 = vadd.f32 %v3933, %v4198
    %v4200 = vpop.f32.mrf.mxu0
    %v4201 = vadd.f32 %v3933, %v4200
    %4202 = vmatmul.bf16.gmra.mxu0 %v3894
    %v4203 = vpop.f32.mrf.mxu0
    %v4204 = vadd.f32 %v3933, %v4203
    %v4205 = vpop.f32.mrf.mxu0
    %v4206 = vadd.f32 %v3933, %v4205
    %4207 = vmatmul.bf16.gmra.mxu0 %v3896
    %v4208 = vpop.f32.mrf.mxu0
    %v4209 = vadd.f32 %v3933, %v4208
    %v4210 = vpop.f32.mrf.mxu0
    %v4211 = vadd.f32 %v3933, %v4210
    %4212 = vdwg.mxu0
    %4213 = vmatpush.bf16.msra.mxu0 %v4063
    %4214 = vmatpush.bf16.msra.mxu0 %v4061
    %4215 = vmatpush.bf16.msra.mxu0 %v4059
    %4216 = vmatpush.bf16.msra.mxu0 %v4057
    %4217 = vmatpush.bf16.msra.mxu0 %v4055
    %4218 = vmatpush.bf16.msra.mxu0 %v4053
    %4219 = vmatpush.bf16.msra.mxu0 %v4051
    %4220 = vmatpush.bf16.msra.mxu0 %v4049
    %4221 = vmatmul.bf16.gmra.mxu0 %v3887
    %v4222 = vpop.f32.mrf.mxu0
    %v4223 = vadd.f32 %v4184, %v4222
    %v4224 = vpop.f32.mrf.mxu0
    %v4225 = vadd.f32 %v4186, %v4224
    %4226 = vmatmul.bf16.gmra.mxu0 %v3889
    %v4227 = vpop.f32.mrf.mxu0
    %v4228 = vadd.f32 %v4189, %v4227
    %v4229 = vpop.f32.mrf.mxu0
    %v4230 = vadd.f32 %v4191, %v4229
    %4231 = vmatmul.bf16.gmra.mxu0 %v3891
    %v4232 = vpop.f32.mrf.mxu0
    %v4233 = vadd.f32 %v4194, %v4232
    %v4234 = vpop.f32.mrf.mxu0
    %v4235 = vadd.f32 %v4196, %v4234
    %4236 = vmatmul.bf16.gmra.mxu0 %v3893
    %v4237 = vpop.f32.mrf.mxu0
    %v4238 = vadd.f32 %v4199, %v4237
    %v4239 = vpop.f32.mrf.mxu0
    %v4240 = vadd.f32 %v4201, %v4239
    %4241 = vmatmul.bf16.gmra.mxu0 %v3895
    %v4242 = vpop.f32.mrf.mxu0
    %v4243 = vadd.f32 %v4204, %v4242
    %v4244 = vpop.f32.mrf.mxu0
    %v4245 = vadd.f32 %v4206, %v4244
    %4246 = vmatmul.bf16.gmra.mxu0 %v3897
    %v4247 = vpop.f32.mrf.mxu0
    %v4248 = vadd.f32 %v4209, %v4247
    %v4249 = vpop.f32.mrf.mxu0
    %v4250 = vadd.f32 %v4211, %v4249
    %4251 = vdwg.mxu0
    %v4252 = vtanh.pop %v4145
    %v4253 = vtanh.pop %v4223
    %v4254 = vtanh.pop %v4147
    %v4255 = vtanh.pop %v4225
    %v4256 = vtanh.pop %v4150
    %v4257 = vtanh.pop %v4228
    %v4258 = vtanh.pop %v4152
    %v4259 = vtanh.pop %v4230
    %v4260 = vtanh.pop %v4155
    %v4261 = vtanh.pop %v4233
    %v4262 = vtanh.pop %v4157
    %v4263 = vtanh.pop %v4235
    %v4264 = vtanh.pop %v4160
    %v4265 = vtanh.pop %v4238
    %v4266 = vtanh.pop %v4162
    %v4267 = vtanh.pop %v4240
    %v4268 = vtanh.pop %v4165
    %v4269 = vtanh.pop %v4243
    %v4270 = vtanh.pop %v4167
    %v4271 = vtanh.pop %v4245
    %v4272 = vtanh.pop %v4170
    %v4273 = vtanh.pop %v4248
    %v4274 = vtanh.pop %v4172
    %v4275 = vtanh.pop %v4250
    %v4276 = vmul.f32 %v1824, %v2950
    %v4277 = vmul.f32 %v1825, %v2951
    %v4278 = vmul.f32 %v1826, %v2952
    %v4279 = vmul.f32 %v1827, %v2953
    %v4280 = vmul.f32 %v1828, %v2954
    %v4281 = vmul.f32 %v1829, %v2955
    %v4282 = vmul.f32 %v1830, %v2956
    %v4283 = vmul.f32 %v1831, %v2957
    %v4284 = vadd.f32 %v4276, %v4277
    %4285 = vadd.xlane.f32.xlu0 %v4284
    %v4286 = vpop.xlane.xlu0 %4285
    %v4287 = vadd.f32 %v4278, %v4279
    %4288 = vadd.xlane.f32.xlu0 %v4287
    %v4289 = vpop.xlane.xlu0 %4288
    %v4290 = vadd.f32 %v4280, %v4281
    %4291 = vadd.xlane.f32.xlu0 %v4290
    %v4292 = vpop.xlane.xlu0 %4291
    %v4293 = vadd.f32 %v4282, %v4283
    %4294 = vadd.xlane.f32.xlu0 %v4293
    %v4295 = vpop.xlane.xlu0 %4294
    %v4296 = vmul.f32 %v4286, 0.0625
    %v4297 = vmul.f32 %v4289, 0.0625
    %v4298 = vmul.f32 %v4292, 0.0625
    %v4299 = vmul.f32 %v4295, 0.0625
    %v4300 = vmul.f32 %v4296, 1.442695
    %v4301 = vpow.pop %v4300
    %v4302 = vmul.f32 %v4297, 1.442695
    %v4303 = vpow.pop %v4302
    %v4304 = vmul.f32 %v4298, 1.442695
    %v4305 = vpow.pop %v4304
    %v4306 = vmul.f32 %v4299, 1.442695
    %v4307 = vpow.pop %v4306
    %v4308 = vadd.f32 %v4301, 0.0
    %v4309 = vadd.f32 %v4303, 0.0
    %v4310 = vadd.f32 %v4305, 0.0
    %v4311 = vadd.f32 %v4307, 0.0
    %v4312 = vmul.f32 %v4301, %v4252
    %v4313 = vmul.f32 %v4301, %v4253
    %v4314 = vmul.f32 %v4303, %v4254
    %v4315 = vmul.f32 %v4303, %v4255
    %v4316 = vmul.f32 %v4305, %v4256
    %v4317 = vmul.f32 %v4305, %v4257
    %v4318 = vmul.f32 %v4307, %v4258
    %v4319 = vmul.f32 %v4307, %v4259
    %v4320 = vadd.f32 %v4312, 0.0
    %v4321 = vadd.f32 %v4313, 0.0
    %v4322 = vadd.f32 %v4314, 0.0
    %v4323 = vadd.f32 %v4315, 0.0
    %v4324 = vadd.f32 %v4316, 0.0
    %v4325 = vadd.f32 %v4317, 0.0
    %v4326 = vadd.f32 %v4318, 0.0
    %v4327 = vadd.f32 %v4319, 0.0
    %v4328 = vadd.f32 %v3472, 0.0
    %v4329 = vadd.f32 %v3473, 0.0
    %v4330 = vadd.f32 %v3474, 0.0
    %v4331 = vadd.f32 %v3475, 0.0
    %v4332 = vadd.f32 %v3476, 0.0
    %v4333 = vadd.f32 %v3477, 0.0
    %v4334 = vadd.f32 %v3478, 0.0
    %v4335 = vadd.f32 %v3479, 0.0
    %v4336 = vadd.f32 %v1236, 0.0
    %v4337 = vadd.f32 %v1237, 0.0
    %v4338 = vadd.f32 %v1238, 0.0
    %v4339 = vadd.f32 %v1239, 0.0
    %v4340 = vadd.f32 %v1240, 0.0
    %v4341 = vadd.f32 %v1241, 0.0
    %v4342 = vadd.f32 %v1242, 0.0
    %v4343 = vadd.f32 %v1243, 0.0
    %v4344 = vmul.f32 %v1824, %v2958
    %v4345 = vmul.f32 %v1825, %v2959
    %v4346 = vmul.f32 %v1826, %v2960
    %v4347 = vmul.f32 %v1827, %v2961
    %v4348 = vmul.f32 %v1828, %v2962
    %v4349 = vmul.f32 %v1829, %v2963
    %v4350 = vmul.f32 %v1830, %v2964
    %v4351 = vmul.f32 %v1831, %v2965
    %v4352 = vadd.f32 %v4344, %v4345
    %4353 = vadd.xlane.f32.xlu0 %v4352
    %v4354 = vpop.xlane.xlu0 %4353
    %v4355 = vadd.f32 %v4346, %v4347
    %4356 = vadd.xlane.f32.xlu0 %v4355
    %v4357 = vpop.xlane.xlu0 %4356
    %v4358 = vadd.f32 %v4348, %v4349
    %4359 = vadd.xlane.f32.xlu0 %v4358
    %v4360 = vpop.xlane.xlu0 %4359
    %v4361 = vadd.f32 %v4350, %v4351
    %4362 = vadd.xlane.f32.xlu0 %v4361
    %v4363 = vpop.xlane.xlu0 %4362
    %v4364 = vmul.f32 %v4354, 0.0625
    %v4365 = vmul.f32 %v4357, 0.0625
    %v4366 = vmul.f32 %v4360, 0.0625
    %v4367 = vmul.f32 %v4363, 0.0625
    %v4368 = vmul.f32 %v4364, 1.442695
    %v4369 = vpow.pop %v4368
    %v4370 = vmul.f32 %v4365, 1.442695
    %v4371 = vpow.pop %v4370
    %v4372 = vmul.f32 %v4366, 1.442695
    %v4373 = vpow.pop %v4372
    %v4374 = vmul.f32 %v4367, 1.442695
    %v4375 = vpow.pop %v4374
    %v4376 = vadd.f32 %v4308, %v4369
    %v4377 = vadd.f32 %v4309, %v4371
    %v4378 = vadd.f32 %v4310, %v4373
    %v4379 = vadd.f32 %v4311, %v4375
    %v4380 = vmul.f32 %v4369, %v4260
    %v4381 = vmul.f32 %v4369, %v4261
    %v4382 = vmul.f32 %v4371, %v4262
    %v4383 = vmul.f32 %v4371, %v4263
    %v4384 = vmul.f32 %v4373, %v4264
    %v4385 = vmul.f32 %v4373, %v4265
    %v4386 = vmul.f32 %v4375, %v4266
    %v4387 = vmul.f32 %v4375, %v4267
    %v4388 = vadd.f32 %v4320, %v4380
    %v4389 = vadd.f32 %v4321, %v4381
    %v4390 = vadd.f32 %v4322, %v4382
    %v4391 = vadd.f32 %v4323, %v4383
    %v4392 = vadd.f32 %v4324, %v4384
    %v4393 = vadd.f32 %v4325, %v4385
    %v4394 = vadd.f32 %v4326, %v4386
    %v4395 = vadd.f32 %v4327, %v4387
    %v4396 = vadd.f32 %v4328, %v3480
    %v4397 = vadd.f32 %v4329, %v3481
    %v4398 = vadd.f32 %v4330, %v3482
    %v4399 = vadd.f32 %v4331, %v3483
    %v4400 = vadd.f32 %v4332, %v3484
    %v4401 = vadd.f32 %v4333, %v3485
    %v4402 = vadd.f32 %v4334, %v3486
    %v4403 = vadd.f32 %v4335, %v3487
    %v4404 = vadd.f32 %v4336, %v1244
    %v4405 = vadd.f32 %v4337, %v1245
    %v4406 = vadd.f32 %v4338, %v1246
    %v4407 = vadd.f32 %v4339, %v1247
    %v4408 = vadd.f32 %v4340, %v1248
    %v4409 = vadd.f32 %v4341, %v1249
    %v4410 = vadd.f32 %v4342, %v1250
    %v4411 = vadd.f32 %v4343, %v1251
    %v4412 = vmul.f32 %v1824, %v2966
    %v4413 = vmul.f32 %v1825, %v2967
    %v4414 = vmul.f32 %v1826, %v2968
    %v4415 = vmul.f32 %v1827, %v2969
    %v4416 = vmul.f32 %v1828, %v2970
    %v4417 = vmul.f32 %v1829, %v2971
    %v4418 = vmul.f32 %v1830, %v2972
    %v4419 = vmul.f32 %v1831, %v2973
    %v4420 = vadd.f32 %v4412, %v4413
    %4421 = vadd.xlane.f32.xlu0 %v4420
    %v4422 = vpop.xlane.xlu0 %4421
    %v4423 = vadd.f32 %v4414, %v4415
    %4424 = vadd.xlane.f32.xlu0 %v4423
    %v4425 = vpop.xlane.xlu0 %4424
    %v4426 = vadd.f32 %v4416, %v4417
    %4427 = vadd.xlane.f32.xlu0 %v4426
    %v4428 = vpop.xlane.xlu0 %4427
    %v4429 = vadd.f32 %v4418, %v4419
    %4430 = vadd.xlane.f32.xlu0 %v4429
    %v4431 = vpop.xlane.xlu0 %4430
    %v4432 = vmul.f32 %v4422, 0.0625
    %v4433 = vmul.f32 %v4425, 0.0625
    %v4434 = vmul.f32 %v4428, 0.0625
    %v4435 = vmul.f32 %v4431, 0.0625
    %v4436 = vmul.f32 %v4432, 1.442695
    %v4437 = vpow.pop %v4436
    %v4438 = vmul.f32 %v4433, 1.442695
    %v4439 = vpow.pop %v4438
    %v4440 = vmul.f32 %v4434, 1.442695
    %v4441 = vpow.pop %v4440
    %v4442 = vmul.f32 %v4435, 1.442695
    %v4443 = vpow.pop %v4442
    %v4444 = vadd.f32 %v4376, %v4437
    %v4445 = vadd.f32 %v4377, %v4439
    %v4446 = vadd.f32 %v4378, %v4441
    %v4447 = vadd.f32 %v4379, %v4443
    %v4448 = vmul.f32 %v4437, %v4268
    %v4449 = vmul.f32 %v4437, %v4269
    %v4450 = vmul.f32 %v4439, %v4270
    %v4451 = vmul.f32 %v4439, %v4271
    %v4452 = vmul.f32 %v4441, %v4272
    %v4453 = vmul.f32 %v4441, %v4273
    %v4454 = vmul.f32 %v4443, %v4274
    %v4455 = vmul.f32 %v4443, %v4275
    %v4456 = vadd.f32 %v4388, %v4448
    %v4457 = vadd.f32 %v4389, %v4449
    %v4458 = vadd.f32 %v4390, %v4450
    %v4459 = vadd.f32 %v4391, %v4451
    %v4460 = vadd.f32 %v4392, %v4452
    %v4461 = vadd.f32 %v4393, %v4453
    %v4462 = vadd.f32 %v4394, %v4454
    %v4463 = vadd.f32 %v4395, %v4455
    %v4464 = vadd.f32 %v4396, %v3488
    %v4465 = vadd.f32 %v4397, %v3489
    %v4466 = vadd.f32 %v4398, %v3490
    %v4467 = vadd.f32 %v4399, %v3491
    %v4468 = vadd.f32 %v4400, %v3492
    %v4469 = vadd.f32 %v4401, %v3493
    %v4470 = vadd.f32 %v4402, %v3494
    %v4471 = vadd.f32 %v4403, %v3495
    %v4472 = vadd.f32 %v4404, %v1252
    %v4473 = vadd.f32 %v4405, %v1253
    %v4474 = vadd.f32 %v4406, %v1254
    %v4475 = vadd.f32 %v4407, %v1255
    %v4476 = vadd.f32 %v4408, %v1256
    %v4477 = vadd.f32 %v4409, %v1257
    %v4478 = vadd.f32 %v4410, %v1258
    %v4479 = vadd.f32 %v4411, %v1259
    %v4480 = vrcp.pop %v4444
    %v4481 = vrcp.pop %v4445
    %v4482 = vrcp.pop %v4446
    %v4483 = vrcp.pop %v4447
    %v4484 = vmul.f32 %v4456, %v4480
    %v4485 = vmul.f32 %v4457, %v4480
    %v4486 = vmul.f32 %v4458, %v4481
    %v4487 = vmul.f32 %v4459, %v4481
    %v4488 = vmul.f32 %v4460, %v4482
    %v4489 = vmul.f32 %v4461, %v4482
    %v4490 = vmul.f32 %v4462, %v4483
    %v4491 = vmul.f32 %v4463, %v4483
    %v4492 = vmul.f32 %v4464, 0.33333334
    %v4493 = vmul.f32 %v4465, 0.33333334
    %v4494 = vmul.f32 %v4466, 0.33333334
    %v4495 = vmul.f32 %v4467, 0.33333334
    %v4496 = vmul.f32 %v4468, 0.33333334
    %v4497 = vmul.f32 %v4469, 0.33333334
    %v4498 = vmul.f32 %v4470, 0.33333334
    %v4499 = vmul.f32 %v4471, 0.33333334
    %v4500 = vmul.f32 %v4472, 0.33333334
    %v4501 = vmul.f32 %v4473, 0.33333334
    %v4502 = vmul.f32 %v4474, 0.33333334
    %v4503 = vmul.f32 %v4475, 0.33333334
    %v4504 = vmul.f32 %v4476, 0.33333334
    %v4505 = vmul.f32 %v4477, 0.33333334
    %v4506 = vmul.f32 %v4478, 0.33333334
    %v4507 = vmul.f32 %v4479, 0.33333334
    %v4508 = vadd.f32 %v4492, %v4484
    %v4509 = vadd.f32 %v4493, %v4485
    %v4510 = vadd.f32 %v4494, %v4486
    %v4511 = vadd.f32 %v4495, %v4487
    %v4512 = vadd.f32 %v4496, %v4488
    %v4513 = vadd.f32 %v4497, %v4489
    %v4514 = vadd.f32 %v4498, %v4490
    %v4515 = vadd.f32 %v4499, %v4491
    %v4516 = vadd.f32 %v4508, %v4509
    %4517 = vadd.xlane.f32.xlu0 %v4516
    %v4518 = vpop.xlane.xlu0 %4517
    %v4519 = vadd.f32 %v4510, %v4511
    %4520 = vadd.xlane.f32.xlu0 %v4519
    %v4521 = vpop.xlane.xlu0 %4520
    %v4522 = vadd.f32 %v4512, %v4513
    %4523 = vadd.xlane.f32.xlu0 %v4522
    %v4524 = vpop.xlane.xlu0 %4523
    %v4525 = vadd.f32 %v4514, %v4515
    %4526 = vadd.xlane.f32.xlu0 %v4525
    %v4527 = vpop.xlane.xlu0 %4526
    %v4528 = vrcp.pop 256.0
    %v4529 = vmul.f32 256.0, %v4528
    %v4530 = vsub.f32 1.0, %v4529
    %v4531 = vmul.f32 %v4528, %v4530
    %v4532 = vadd.f32 %v4528, %v4531
    %vm4533 = vweird.f32 %v4528
    %v4534 = vsel %vm4533, %v4528, %v4532
    %v4535 = vmul.f32 %v4518, %v4534
    %v4536 = vmul.f32 %v4521, %v4534
    %v4537 = vmul.f32 %v4524, %v4534
    %v4538 = vmul.f32 %v4527, %v4534
    %v4539 = vsub.f32 %v4508, %v4535
    %v4540 = vsub.f32 %v4509, %v4535
    %v4541 = vsub.f32 %v4510, %v4536
    %v4542 = vsub.f32 %v4511, %v4536
    %v4543 = vsub.f32 %v4512, %v4537
    %v4544 = vsub.f32 %v4513, %v4537
    %v4545 = vsub.f32 %v4514, %v4538
    %v4546 = vsub.f32 %v4515, %v4538
    %v4547 = vmul.f32 %v4539, %v4539
    %v4548 = vmul.f32 %v4540, %v4540
    %v4549 = vmul.f32 %v4541, %v4541
    %v4550 = vmul.f32 %v4542, %v4542
    %v4551 = vmul.f32 %v4543, %v4543
    %v4552 = vmul.f32 %v4544, %v4544
    %v4553 = vmul.f32 %v4545, %v4545
    %v4554 = vmul.f32 %v4546, %v4546
    %v4555 = vadd.f32 %v4547, %v4548
    %4556 = vadd.xlane.f32.xlu0 %v4555
    %v4557 = vpop.xlane.xlu0 %4556
    %v4558 = vadd.f32 %v4549, %v4550
    %4559 = vadd.xlane.f32.xlu0 %v4558
    %v4560 = vpop.xlane.xlu0 %4559
    %v4561 = vadd.f32 %v4551, %v4552
    %4562 = vadd.xlane.f32.xlu0 %v4561
    %v4563 = vpop.xlane.xlu0 %4562
    %v4564 = vadd.f32 %v4553, %v4554
    %4565 = vadd.xlane.f32.xlu0 %v4564
    %v4566 = vpop.xlane.xlu0 %4565
    %v4567 = vmul.f32 %v4557, %v4534
    %v4568 = vmul.f32 %v4560, %v4534
    %v4569 = vmul.f32 %v4563, %v4534
    %v4570 = vmul.f32 %v4566, %v4534
    %v4571 = vadd.f32 %v4567, 1e-05
    %v4572 = vadd.f32 %v4568, 1e-05
    %v4573 = vadd.f32 %v4569, 1e-05
    %v4574 = vadd.f32 %v4570, 1e-05
    %v4575 = vrsqrt.pop %v4571
    %v4576 = vmul.f32 %v4575, %v4571
    %v4577 = vmul.f32 %v4576, %v4575
    %v4578 = vmul.f32 0.5, %v4577
    %v4579 = vsub.f32 1.5, %v4578
    %v4580 = vmul.f32 %v4575, %v4579
    %vm4581 = vweird.f32 %v4571
    %vm4582 = vweird.f32 %v4575
    %vm4583 = vmor %vm4581, %vm4582
    %v4584 = vsel %vm4583, %v4575, %v4580
    %v4585 = vrsqrt.pop %v4572
    %v4586 = vmul.f32 %v4585, %v4572
    %v4587 = vmul.f32 %v4586, %v4585
    %v4588 = vmul.f32 0.5, %v4587
    %v4589 = vsub.f32 1.5, %v4588
    %v4590 = vmul.f32 %v4585, %v4589
    %vm4591 = vweird.f32 %v4572
    %vm4592 = vweird.f32 %v4585
    %vm4593 = vmor %vm4591, %vm4592
    %v4594 = vsel %vm4593, %v4585, %v4590
    %v4595 = vrsqrt.pop %v4573
    %v4596 = vmul.f32 %v4595, %v4573
    %v4597 = vmul.f32 %v4596, %v4595
    %v4598 = vmul.f32 0.5, %v4597
    %v4599 = vsub.f32 1.5, %v4598
    %v4600 = vmul.f32 %v4595, %v4599
    %vm4601 = vweird.f32 %v4573
    %vm4602 = vweird.f32 %v4595
    %vm4603 = vmor %vm4601, %vm4602
    %v4604 = vsel %vm4603, %v4595, %v4600
    %v4605 = vrsqrt.pop %v4574
    %v4606 = vmul.f32 %v4605, %v4574
    %v4607 = vmul.f32 %v4606, %v4605
    %v4608 = vmul.f32 0.5, %v4607
    %v4609 = vsub.f32 1.5, %v4608
    %v4610 = vmul.f32 %v4605, %v4609
    %vm4611 = vweird.f32 %v4574
    %vm4612 = vweird.f32 %v4605
    %vm4613 = vmor %vm4611, %vm4612
    %v4614 = vsel %vm4613, %v4605, %v4610
    %v4615 = vmul.f32 %v4539, %v4584
    %v4616 = vmul.f32 %v4540, %v4584
    %v4617 = vmul.f32 %v4541, %v4594
    %v4618 = vmul.f32 %v4542, %v4594
    %v4619 = vmul.f32 %v4543, %v4604
    %v4620 = vmul.f32 %v4544, %v4604
    %v4621 = vmul.f32 %v4545, %v4614
    %v4622 = vmul.f32 %v4546, %v4614
    %v4623 = vld [vmem:[%s65] sm:$0x3]
    %v4625 = vperm.slane %v4623, 0
    %v4626 = vperm.slane %v4623, 1
    %v4629 = vmul.f32 %v4615, %v4625
    %v4630 = vmul.f32 %v4616, %v4626
    %v4631 = vmul.f32 %v4617, %v4625
    %v4632 = vmul.f32 %v4618, %v4626
    %v4633 = vmul.f32 %v4619, %v4625
    %v4634 = vmul.f32 %v4620, %v4626
    %v4635 = vmul.f32 %v4621, %v4625
    %v4636 = vmul.f32 %v4622, %v4626
    %v4637 = vld [vmem:[#allocation43] sm:$0x3]
    %v4639 = vperm.slane %v4637, 0
    %v4640 = vperm.slane %v4637, 1
    %v4643 = vadd.f32 %v4629, %v4639
    %v4644 = vadd.f32 %v4630, %v4640
    %v4645 = vadd.f32 %v4631, %v4639
    %v4646 = vadd.f32 %v4632, %v4640
    %v4647 = vadd.f32 %v4633, %v4639
    %v4648 = vadd.f32 %v4634, %v4640
    %v4649 = vadd.f32 %v4635, %v4639
    %v4650 = vadd.f32 %v4636, %v4640
    %v4651 = vadd.f32 %v2186, %v4500
    %v4652 = vadd.f32 %v2187, %v4501
    %v4653 = vadd.f32 %v2188, %v4502
    %v4654 = vadd.f32 %v2189, %v4503
    %v4655 = vadd.f32 %v2190, %v4504
    %v4656 = vadd.f32 %v2191, %v4505
    %v4657 = vadd.f32 %v2192, %v4506
    %v4658 = vadd.f32 %v2193, %v4507
    %v4659 = vadd.f32 %v4651, %v1228
    %v4660 = vadd.f32 %v4652, %v1229
    %v4661 = vadd.f32 %v4653, %v1230
    %v4662 = vadd.f32 %v4654, %v1231
    %v4663 = vadd.f32 %v4655, %v1232
    %v4664 = vadd.f32 %v4656, %v1233
    %v4665 = vadd.f32 %v4657, %v1234
    %v4666 = vadd.f32 %v4658, %v1235
    %v4667 = vadd.f32 %v4659, %v4660
    %4668 = vadd.xlane.f32.xlu0 %v4667
    %v4669 = vpop.xlane.xlu0 %4668
    %v4670 = vadd.f32 %v4661, %v4662
    %4671 = vadd.xlane.f32.xlu0 %v4670
    %v4672 = vpop.xlane.xlu0 %4671
    %v4673 = vadd.f32 %v4663, %v4664
    %4674 = vadd.xlane.f32.xlu0 %v4673
    %v4675 = vpop.xlane.xlu0 %4674
    %v4676 = vadd.f32 %v4665, %v4666
    %4677 = vadd.xlane.f32.xlu0 %v4676
    %v4678 = vpop.xlane.xlu0 %4677
    %v4679 = vmul.f32 %v4669, %v4534
    %v4680 = vmul.f32 %v4672, %v4534
    %v4681 = vmul.f32 %v4675, %v4534
    %v4682 = vmul.f32 %v4678, %v4534
    %v4683 = vsub.f32 %v4659, %v4679
    %v4684 = vsub.f32 %v4660, %v4679
    %v4685 = vsub.f32 %v4661, %v4680
    %v4686 = vsub.f32 %v4662, %v4680
    %v4687 = vsub.f32 %v4663, %v4681
    %v4688 = vsub.f32 %v4664, %v4681
    %v4689 = vsub.f32 %v4665, %v4682
    %v4690 = vsub.f32 %v4666, %v4682
    %v4691 = vmul.f32 %v4683, %v4683
    %v4692 = vmul.f32 %v4684, %v4684
    %v4693 = vmul.f32 %v4685, %v4685
    %v4694 = vmul.f32 %v4686, %v4686
    %v4695 = vmul.f32 %v4687, %v4687
    %v4696 = vmul.f32 %v4688, %v4688
    %v4697 = vmul.f32 %v4689, %v4689
    %v4698 = vmul.f32 %v4690, %v4690
    %v4699 = vadd.f32 %v4691, %v4692
    %4700 = vadd.xlane.f32.xlu0 %v4699
    %v4701 = vpop.xlane.xlu0 %4700
    %v4702 = vadd.f32 %v4693, %v4694
    %4703 = vadd.xlane.f32.xlu0 %v4702
    %v4704 = vpop.xlane.xlu0 %4703
    %v4705 = vadd.f32 %v4695, %v4696
    %4706 = vadd.xlane.f32.xlu0 %v4705
    %v4707 = vpop.xlane.xlu0 %4706
    %v4708 = vadd.f32 %v4697, %v4698
    %4709 = vadd.xlane.f32.xlu0 %v4708
    %v4710 = vpop.xlane.xlu0 %4709
    %v4711 = vmul.f32 %v4701, %v4534
    %v4712 = vmul.f32 %v4704, %v4534
    %v4713 = vmul.f32 %v4707, %v4534
    %v4714 = vmul.f32 %v4710, %v4534
    %v4715 = vadd.f32 %v4711, 1e-05
    %v4716 = vadd.f32 %v4712, 1e-05
    %v4717 = vadd.f32 %v4713, 1e-05
    %v4718 = vadd.f32 %v4714, 1e-05
    %v4719 = vrsqrt.pop %v4715
    %v4720 = vmul.f32 %v4719, %v4715
    %v4721 = vmul.f32 %v4720, %v4719
    %v4722 = vmul.f32 0.5, %v4721
    %v4723 = vsub.f32 1.5, %v4722
    %v4724 = vmul.f32 %v4719, %v4723
    %vm4725 = vweird.f32 %v4715
    %vm4726 = vweird.f32 %v4719
    %vm4727 = vmor %vm4725, %vm4726
    %v4728 = vsel %vm4727, %v4719, %v4724
    %v4729 = vrsqrt.pop %v4716
    %v4730 = vmul.f32 %v4729, %v4716
    %v4731 = vmul.f32 %v4730, %v4729
    %v4732 = vmul.f32 0.5, %v4731
    %v4733 = vsub.f32 1.5, %v4732
    %v4734 = vmul.f32 %v4729, %v4733
    %vm4735 = vweird.f32 %v4716
    %vm4736 = vweird.f32 %v4729
    %vm4737 = vmor %vm4735, %vm4736
    %v4738 = vsel %vm4737, %v4729, %v4734
    %v4739 = vrsqrt.pop %v4717
    %v4740 = vmul.f32 %v4739, %v4717
    %v4741 = vmul.f32 %v4740, %v4739
    %v4742 = vmul.f32 0.5, %v4741
    %v4743 = vsub.f32 1.5, %v4742
    %v4744 = vmul.f32 %v4739, %v4743
    %vm4745 = vweird.f32 %v4717
    %vm4746 = vweird.f32 %v4739
    %vm4747 = vmor %vm4745, %vm4746
    %v4748 = vsel %vm4747, %v4739, %v4744
    %v4749 = vrsqrt.pop %v4718
    %v4750 = vmul.f32 %v4749, %v4718
    %v4751 = vmul.f32 %v4750, %v4749
    %v4752 = vmul.f32 0.5, %v4751
    %v4753 = vsub.f32 1.5, %v4752
    %v4754 = vmul.f32 %v4749, %v4753
    %vm4755 = vweird.f32 %v4718
    %vm4756 = vweird.f32 %v4749
    %vm4757 = vmor %vm4755, %vm4756
    %v4758 = vsel %vm4757, %v4749, %v4754
    %v4759 = vmul.f32 %v4683, %v4728
    %v4760 = vmul.f32 %v4684, %v4728
    %v4761 = vmul.f32 %v4685, %v4738
    %v4762 = vmul.f32 %v4686, %v4738
    %v4763 = vmul.f32 %v4687, %v4748
    %v4764 = vmul.f32 %v4688, %v4748
    %v4765 = vmul.f32 %v4689, %v4758
    %v4766 = vmul.f32 %v4690, %v4758
    %v4767 = vld [vmem:[%s69] sm:$0x3]
    %v4769 = vperm.slane %v4767, 0
    %v4770 = vperm.slane %v4767, 1
    %v4773 = vmul.f32 %v4759, %v4769
    %v4774 = vmul.f32 %v4760, %v4770
    %v4775 = vmul.f32 %v4761, %v4769
    %v4776 = vmul.f32 %v4762, %v4770
    %v4777 = vmul.f32 %v4763, %v4769
    %v4778 = vmul.f32 %v4764, %v4770
    %v4779 = vmul.f32 %v4765, %v4769
    %v4780 = vmul.f32 %v4766, %v4770
    %v4781 = vld [vmem:[#allocation44] sm:$0x3]
    %v4783 = vperm.slane %v4781, 0
    %v4784 = vperm.slane %v4781, 1
    %v4787 = vadd.f32 %v4773, %v4783
    %v4788 = vadd.f32 %v4774, %v4784
    %v4789 = vadd.f32 %v4775, %v4783
    %v4790 = vadd.f32 %v4776, %v4784
    %v4791 = vadd.f32 %v4777, %v4783
    %v4792 = vadd.f32 %v4778, %v4784
    %v4793 = vadd.f32 %v4779, %v4783
    %v4794 = vadd.f32 %v4780, %v4784
    %v4795 = vpack.c.bf16 %v4789, %v4787
    %v4796 = vpack.c.bf16 %v4790, %v4788
    %v4797 = vpack.c.bf16 %v4793, %v4791
    %v4798 = vpack.c.bf16 %v4794, %v4792
    %v4799 = vld [vmem:[#allocation34] sm:$0xff]
    %v4800 = vld [vmem:[#allocation34 + $0x8] sm:$0xff]
    %v4801 = vld [vmem:[#allocation34 + $0x10] sm:$0xff]
    %v4802 = vld [vmem:[#allocation34 + $0x18] sm:$0xff]
    %v4803 = vld [vmem:[#allocation34 + $0x20] sm:$0xff]
    %v4804 = vld [vmem:[#allocation34 + $0x28] sm:$0xff]
    %v4805 = vld [vmem:[#allocation34 + $0x30] sm:$0xff]
    %v4806 = vld [vmem:[#allocation34 + $0x38] sm:$0xff]
    %v4807 = vld [vmem:[#allocation34 + $0x40] sm:$0xff]
    %v4808 = vld [vmem:[#allocation34 + $0x48] sm:$0xff]
    %v4809 = vld [vmem:[#allocation34 + $0x50] sm:$0xff]
    %v4810 = vld [vmem:[#allocation34 + $0x58] sm:$0xff]
    %v4811 = vld [vmem:[#allocation34 + $0x60] sm:$0xff]
    %v4812 = vld [vmem:[#allocation34 + $0x68] sm:$0xff]
    %v4813 = vld [vmem:[#allocation34 + $0x70] sm:$0xff]
    %v4814 = vld [vmem:[#allocation34 + $0x78] sm:$0xff]
    %v4815 = vld [vmem:[#allocation34 + $0x80] sm:$0xff]
    %v4816 = vld [vmem:[#allocation34 + $0x88] sm:$0xff]
    %v4817 = vld [vmem:[#allocation34 + $0x90] sm:$0xff]
    %v4818 = vld [vmem:[#allocation34 + $0x98] sm:$0xff]
    %v4819 = vld [vmem:[#allocation34 + $0xa0] sm:$0xff]
    %v4820 = vld [vmem:[#allocation34 + $0xa8] sm:$0xff]
    %v4821 = vld [vmem:[#allocation34 + $0xb0] sm:$0xff]
    %v4822 = vld [vmem:[#allocation34 + $0xb8] sm:$0xff]
    %v4823 = vld [vmem:[#allocation34 + $0xc0] sm:$0xff]
    %v4824 = vld [vmem:[#allocation34 + $0xc8] sm:$0xff]
    %v4825 = vld [vmem:[#allocation34 + $0xd0] sm:$0xff]
    %v4826 = vld [vmem:[#allocation34 + $0xd8] sm:$0xff]
    %v4827 = vld [vmem:[#allocation34 + $0xe0] sm:$0xff]
    %v4828 = vld [vmem:[#allocation34 + $0xe8] sm:$0xff]
    %v4829 = vld [vmem:[#allocation34 + $0xf0] sm:$0xff]
    %v4830 = vld [vmem:[#allocation34 + $0xf8] sm:$0xff]
    %v4831 = vpack.c.bf16 %v4645, %v4643
    %v4832 = vpack.c.bf16 %v4646, %v4644
    %v4833 = vpack.c.bf16 %v4649, %v4647
    %v4834 = vpack.c.bf16 %v4650, %v4648
    %v4835 = vld [vmem:[#allocation35] sm:$0xff]
    %v4836 = vld [vmem:[#allocation35 + $0x8] sm:$0xff]
    %v4837 = vld [vmem:[#allocation35 + $0x10] sm:$0xff]
    %v4838 = vld [vmem:[#allocation35 + $0x18] sm:$0xff]
    %v4839 = vld [vmem:[#allocation35 + $0x20] sm:$0xff]
    %v4840 = vld [vmem:[#allocation35 + $0x28] sm:$0xff]
    %v4841 = vld [vmem:[#allocation35 + $0x30] sm:$0xff]
    %v4842 = vld [vmem:[#allocation35 + $0x38] sm:$0xff]
    %v4843 = vld [vmem:[#allocation35 + $0x40] sm:$0xff]
    %v4844 = vld [vmem:[#allocation35 + $0x48] sm:$0xff]
    %v4845 = vld [vmem:[#allocation35 + $0x50] sm:$0xff]
    %v4846 = vld [vmem:[#allocation35 + $0x58] sm:$0xff]
    %v4847 = vld [vmem:[#allocation35 + $0x60] sm:$0xff]
    %v4848 = vld [vmem:[#allocation35 + $0x68] sm:$0xff]
    %v4849 = vld [vmem:[#allocation35 + $0x70] sm:$0xff]
    %v4850 = vld [vmem:[#allocation35 + $0x78] sm:$0xff]
    %v4851 = vld [vmem:[#allocation35 + $0x80] sm:$0xff]
    %v4852 = vld [vmem:[#allocation35 + $0x88] sm:$0xff]
    %v4853 = vld [vmem:[#allocation35 + $0x90] sm:$0xff]
    %v4854 = vld [vmem:[#allocation35 + $0x98] sm:$0xff]
    %v4855 = vld [vmem:[#allocation35 + $0xa0] sm:$0xff]
    %v4856 = vld [vmem:[#allocation35 + $0xa8] sm:$0xff]
    %v4857 = vld [vmem:[#allocation35 + $0xb0] sm:$0xff]
    %v4858 = vld [vmem:[#allocation35 + $0xb8] sm:$0xff]
    %v4859 = vld [vmem:[#allocation35 + $0xc0] sm:$0xff]
    %v4860 = vld [vmem:[#allocation35 + $0xc8] sm:$0xff]
    %v4861 = vld [vmem:[#allocation35 + $0xd0] sm:$0xff]
    %v4862 = vld [vmem:[#allocation35 + $0xd8] sm:$0xff]
    %v4863 = vld [vmem:[#allocation35 + $0xe0] sm:$0xff]
    %v4864 = vld [vmem:[#allocation35 + $0xe8] sm:$0xff]
    %v4865 = vld [vmem:[#allocation35 + $0xf0] sm:$0xff]
    %v4866 = vld [vmem:[#allocation35 + $0xf8] sm:$0xff]
    %v4899 = vunpack.c.l.b16 %v4835
    %v4900 = vunpack.c.h.b16 %v4835
    %v4901 = vunpack.c.l.b16 %v4836
    %v4902 = vunpack.c.h.b16 %v4836
    %v4903 = vunpack.c.l.b16 %v4837
    %v4904 = vunpack.c.h.b16 %v4837
    %v4905 = vunpack.c.l.b16 %v4838
    %v4906 = vunpack.c.h.b16 %v4838
    %v4907 = vunpack.c.l.b16 %v4839
    %v4908 = vunpack.c.h.b16 %v4839
    %v4909 = vunpack.c.l.b16 %v4840
    %v4910 = vunpack.c.h.b16 %v4840
    %v4911 = vunpack.c.l.b16 %v4841
    %v4912 = vunpack.c.h.b16 %v4841
    %v4913 = vunpack.c.l.b16 %v4842
    %v4914 = vunpack.c.h.b16 %v4842
    %v4915 = vunpack.c.l.b16 %v4843
    %v4916 = vunpack.c.h.b16 %v4843
    %v4917 = vunpack.c.l.b16 %v4844
    %v4918 = vunpack.c.h.b16 %v4844
    %v4919 = vunpack.c.l.b16 %v4845
    %v4920 = vunpack.c.h.b16 %v4845
    %v4921 = vunpack.c.l.b16 %v4846
    %v4922 = vunpack.c.h.b16 %v4846
    %v4923 = vunpack.c.l.b16 %v4847
    %v4924 = vunpack.c.h.b16 %v4847
    %v4925 = vunpack.c.l.b16 %v4848
    %v4926 = vunpack.c.h.b16 %v4848
    %v4927 = vunpack.c.l.b16 %v4849
    %v4928 = vunpack.c.h.b16 %v4849
    %v4929 = vunpack.c.l.b16 %v4850
    %v4930 = vunpack.c.h.b16 %v4850
    %v4931 = vunpack.c.l.b16 %v4851
    %v4932 = vunpack.c.h.b16 %v4851
    %v4933 = vunpack.c.l.b16 %v4852
    %v4934 = vunpack.c.h.b16 %v4852
    %v4935 = vunpack.c.l.b16 %v4853
    %v4936 = vunpack.c.h.b16 %v4853
    %v4937 = vunpack.c.l.b16 %v4854
    %v4938 = vunpack.c.h.b16 %v4854
    %v4939 = vunpack.c.l.b16 %v4855
    %v4940 = vunpack.c.h.b16 %v4855
    %v4941 = vunpack.c.l.b16 %v4856
    %v4942 = vunpack.c.h.b16 %v4856
    %v4943 = vunpack.c.l.b16 %v4857
    %v4944 = vunpack.c.h.b16 %v4857
    %v4945 = vunpack.c.l.b16 %v4858
    %v4946 = vunpack.c.h.b16 %v4858
    %v4947 = vunpack.c.l.b16 %v4859
    %v4948 = vunpack.c.h.b16 %v4859
    %v4949 = vunpack.c.l.b16 %v4860
    %v4950 = vunpack.c.h.b16 %v4860
    %v4951 = vunpack.c.l.b16 %v4861
    %v4952 = vunpack.c.h.b16 %v4861
    %v4953 = vunpack.c.l.b16 %v4862
    %v4954 = vunpack.c.h.b16 %v4862
    %v4955 = vunpack.c.l.b16 %v4863
    %v4956 = vunpack.c.h.b16 %v4863
    %v4957 = vunpack.c.l.b16 %v4864
    %v4958 = vunpack.c.h.b16 %v4864
    %v4959 = vunpack.c.l.b16 %v4865
    %v4960 = vunpack.c.h.b16 %v4865
    %v4961 = vunpack.c.l.b16 %v4866
    %v4962 = vunpack.c.h.b16 %v4866
    %v4963 = vpack.c.b16 %v4901, %v4899
    %v4964 = vpack.c.b16 %v4902, %v4900
    %v4965 = vpack.c.b16 %v4905, %v4903
    %v4966 = vpack.c.b16 %v4906, %v4904
    %v4967 = vpack.c.b16 %v4909, %v4907
    %v4968 = vpack.c.b16 %v4910, %v4908
    %v4969 = vpack.c.b16 %v4913, %v4911
    %v4970 = vpack.c.b16 %v4914, %v4912
    %v4971 = vpack.c.b16 %v4917, %v4915
    %v4972 = vpack.c.b16 %v4918, %v4916
    %v4973 = vpack.c.b16 %v4921, %v4919
    %v4974 = vpack.c.b16 %v4922, %v4920
    %v4975 = vpack.c.b16 %v4925, %v4923
    %v4976 = vpack.c.b16 %v4926, %v4924
    %v4977 = vpack.c.b16 %v4929, %v4927
    %v4978 = vpack.c.b16 %v4930, %v4928
    %v4979 = vpack.c.b16 %v4933, %v4931
    %v4980 = vpack.c.b16 %v4934, %v4932
    %v4981 = vpack.c.b16 %v4937, %v4935
    %v4982 = vpack.c.b16 %v4938, %v4936
    %v4983 = vpack.c.b16 %v4941, %v4939
    %v4984 = vpack.c.b16 %v4942, %v4940
    %v4985 = vpack.c.b16 %v4945, %v4943
    %v4986 = vpack.c.b16 %v4946, %v4944
    %v4987 = vpack.c.b16 %v4949, %v4947
    %v4988 = vpack.c.b16 %v4950, %v4948
    %v4989 = vpack.c.b16 %v4953, %v4951
    %v4990 = vpack.c.b16 %v4954, %v4952
    %v4991 = vpack.c.b16 %v4957, %v4955
    %v4992 = vpack.c.b16 %v4958, %v4956
    %v4993 = vpack.c.b16 %v4961, %v4959
    %v4994 = vpack.c.b16 %v4962, %v4960
    %5027 = vmatpush.bf16.msra.mxu0 %v4977
    %5028 = vmatpush.bf16.msra.mxu0 %v4975
    %5029 = vmatpush.bf16.msra.mxu0 %v4973
    %5030 = vmatpush.bf16.msra.mxu0 %v4971
    %5031 = vmatpush.bf16.msra.mxu0 %v4969
    %5032 = vmatpush.bf16.msra.mxu0 %v4967
    %5033 = vmatpush.bf16.msra.mxu0 %v4965
    %5034 = vmatpush.bf16.msra.mxu0 %v4963
    %5035 = vmatmul.bf16.gmra.mxu0 %v4831
    %v5036 = vpop.f32.mrf.mxu0
    %v5037 = vadd.f32 0.0, %v5036
    %v5038 = vpop.f32.mrf.mxu0
    %v5039 = vadd.f32 0.0, %v5038
    %5040 = vmatmul.bf16.gmra.mxu0 %v4833
    %v5041 = vpop.f32.mrf.mxu0
    %v5042 = vadd.f32 0.0, %v5041
    %v5043 = vpop.f32.mrf.mxu0
    %v5044 = vadd.f32 0.0, %v5043
    %5045 = vdwg.mxu0
    %5046 = vmatpush.bf16.msra.mxu0 %v4993
    %5047 = vmatpush.bf16.msra.mxu0 %v4991
    %5048 = vmatpush.bf16.msra.mxu0 %v4989
    %5049 = vmatpush.bf16.msra.mxu0 %v4987
    %5050 = vmatpush.bf16.msra.mxu0 %v4985
    %5051 = vmatpush.bf16.msra.mxu0 %v4983
    %5052 = vmatpush.bf16.msra.mxu0 %v4981
    %5053 = vmatpush.bf16.msra.mxu0 %v4979
    %5054 = vmatmul.bf16.gmra.mxu0 %v4832
    %v5055 = vpop.f32.mrf.mxu0
    %v5056 = vadd.f32 %v5037, %v5055
    %v5057 = vpop.f32.mrf.mxu0
    %v5058 = vadd.f32 %v5039, %v5057
    %5059 = vmatmul.bf16.gmra.mxu0 %v4834
    %v5060 = vpop.f32.mrf.mxu0
    %v5061 = vadd.f32 %v5042, %v5060
    %v5062 = vpop.f32.mrf.mxu0
    %v5063 = vadd.f32 %v5044, %v5062
    %5064 = vdwg.mxu0
    %5065 = vmatpush.bf16.msra.mxu0 %v4978
    %5066 = vmatpush.bf16.msra.mxu0 %v4976
    %5067 = vmatpush.bf16.msra.mxu0 %v4974
    %5068 = vmatpush.bf16.msra.mxu0 %v4972
    %5069 = vmatpush.bf16.msra.mxu0 %v4970
    %5070 = vmatpush.bf16.msra.mxu0 %v4968
    %5071 = vmatpush.bf16.msra.mxu0 %v4966
    %5072 = vmatpush.bf16.msra.mxu0 %v4964
    %5073 = vmatmul.bf16.gmra.mxu0 %v4831
    %v5074 = vpop.f32.mrf.mxu0
    %v5075 = vadd.f32 0.0, %v5074
    %v5076 = vpop.f32.mrf.mxu0
    %v5077 = vadd.f32 0.0, %v5076
    %5078 = vmatmul.bf16.gmra.mxu0 %v4833
    %v5079 = vpop.f32.mrf.mxu0
    %v5080 = vadd.f32 0.0, %v5079
    %v5081 = vpop.f32.mrf.mxu0
    %v5082 = vadd.f32 0.0, %v5081
    %5083 = vdwg.mxu0
    %5084 = vmatpush.bf16.msra.mxu0 %v4994
    %5085 = vmatpush.bf16.msra.mxu0 %v4992
    %5086 = vmatpush.bf16.msra.mxu0 %v4990
    %5087 = vmatpush.bf16.msra.mxu0 %v4988
    %5088 = vmatpush.bf16.msra.mxu0 %v4986
    %5089 = vmatpush.bf16.msra.mxu0 %v4984
    %5090 = vmatpush.bf16.msra.mxu0 %v4982
    %5091 = vmatpush.bf16.msra.mxu0 %v4980
    %5092 = vmatmul.bf16.gmra.mxu0 %v4832
    %v5093 = vpop.f32.mrf.mxu0
    %v5094 = vadd.f32 %v5075, %v5093
    %v5095 = vpop.f32.mrf.mxu0
    %v5096 = vadd.f32 %v5077, %v5095
    %5097 = vmatmul.bf16.gmra.mxu0 %v4834
    %v5098 = vpop.f32.mrf.mxu0
    %v5099 = vadd.f32 %v5080, %v5098
    %v5100 = vpop.f32.mrf.mxu0
    %v5101 = vadd.f32 %v5082, %v5100
    %5102 = vdwg.mxu0
    %v5135 = vunpack.c.l.b16 %v4799
    %v5136 = vunpack.c.h.b16 %v4799
    %v5137 = vunpack.c.l.b16 %v4800
    %v5138 = vunpack.c.h.b16 %v4800
    %v5139 = vunpack.c.l.b16 %v4801
    %v5140 = vunpack.c.h.b16 %v4801
    %v5141 = vunpack.c.l.b16 %v4802
    %v5142 = vunpack.c.h.b16 %v4802
    %v5143 = vunpack.c.l.b16 %v4803
    %v5144 = vunpack.c.h.b16 %v4803
    %v5145 = vunpack.c.l.b16 %v4804
    %v5146 = vunpack.c.h.b16 %v4804
    %v5147 = vunpack.c.l.b16 %v4805
    %v5148 = vunpack.c.h.b16 %v4805
    %v5149 = vunpack.c.l.b16 %v4806
    %v5150 = vunpack.c.h.b16 %v4806
    %v5151 = vunpack.c.l.b16 %v4807
    %v5152 = vunpack.c.h.b16 %v4807
    %v5153 = vunpack.c.l.b16 %v4808
    %v5154 = vunpack.c.h.b16 %v4808
    %v5155 = vunpack.c.l.b16 %v4809
    %v5156 = vunpack.c.h.b16 %v4809
    %v5157 = vunpack.c.l.b16 %v4810
    %v5158 = vunpack.c.h.b16 %v4810
    %v5159 = vunpack.c.l.b16 %v4811
    %v5160 = vunpack.c.h.b16 %v4811
    %v5161 = vunpack.c.l.b16 %v4812
    %v5162 = vunpack.c.h.b16 %v4812
    %v5163 = vunpack.c.l.b16 %v4813
    %v5164 = vunpack.c.h.b16 %v4813
    %v5165 = vunpack.c.l.b16 %v4814
    %v5166 = vunpack.c.h.b16 %v4814
    %v5167 = vunpack.c.l.b16 %v4815
    %v5168 = vunpack.c.h.b16 %v4815
    %v5169 = vunpack.c.l.b16 %v4816
    %v5170 = vunpack.c.h.b16 %v4816
    %v5171 = vunpack.c.l.b16 %v4817
    %v5172 = vunpack.c.h.b16 %v4817
    %v5173 = vunpack.c.l.b16 %v4818
    %v5174 = vunpack.c.h.b16 %v4818
    %v5175 = vunpack.c.l.b16 %v4819
    %v5176 = vunpack.c.h.b16 %v4819
    %v5177 = vunpack.c.l.b16 %v4820
    %v5178 = vunpack.c.h.b16 %v4820
    %v5179 = vunpack.c.l.b16 %v4821
    %v5180 = vunpack.c.h.b16 %v4821
    %v5181 = vunpack.c.l.b16 %v4822
    %v5182 = vunpack.c.h.b16 %v4822
    %v5183 = vunpack.c.l.b16 %v4823
    %v5184 = vunpack.c.h.b16 %v4823
    %v5185 = vunpack.c.l.b16 %v4824
    %v5186 = vunpack.c.h.b16 %v4824
    %v5187 = vunpack.c.l.b16 %v4825
    %v5188 = vunpack.c.h.b16 %v4825
    %v5189 = vunpack.c.l.b16 %v4826
    %v5190 = vunpack.c.h.b16 %v4826
    %v5191 = vunpack.c.l.b16 %v4827
    %v5192 = vunpack.c.h.b16 %v4827
    %v5193 = vunpack.c.l.b16 %v4828
    %v5194 = vunpack.c.h.b16 %v4828
    %v5195 = vunpack.c.l.b16 %v4829
    %v5196 = vunpack.c.h.b16 %v4829
    %v5197 = vunpack.c.l.b16 %v4830
    %v5198 = vunpack.c.h.b16 %v4830
    %v5199 = vpack.c.b16 %v5137, %v5135
    %v5200 = vpack.c.b16 %v5138, %v5136
    %v5201 = vpack.c.b16 %v5141, %v5139
    %v5202 = vpack.c.b16 %v5142, %v5140
    %v5203 = vpack.c.b16 %v5145, %v5143
    %v5204 = vpack.c.b16 %v5146, %v5144
    %v5205 = vpack.c.b16 %v5149, %v5147
    %v5206 = vpack.c.b16 %v5150, %v5148
    %v5207 = vpack.c.b16 %v5153, %v5151
    %v5208 = vpack.c.b16 %v5154, %v5152
    %v5209 = vpack.c.b16 %v5157, %v5155
    %v5210 = vpack.c.b16 %v5158, %v5156
    %v5211 = vpack.c.b16 %v5161, %v5159
    %v5212 = vpack.c.b16 %v5162, %v5160
    %v5213 = vpack.c.b16 %v5165, %v5163
    %v5214 = vpack.c.b16 %v5166, %v5164
    %v5215 = vpack.c.b16 %v5169, %v5167
    %v5216 = vpack.c.b16 %v5170, %v5168
    %v5217 = vpack.c.b16 %v5173, %v5171
    %v5218 = vpack.c.b16 %v5174, %v5172
    %v5219 = vpack.c.b16 %v5177, %v5175
    %v5220 = vpack.c.b16 %v5178, %v5176
    %v5221 = vpack.c.b16 %v5181, %v5179
    %v5222 = vpack.c.b16 %v5182, %v5180
    %v5223 = vpack.c.b16 %v5185, %v5183
    %v5224 = vpack.c.b16 %v5186, %v5184
    %v5225 = vpack.c.b16 %v5189, %v5187
    %v5226 = vpack.c.b16 %v5190, %v5188
    %v5227 = vpack.c.b16 %v5193, %v5191
    %v5228 = vpack.c.b16 %v5194, %v5192
    %v5229 = vpack.c.b16 %v5197, %v5195
    %v5230 = vpack.c.b16 %v5198, %v5196
    %5263 = vmatpush.bf16.msra.mxu0 %v5213
    %5264 = vmatpush.bf16.msra.mxu0 %v5211
    %5265 = vmatpush.bf16.msra.mxu0 %v5209
    %5266 = vmatpush.bf16.msra.mxu0 %v5207
    %5267 = vmatpush.bf16.msra.mxu0 %v5205
    %5268 = vmatpush.bf16.msra.mxu0 %v5203
    %5269 = vmatpush.bf16.msra.mxu0 %v5201
    %5270 = vmatpush.bf16.msra.mxu0 %v5199
    %5271 = vmatmul.bf16.gmra.mxu0 %v4795
    %v5272 = vpop.f32.mrf.mxu0
    %v5273 = vadd.f32 %v5056, %v5272
    %v5274 = vpop.f32.mrf.mxu0
    %v5275 = vadd.f32 %v5058, %v5274
    %5276 = vmatmul.bf16.gmra.mxu0 %v4797
    %v5277 = vpop.f32.mrf.mxu0
    %v5278 = vadd.f32 %v5061, %v5277
    %v5279 = vpop.f32.mrf.mxu0
    %v5280 = vadd.f32 %v5063, %v5279
    %5281 = vdwg.mxu0
    %5282 = vmatpush.bf16.msra.mxu0 %v5229
    %5283 = vmatpush.bf16.msra.mxu0 %v5227
    %5284 = vmatpush.bf16.msra.mxu0 %v5225
    %5285 = vmatpush.bf16.msra.mxu0 %v5223
    %5286 = vmatpush.bf16.msra.mxu0 %v5221
    %5287 = vmatpush.bf16.msra.mxu0 %v5219
    %5288 = vmatpush.bf16.msra.mxu0 %v5217
    %5289 = vmatpush.bf16.msra.mxu0 %v5215
    %5290 = vmatmul.bf16.gmra.mxu0 %v4796
    %v5291 = vpop.f32.mrf.mxu0
    %v5292 = vadd.f32 %v5273, %v5291
    %v5293 = vpop.f32.mrf.mxu0
    %v5294 = vadd.f32 %v5275, %v5293
    %5295 = vmatmul.bf16.gmra.mxu0 %v4798
    %v5296 = vpop.f32.mrf.mxu0
    %v5297 = vadd.f32 %v5278, %v5296
    %v5298 = vpop.f32.mrf.mxu0
    %v5299 = vadd.f32 %v5280, %v5298
    %5300 = vdwg.mxu0
    %5301 = vmatpush.bf16.msra.mxu0 %v5214
    %5302 = vmatpush.bf16.msra.mxu0 %v5212
    %5303 = vmatpush.bf16.msra.mxu0 %v5210
    %5304 = vmatpush.bf16.msra.mxu0 %v5208
    %5305 = vmatpush.bf16.msra.mxu0 %v5206
    %5306 = vmatpush.bf16.msra.mxu0 %v5204
    %5307 = vmatpush.bf16.msra.mxu0 %v5202
    %5308 = vmatpush.bf16.msra.mxu0 %v5200
    %5309 = vmatmul.bf16.gmra.mxu0 %v4795
    %v5310 = vpop.f32.mrf.mxu0
    %v5311 = vadd.f32 %v5094, %v5310
    %v5312 = vpop.f32.mrf.mxu0
    %v5313 = vadd.f32 %v5096, %v5312
    %5314 = vmatmul.bf16.gmra.mxu0 %v4797
    %v5315 = vpop.f32.mrf.mxu0
    %v5316 = vadd.f32 %v5099, %v5315
    %v5317 = vpop.f32.mrf.mxu0
    %v5318 = vadd.f32 %v5101, %v5317
    %5319 = vdwg.mxu0
    %5320 = vmatpush.bf16.msra.mxu0 %v5230
    %5321 = vmatpush.bf16.msra.mxu0 %v5228
    %5322 = vmatpush.bf16.msra.mxu0 %v5226
    %5323 = vmatpush.bf16.msra.mxu0 %v5224
    %5324 = vmatpush.bf16.msra.mxu0 %v5222
    %5325 = vmatpush.bf16.msra.mxu0 %v5220
    %5326 = vmatpush.bf16.msra.mxu0 %v5218
    %5327 = vmatpush.bf16.msra.mxu0 %v5216
    %5328 = vmatmul.bf16.gmra.mxu0 %v4796
    %v5329 = vpop.f32.mrf.mxu0
    %v5330 = vadd.f32 %v5311, %v5329
    %v5331 = vpop.f32.mrf.mxu0
    %v5332 = vadd.f32 %v5313, %v5331
    %5333 = vmatmul.bf16.gmra.mxu0 %v4798
    %v5334 = vpop.f32.mrf.mxu0
    %v5335 = vadd.f32 %v5316, %v5334
    %v5336 = vpop.f32.mrf.mxu0
    %v5337 = vadd.f32 %v5318, %v5336
    %5338 = vdwg.mxu0
    %v5339 = vld [vmem:[#allocation37] sm:$0x3]
    %v5341 = vperm.slane %v5339, 0
    %v5342 = vperm.slane %v5339, 1
    %v5345 = vadd.f32 %v5292, %v5341
    %v5346 = vadd.f32 %v5330, %v5342
    %v5347 = vadd.f32 %v5294, %v5341
    %v5348 = vadd.f32 %v5332, %v5342
    %v5349 = vadd.f32 %v5297, %v5341
    %v5350 = vadd.f32 %v5335, %v5342
    %v5351 = vadd.f32 %v5299, %v5341
    %v5352 = vadd.f32 %v5337, %v5342
    %v5353 = vtanh.pop %v5345
    %v5354 = vtanh.pop %v5346
    %v5355 = vtanh.pop %v5347
    %v5356 = vtanh.pop %v5348
    %v5357 = vtanh.pop %v5349
    %v5358 = vtanh.pop %v5350
    %v5359 = vtanh.pop %v5351
    %v5360 = vtanh.pop %v5352
    %v5361 = vpack.c.bf16 %v5355, %v5353
    %v5362 = vpack.c.bf16 %v5356, %v5354
    %v5363 = vpack.c.bf16 %v5359, %v5357
    %v5364 = vpack.c.bf16 %v5360, %v5358
    %v5365 = vld [vmem:[#allocation38] sm:$0xff]
    %v5366 = vld [vmem:[#allocation38 + $0x8] sm:$0xff]
    %v5367 = vld [vmem:[#allocation38 + $0x10] sm:$0xff]
    %v5368 = vld [vmem:[#allocation38 + $0x18] sm:$0xff]
    %v5369 = vld [vmem:[#allocation38 + $0x20] sm:$0xff]
    %v5370 = vld [vmem:[#allocation38 + $0x28] sm:$0xff]
    %v5371 = vld [vmem:[#allocation38 + $0x30] sm:$0xff]
    %v5372 = vld [vmem:[#allocation38 + $0x38] sm:$0xff]
    %v5373 = vld [vmem:[#allocation38 + $0x40] sm:$0xff]
    %v5374 = vld [vmem:[#allocation38 + $0x48] sm:$0xff]
    %v5375 = vld [vmem:[#allocation38 + $0x50] sm:$0xff]
    %v5376 = vld [vmem:[#allocation38 + $0x58] sm:$0xff]
    %v5377 = vld [vmem:[#allocation38 + $0x60] sm:$0xff]
    %v5378 = vld [vmem:[#allocation38 + $0x68] sm:$0xff]
    %v5379 = vld [vmem:[#allocation38 + $0x70] sm:$0xff]
    %v5380 = vld [vmem:[#allocation38 + $0x78] sm:$0xff]
    %v5381 = vld [vmem:[#allocation38 + $0x80] sm:$0xff]
    %v5382 = vld [vmem:[#allocation38 + $0x88] sm:$0xff]
    %v5383 = vld [vmem:[#allocation38 + $0x90] sm:$0xff]
    %v5384 = vld [vmem:[#allocation38 + $0x98] sm:$0xff]
    %v5385 = vld [vmem:[#allocation38 + $0xa0] sm:$0xff]
    %v5386 = vld [vmem:[#allocation38 + $0xa8] sm:$0xff]
    %v5387 = vld [vmem:[#allocation38 + $0xb0] sm:$0xff]
    %v5388 = vld [vmem:[#allocation38 + $0xb8] sm:$0xff]
    %v5389 = vld [vmem:[#allocation38 + $0xc0] sm:$0xff]
    %v5390 = vld [vmem:[#allocation38 + $0xc8] sm:$0xff]
    %v5391 = vld [vmem:[#allocation38 + $0xd0] sm:$0xff]
    %v5392 = vld [vmem:[#allocation38 + $0xd8] sm:$0xff]
    %v5393 = vld [vmem:[#allocation38 + $0xe0] sm:$0xff]
    %v5394 = vld [vmem:[#allocation38 + $0xe8] sm:$0xff]
    %v5395 = vld [vmem:[#allocation38 + $0xf0] sm:$0xff]
    %v5396 = vld [vmem:[#allocation38 + $0xf8] sm:$0xff]
    %v5397 = vld [vmem:[#allocation40] sm:$0x3]
    %v5399 = vperm.slane %v5397, 0
    %v5400 = vperm.slane %v5397, 1
    %v5435 = vunpack.c.l.b16 %v5365
    %v5436 = vunpack.c.h.b16 %v5365
    %v5437 = vunpack.c.l.b16 %v5366
    %v5438 = vunpack.c.h.b16 %v5366
    %v5439 = vunpack.c.l.b16 %v5367
    %v5440 = vunpack.c.h.b16 %v5367
    %v5441 = vunpack.c.l.b16 %v5368
    %v5442 = vunpack.c.h.b16 %v5368
    %v5443 = vunpack.c.l.b16 %v5369
    %v5444 = vunpack.c.h.b16 %v5369
    %v5445 = vunpack.c.l.b16 %v5370
    %v5446 = vunpack.c.h.b16 %v5370
    %v5447 = vunpack.c.l.b16 %v5371
    %v5448 = vunpack.c.h.b16 %v5371
    %v5449 = vunpack.c.l.b16 %v5372
    %v5450 = vunpack.c.h.b16 %v5372
    %v5451 = vunpack.c.l.b16 %v5373
    %v5452 = vunpack.c.h.b16 %v5373
    %v5453 = vunpack.c.l.b16 %v5374
    %v5454 = vunpack.c.h.b16 %v5374
    %v5455 = vunpack.c.l.b16 %v5375
    %v5456 = vunpack.c.h.b16 %v5375
    %v5457 = vunpack.c.l.b16 %v5376
    %v5458 = vunpack.c.h.b16 %v5376
    %v5459 = vunpack.c.l.b16 %v5377
    %v5460 = vunpack.c.h.b16 %v5377
    %v5461 = vunpack.c.l.b16 %v5378
    %v5462 = vunpack.c.h.b16 %v5378
    %v5463 = vunpack.c.l.b16 %v5379
    %v5464 = vunpack.c.h.b16 %v5379
    %v5465 = vunpack.c.l.b16 %v5380
    %v5466 = vunpack.c.h.b16 %v5380
    %v5467 = vunpack.c.l.b16 %v5381
    %v5468 = vunpack.c.h.b16 %v5381
    %v5469 = vunpack.c.l.b16 %v5382
    %v5470 = vunpack.c.h.b16 %v5382
    %v5471 = vunpack.c.l.b16 %v5383
    %v5472 = vunpack.c.h.b16 %v5383
    %v5473 = vunpack.c.l.b16 %v5384
    %v5474 = vunpack.c.h.b16 %v5384
    %v5475 = vunpack.c.l.b16 %v5385
    %v5476 = vunpack.c.h.b16 %v5385
    %v5477 = vunpack.c.l.b16 %v5386
    %v5478 = vunpack.c.h.b16 %v5386
    %v5479 = vunpack.c.l.b16 %v5387
    %v5480 = vunpack.c.h.b16 %v5387
    %v5481 = vunpack.c.l.b16 %v5388
    %v5482 = vunpack.c.h.b16 %v5388
    %v5483 = vunpack.c.l.b16 %v5389
    %v5484 = vunpack.c.h.b16 %v5389
    %v5485 = vunpack.c.l.b16 %v5390
    %v5486 = vunpack.c.h.b16 %v5390
    %v5487 = vunpack.c.l.b16 %v5391
    %v5488 = vunpack.c.h.b16 %v5391
    %v5489 = vunpack.c.l.b16 %v5392
    %v5490 = vunpack.c.h.b16 %v5392
    %v5491 = vunpack.c.l.b16 %v5393
    %v5492 = vunpack.c.h.b16 %v5393
    %v5493 = vunpack.c.l.b16 %v5394
    %v5494 = vunpack.c.h.b16 %v5394
    %v5495 = vunpack.c.l.b16 %v5395
    %v5496 = vunpack.c.h.b16 %v5395
    %v5497 = vunpack.c.l.b16 %v5396
    %v5498 = vunpack.c.h.b16 %v5396
    %v5499 = vpack.c.b16 %v5437, %v5435
    %v5500 = vpack.c.b16 %v5438, %v5436
    %v5501 = vpack.c.b16 %v5441, %v5439
    %v5502 = vpack.c.b16 %v5442, %v5440
    %v5503 = vpack.c.b16 %v5445, %v5443
    %v5504 = vpack.c.b16 %v5446, %v5444
    %v5505 = vpack.c.b16 %v5449, %v5447
    %v5506 = vpack.c.b16 %v5450, %v5448
    %v5507 = vpack.c.b16 %v5453, %v5451
    %v5508 = vpack.c.b16 %v5454, %v5452
    %v5509 = vpack.c.b16 %v5457, %v5455
    %v5510 = vpack.c.b16 %v5458, %v5456
    %v5511 = vpack.c.b16 %v5461, %v5459
    %v5512 = vpack.c.b16 %v5462, %v5460
    %v5513 = vpack.c.b16 %v5465, %v5463
    %v5514 = vpack.c.b16 %v5466, %v5464
    %v5515 = vpack.c.b16 %v5469, %v5467
    %v5516 = vpack.c.b16 %v5470, %v5468
    %v5517 = vpack.c.b16 %v5473, %v5471
    %v5518 = vpack.c.b16 %v5474, %v5472
    %v5519 = vpack.c.b16 %v5477, %v5475
    %v5520 = vpack.c.b16 %v5478, %v5476
    %v5521 = vpack.c.b16 %v5481, %v5479
    %v5522 = vpack.c.b16 %v5482, %v5480
    %v5523 = vpack.c.b16 %v5485, %v5483
    %v5524 = vpack.c.b16 %v5486, %v5484
    %v5525 = vpack.c.b16 %v5489, %v5487
    %v5526 = vpack.c.b16 %v5490, %v5488
    %v5527 = vpack.c.b16 %v5493, %v5491
    %v5528 = vpack.c.b16 %v5494, %v5492
    %v5529 = vpack.c.b16 %v5497, %v5495
    %v5530 = vpack.c.b16 %v5498, %v5496
    %5563 = vmatpush.bf16.msra.mxu0 %v5513
    %5564 = vmatpush.bf16.msra.mxu0 %v5511
    %5565 = vmatpush.bf16.msra.mxu0 %v5509
    %5566 = vmatpush.bf16.msra.mxu0 %v5507
    %5567 = vmatpush.bf16.msra.mxu0 %v5505
    %5568 = vmatpush.bf16.msra.mxu0 %v5503
    %5569 = vmatpush.bf16.msra.mxu0 %v5501
    %5570 = vmatpush.bf16.msra.mxu0 %v5499
    %5571 = vmatmul.bf16.gmra.mxu0 %v5361
    %v5572 = vpop.f32.mrf.mxu0
    %v5573 = vadd.f32 %v5399, %v5572
    %v5574 = vpop.f32.mrf.mxu0
    %v5575 = vadd.f32 %v5399, %v5574
    %5576 = vmatmul.bf16.gmra.mxu0 %v5363
    %v5577 = vpop.f32.mrf.mxu0
    %v5578 = vadd.f32 %v5399, %v5577
    %v5579 = vpop.f32.mrf.mxu0
    %v5580 = vadd.f32 %v5399, %v5579
    %5581 = vdwg.mxu0
    %5582 = vmatpush.bf16.msra.mxu0 %v5529
    %5583 = vmatpush.bf16.msra.mxu0 %v5527
    %5584 = vmatpush.bf16.msra.mxu0 %v5525
    %5585 = vmatpush.bf16.msra.mxu0 %v5523
    %5586 = vmatpush.bf16.msra.mxu0 %v5521
    %5587 = vmatpush.bf16.msra.mxu0 %v5519
    %5588 = vmatpush.bf16.msra.mxu0 %v5517
    %5589 = vmatpush.bf16.msra.mxu0 %v5515
    %5590 = vmatmul.bf16.gmra.mxu0 %v5362
    %v5591 = vpop.f32.mrf.mxu0
    %v5592 = vadd.f32 %v5573, %v5591
    %v5593 = vpop.f32.mrf.mxu0
    %v5594 = vadd.f32 %v5575, %v5593
    %5595 = vmatmul.bf16.gmra.mxu0 %v5364
    %v5596 = vpop.f32.mrf.mxu0
    %v5597 = vadd.f32 %v5578, %v5596
    %v5598 = vpop.f32.mrf.mxu0
    %v5599 = vadd.f32 %v5580, %v5598
    %5600 = vdwg.mxu0
    %5601 = vmatpush.bf16.msra.mxu0 %v5514
    %5602 = vmatpush.bf16.msra.mxu0 %v5512
    %5603 = vmatpush.bf16.msra.mxu0 %v5510
    %5604 = vmatpush.bf16.msra.mxu0 %v5508
    %5605 = vmatpush.bf16.msra.mxu0 %v5506
    %5606 = vmatpush.bf16.msra.mxu0 %v5504
    %5607 = vmatpush.bf16.msra.mxu0 %v5502
    %5608 = vmatpush.bf16.msra.mxu0 %v5500
    %5609 = vmatmul.bf16.gmra.mxu0 %v5361
    %v5610 = vpop.f32.mrf.mxu0
    %v5611 = vadd.f32 %v5400, %v5610
    %v5612 = vpop.f32.mrf.mxu0
    %v5613 = vadd.f32 %v5400, %v5612
    %5614 = vmatmul.bf16.gmra.mxu0 %v5363
    %v5615 = vpop.f32.mrf.mxu0
    %v5616 = vadd.f32 %v5400, %v5615
    %v5617 = vpop.f32.mrf.mxu0
    %v5618 = vadd.f32 %v5400, %v5617
    %5619 = vdwg.mxu0
    %5620 = vmatpush.bf16.msra.mxu0 %v5530
    %5621 = vmatpush.bf16.msra.mxu0 %v5528
    %5622 = vmatpush.bf16.msra.mxu0 %v5526
    %5623 = vmatpush.bf16.msra.mxu0 %v5524
    %5624 = vmatpush.bf16.msra.mxu0 %v5522
    %5625 = vmatpush.bf16.msra.mxu0 %v5520
    %5626 = vmatpush.bf16.msra.mxu0 %v5518
    %5627 = vmatpush.bf16.msra.mxu0 %v5516
    %5628 = vmatmul.bf16.gmra.mxu0 %v5362
    %v5629 = vpop.f32.mrf.mxu0
    %v5630 = vadd.f32 %v5611, %v5629
    %v5631 = vpop.f32.mrf.mxu0
    %v5632 = vadd.f32 %v5613, %v5631
    %5633 = vmatmul.bf16.gmra.mxu0 %v5364
    %v5634 = vpop.f32.mrf.mxu0
    %v5635 = vadd.f32 %v5616, %v5634
    %v5636 = vpop.f32.mrf.mxu0
    %v5637 = vadd.f32 %v5618, %v5636
    %5638 = vdwg.mxu0
    %v5639 = vtanh.pop %v5592
    %v5640 = vtanh.pop %v5630
    %v5641 = vtanh.pop %v5594
    %v5642 = vtanh.pop %v5632
    %v5643 = vtanh.pop %v5597
    %v5644 = vtanh.pop %v5635
    %v5645 = vtanh.pop %v5599
    %v5646 = vtanh.pop %v5637
    %v5647 = vpack.c.bf16 %v5641, %v5639
    %v5648 = vpack.c.bf16 %v5642, %v5640
    %v5649 = vpack.c.bf16 %v5645, %v5643
    %v5650 = vpack.c.bf16 %v5646, %v5644
    %v5651 = vld [vmem:[%s61] sm:$0xf]
    %v5652 = vld [vmem:[%s61 + $0x4] sm:$0xf]
    %v5653 = vld [vmem:[%s61 + $0x8] sm:$0xf]
    %v5654 = vld [vmem:[%s61 + $0xc] sm:$0xf]
    %v5655 = vld [vmem:[%s61 + $0x10] sm:$0xf]
    %v5656 = vld [vmem:[%s61 + $0x14] sm:$0xf]
    %v5657 = vld [vmem:[%s61 + $0x18] sm:$0xf]
    %v5658 = vld [vmem:[%s61 + $0x1c] sm:$0xf]
    %v5659 = vld [vmem:[%s61 + $0x20] sm:$0xf]
    %v5660 = vld [vmem:[%s61 + $0x24] sm:$0xf]
    %v5661 = vld [vmem:[%s61 + $0x28] sm:$0xf]
    %v5662 = vld [vmem:[%s61 + $0x2c] sm:$0xf]
    %v5663 = vld [vmem:[%s61 + $0x30] sm:$0xf]
    %v5664 = vld [vmem:[%s61 + $0x34] sm:$0xf]
    %v5665 = vld [vmem:[%s61 + $0x38] sm:$0xf]
    %v5666 = vld [vmem:[%s61 + $0x3c] sm:$0xf]
    %v5667 = vld [vmem:[%s61 + $0x40] sm:$0xf]
    %v5668 = vld [vmem:[%s61 + $0x44] sm:$0xf]
    %v5669 = vld [vmem:[%s61 + $0x48] sm:$0xf]
    %v5670 = vld [vmem:[%s61 + $0x4c] sm:$0xf]
    %v5671 = vld [vmem:[%s61 + $0x50] sm:$0xf]
    %v5672 = vld [vmem:[%s61 + $0x54] sm:$0xf]
    %v5673 = vld [vmem:[%s61 + $0x58] sm:$0xf]
    %v5674 = vld [vmem:[%s61 + $0x5c] sm:$0xf]
    %v5675 = vld [vmem:[%s61 + $0x60] sm:$0xf]
    %v5676 = vld [vmem:[%s61 + $0x64] sm:$0xf]
    %v5677 = vld [vmem:[%s61 + $0x68] sm:$0xf]
    %v5678 = vld [vmem:[%s61 + $0x6c] sm:$0xf]
    %v5679 = vld [vmem:[%s61 + $0x70] sm:$0xf]
    %v5680 = vld [vmem:[%s61 + $0x74] sm:$0xf]
    %v5681 = vld [vmem:[%s61 + $0x78] sm:$0xf]
    %v5682 = vld [vmem:[%s61 + $0x7c] sm:$0xf]
    %v5683 = vld [vmem:[#allocation41] sm:$0x1]
    %v5685 = vperm.slane %v5683, 0
    %v5719 = vunpack.c.l.b16 %v5651
    %v5720 = vunpack.c.l.b16 %v5652
    %v5721 = vunpack.c.l.b16 %v5653
    %v5722 = vunpack.c.l.b16 %v5654
    %v5723 = vunpack.c.l.b16 %v5655
    %v5724 = vunpack.c.l.b16 %v5656
    %v5725 = vunpack.c.l.b16 %v5657
    %v5726 = vunpack.c.l.b16 %v5658
    %v5727 = vunpack.c.l.b16 %v5659
    %v5728 = vunpack.c.l.b16 %v5660
    %v5729 = vunpack.c.l.b16 %v5661
    %v5730 = vunpack.c.l.b16 %v5662
    %v5731 = vunpack.c.l.b16 %v5663
    %v5732 = vunpack.c.l.b16 %v5664
    %v5733 = vunpack.c.l.b16 %v5665
    %v5734 = vunpack.c.l.b16 %v5666
    %v5735 = vunpack.c.l.b16 %v5667
    %v5736 = vunpack.c.l.b16 %v5668
    %v5737 = vunpack.c.l.b16 %v5669
    %v5738 = vunpack.c.l.b16 %v5670
    %v5739 = vunpack.c.l.b16 %v5671
    %v5740 = vunpack.c.l.b16 %v5672
    %v5741 = vunpack.c.l.b16 %v5673
    %v5742 = vunpack.c.l.b16 %v5674
    %v5743 = vunpack.c.l.b16 %v5675
    %v5744 = vunpack.c.l.b16 %v5676
    %v5745 = vunpack.c.l.b16 %v5677
    %v5746 = vunpack.c.l.b16 %v5678
    %v5747 = vunpack.c.l.b16 %v5679
    %v5748 = vunpack.c.l.b16 %v5680
    %v5749 = vunpack.c.l.b16 %v5681
    %v5750 = vunpack.c.l.b16 %v5682
    %v5751 = vpack.c.b16 %v5720, %v5719
    %v5752 = vpack.c.b16 %v5722, %v5721
    %v5753 = vpack.c.b16 %v5724, %v5723
    %v5754 = vpack.c.b16 %v5726, %v5725
    %v5755 = vpack.c.b16 %v5728, %v5727
    %v5756 = vpack.c.b16 %v5730, %v5729
    %v5757 = vpack.c.b16 %v5732, %v5731
    %v5758 = vpack.c.b16 %v5734, %v5733
    %v5759 = vpack.c.b16 %v5736, %v5735
    %v5760 = vpack.c.b16 %v5738, %v5737
    %v5761 = vpack.c.b16 %v5740, %v5739
    %v5762 = vpack.c.b16 %v5742, %v5741
    %v5763 = vpack.c.b16 %v5744, %v5743
    %v5764 = vpack.c.b16 %v5746, %v5745
    %v5765 = vpack.c.b16 %v5748, %v5747
    %v5766 = vpack.c.b16 %v5750, %v5749
    %5783 = vmatpush.bf16.msra.mxu0 %v5758
    %5784 = vmatpush.bf16.msra.mxu0 %v5757
    %5785 = vmatpush.bf16.msra.mxu0 %v5756
    %5786 = vmatpush.bf16.msra.mxu0 %v5755
    %5787 = vmatpush.bf16.msra.mxu0 %v5754
    %5788 = vmatpush.bf16.msra.mxu0 %v5753
    %5789 = vmatpush.bf16.msra.mxu0 %v5752
    %5790 = vmatpush.bf16.msra.mxu0 %v5751
    %5791 = vmatmul.bf16.gmra.mxu0 %v5647
    %v5792 = vpop.f32.mrf.mxu0
    %v5793 = vadd.f32 %v5685, %v5792
    %v5794 = vpop.f32.mrf.mxu0
    %v5795 = vadd.f32 %v5685, %v5794
    %5796 = vmatmul.bf16.gmra.mxu0 %v5649
    %v5797 = vpop.f32.mrf.mxu0
    %v5798 = vadd.f32 %v5685, %v5797
    %v5799 = vpop.f32.mrf.mxu0
    %v5800 = vadd.f32 %v5685, %v5799
    %5801 = vdwg.mxu0
    %5802 = vmatpush.bf16.msra.mxu0 %v5766
    %5803 = vmatpush.bf16.msra.mxu0 %v5765
    %5804 = vmatpush.bf16.msra.mxu0 %v5764
    %5805 = vmatpush.bf16.msra.mxu0 %v5763
    %5806 = vmatpush.bf16.msra.mxu0 %v5762
    %5807 = vmatpush.bf16.msra.mxu0 %v5761
    %5808 = vmatpush.bf16.msra.mxu0 %v5760
    %5809 = vmatpush.bf16.msra.mxu0 %v5759
    %5810 = vmatmul.bf16.gmra.mxu0 %v5648
    %v5811 = vpop.f32.mrf.mxu0
    %v5812 = vadd.f32 %v5793, %v5811
    %v5813 = vpop.f32.mrf.mxu0
    %v5814 = vadd.f32 %v5795, %v5813
    %5815 = vmatmul.bf16.gmra.mxu0 %v5650
    %v5816 = vpop.f32.mrf.mxu0
    %v5817 = vadd.f32 %v5798, %v5816
    %v5818 = vpop.f32.mrf.mxu0
    %v5819 = vadd.f32 %v5800, %v5818
    %5820 = vdwg.mxu0
    %v5821 = vlaneseq
    %v5822 = vand.u32 %v5821, 127
    %vm5823 = vcmp.eq.s32.totalorder %v5822, 5
    %v5824 = vsel %vm5823, %v4296, 0.0
    %v5825 = vsel %vm5823, %v4297, 0.0
    %v5826 = vsel %vm5823, %v4298, 0.0
    %v5827 = vsel %vm5823, %v4299, 0.0
    %v5828 = vadd.f32 %v5812, %v5824
    %v5829 = vadd.f32 %v5814, %v5825
    %v5830 = vadd.f32 %v5817, %v5826
    %v5831 = vadd.f32 %v5819, %v5827
    %vm5832 = vcmp.eq.s32.totalorder %v5822, 8
    %v5833 = vmul.f32 %v4301, %v4480
    %v5834 = vmul.f32 %v4303, %v4481
    %v5835 = vmul.f32 %v4305, %v4482
    %v5836 = vmul.f32 %v4307, %v4483
    %v5837 = vsel %vm5832, %v5833, 0.0
    %v5838 = vsel %vm5832, %v5834, 0.0
    %v5839 = vsel %vm5832, %v5835, 0.0
    %v5840 = vsel %vm5832, %v5836, 0.0
    %v5841 = vadd.f32 %v5828, %v5837
    %v5842 = vadd.f32 %v5829, %v5838
    %v5843 = vadd.f32 %v5830, %v5839
    %v5844 = vadd.f32 %v5831, %v5840
    %vm5845 = vcmp.eq.s32.totalorder %v5822, 6
    %v5846 = vsel %vm5845, %v4364, 0.0
    %v5847 = vsel %vm5845, %v4365, 0.0
    %v5848 = vsel %vm5845, %v4366, 0.0
    %v5849 = vsel %vm5845, %v4367, 0.0
    %v5850 = vadd.f32 %v5841, %v5846
    %v5851 = vadd.f32 %v5842, %v5847
    %v5852 = vadd.f32 %v5843, %v5848
    %v5853 = vadd.f32 %v5844, %v5849
    %vm5854 = vcmp.eq.s32.totalorder %v5822, 9
    %v5855 = vmul.f32 %v4369, %v4480
    %v5856 = vmul.f32 %v4371, %v4481
    %v5857 = vmul.f32 %v4373, %v4482
    %v5858 = vmul.f32 %v4375, %v4483
    %v5859 = vsel %vm5854, %v5855, 0.0
    %v5860 = vsel %vm5854, %v5856, 0.0
    %v5861 = vsel %vm5854, %v5857, 0.0
    %v5862 = vsel %vm5854, %v5858, 0.0
    %v5863 = vadd.f32 %v5850, %v5859
    %v5864 = vadd.f32 %v5851, %v5860
    %v5865 = vadd.f32 %v5852, %v5861
    %v5866 = vadd.f32 %v5853, %v5862
    %vm5867 = vcmp.eq.s32.totalorder %v5822, 7
    %v5868 = vsel %vm5867, %v4432, 0.0
    %v5869 = vsel %vm5867, %v4433, 0.0
    %v5870 = vsel %vm5867, %v4434, 0.0
    %v5871 = vsel %vm5867, %v4435, 0.0
    %v5872 = vadd.f32 %v5863, %v5868
    %v5873 = vadd.f32 %v5864, %v5869
    %v5874 = vadd.f32 %v5865, %v5870
    %v5875 = vadd.f32 %v5866, %v5871
    %vm5876 = vcmp.eq.s32.totalorder %v5822, 10
    %v5877 = vmul.f32 %v4437, %v4480
    %v5878 = vmul.f32 %v4439, %v4481
    %v5879 = vmul.f32 %v4441, %v4482
    %v5880 = vmul.f32 %v4443, %v4483
    %v5881 = vsel %vm5876, %v5877, 0.0
    %v5882 = vsel %vm5876, %v5878, 0.0
    %v5883 = vsel %vm5876, %v5879, 0.0
    %v5884 = vsel %vm5876, %v5880, 0.0
    %v5885 = vadd.f32 %v5872, %v5881
    %v5886 = vadd.f32 %v5873, %v5882
    %v5887 = vadd.f32 %v5874, %v5883
    %v5888 = vadd.f32 %v5875, %v5884
    %5889 = vst [vmem:[#allocation46] sm:$0xff] %v5885
    %5890 = vst [vmem:[#allocation46 + $0x8] sm:$0xff] %v5886
    %5891 = vst [vmem:[#allocation46 + $0x10] sm:$0xff] %v5887
    %5892 = vst [vmem:[#allocation46 + $0x18] sm:$0xff] %v5888
    // Predicated region
    $region258: #{tpu_custom_call.1} parent=1 // pred_check
      _
    $region259: #{tpu_custom_call.1} parent=1 // pred_check_branch
      %5894 = sbr.rel (0) target = $region261
    $region260: #{tpu_custom_call.1} parent=1 // pred_region
      %5896 = vsyncadd [#allocation4], 0
      %s5897 = sshll.u32 [#allocation46], 4
      %s5898 = int_to_ptr.vmem [resolvable:$true] %s5897
      %s5899 = sshll.u32 %s73, 4
      %s5900 = int_to_ptr.hbm [resolvable:$true] %s5899
      %5905 = dma.vmem_to_hbm [thread:$0]  %s5898, 512, %s5900, [#allocation4], 128, 128, 8
    $region261: #{tpu_custom_call.1} parent=1 // pred_fallthru
      _
    // Predicated region
    $region262: #{tpu_custom_call.1} parent=1 // pred_check
      _
    $region263: #{tpu_custom_call.1} parent=1 // pred_check_branch
      %5907 = sbr.rel (0) target = $region265
    $region264: #{tpu_custom_call.1} parent=1 // pred_region
      %5909 = dma.done [#allocation4], 512
    $region265: #{tpu_custom_call.1} parent=1 // pred_fallthru
      _
    %5910 = vsyncpa [#allocation3], 1
    %5911 = vsyncpa [#allocation6], 1
    %5912 = vsyncpa [#allocation9], 1
    %5913 = vsyncpa [#allocation12], 1
    %5914 = vsyncpa [#allocation15], 1
    %5915 = vsyncpa [#allocation18], 1
    %5916 = vsyncpa [#allocation21], 1
    %5917 = vsyncpa [#allocation24], 1
    %5918 = vsyncpa [#allocation27], 1
    %5919 = vsyncpa [#allocation30], 1
    %5920 = vsyncpa [#allocation33], 1
    %5921 = vsyncpa [#allocation36], 1
    %5922 = vsyncpa [#allocation39], 1
    %5923 = vsyncpa [#allocation42], 1
    %5924 = vsyncpa [#allocation45], 1
    %5925 = vsyncpa [#allocation4], 1

</llo_original>
